<compile_context>
chip_gen: v6e
topology: v6e:2x2x1
jax: 0.10.0
libtpu: 0.0.40
codegen_flags: <defaults>
</compile_context>

<pallas_src>
import functools
import math

import numpy as np
import jax
import jax.numpy as jnp
from jax.experimental import pallas as pl
from jax.experimental.pallas import tpu as pltpu


# ----------------------------- small helpers -----------------------------

_ERF_P = 0.3275911
_ERF_A = (0.254829592, -0.284496736, 1.421413741, -1.453152027, 1.061405429)


def _erf_approx(z):
    # Abramowitz & Stegun 7.1.26 (exp + reciprocal -> EUP slot, VPU has slack).
    a1, a2, a3, a4, a5 = _ERF_A
    az = jnp.abs(z)
    t = pl.reciprocal(1.0 + _ERF_P * az, approx=True)
    poly = ((((a5 * t + a4) * t + a3) * t + a2) * t + a1) * t
    y = 1.0 - poly * jnp.exp(-az * az)
    return jnp.where(z < 0.0, -y, y)


def _gelu_exact(x):
    # exact-erf GELU (nn.GELU default), erf via the A&S polynomial above.
    return 0.5 * x * (1.0 + _erf_approx(x * 0.7071067811865476))


def _shift_masks(hh, ww, m):
    # Valid-source masks for each of the m*m conv taps on a zero-padded hh x ww
    # image, flattened onto the lane axis. Trace-time numpy constants.
    r = (m - 1) // 2
    yy = np.arange(hh * ww) // ww
    xx = np.arange(hh * ww) % ww
    rows = []
    for t in range(m * m):
        sy, sx = t // m - r, t % m - r
        ok = (yy + sy >= 0) & (yy + sy < hh) & (xx + sx >= 0) & (xx + sx < ww)
        rows.append(ok)
    return jnp.asarray(np.stack(rows).astype(np.float32))


def _pick_tile(n, other_steps, cap=1024):
    # Largest lane tile (multiple of 128, <=cap) dividing the per-image H*W
    # while keeping >=2 total grid steps so input DMA double-buffering overlaps.
    for t in range(min(cap, n), 127, -128):
        if n % t == 0 and other_steps * (n // t) >= 2:
            return t
    return 128


# ----------------------------- Pallas kernels -----------------------------

def _qkv_proj_kernel(w_ref, x_ref, g_ref, b_ref, proj_ref, scale_ref, shift_ref,
                     acc_sum, acc_sq, *, inv_count, eps):
    # One batched bf16 matmul for [q ; v ; k] 1x1 projections on a lane tile,
    # plus accumulation of per-channel BatchNorm statistics across (batch, tile)
    # into a (rows, 128) partial-sum scratch (no full-tile f32 accumulators).
    b_id = pl.program_id(1)
    j_id = pl.program_id(2)

    @pl.when(jnp.logical_and(b_id == 0, j_id == 0))
    def _init():
        acc_sum[...] = jnp.zeros_like(acc_sum)
        acc_sq[...] = jnp.zeros_like(acc_sq)

    p = jnp.dot(w_ref[...], x_ref[0].astype(jnp.bfloat16),
                preferred_element_type=jnp.float32)            # (rows_blk, tn) f32
    proj_ref[0] = p.astype(proj_ref.dtype)                     # bf16 HBM write

    tn = p.shape[1]
    ps = p[:, 0:128]
    pq = ps * ps
    for c in range(1, tn // 128):
        sl = p[:, c * 128:(c + 1) * 128]
        ps = ps + sl
        pq = pq + sl * sl
    acc_sum[...] += ps
    acc_sq[...] += pq

    @pl.when(jnp.logical_and(b_id == pl.num_programs(1) - 1,
                             j_id == pl.num_programs(2) - 1))
    def _finalize():
        mean = jnp.sum(acc_sum[...], axis=1, keepdims=True) * inv_count
        ex2 = jnp.sum(acc_sq[...], axis=1, keepdims=True) * inv_count
        # TODO(synk): single-pass E[x^2]-E[x]^2 can cancel for large means;
        # switch to a shifted/Welford accumulation before trusting at scale.
        var = jnp.maximum(ex2 - mean * mean, 0.0)              # biased (torch train)
        sc = g_ref[...] * jax.lax.rsqrt(var + eps)             # (rows_blk, 1)
        scale_ref[...] = jnp.broadcast_to(sc, scale_ref.shape)
        shift_ref[...] = jnp.broadcast_to(b_ref[...] - mean * sc, shift_ref.shape)


def _tfblock_kernel(proj_ref, scale_ref, shift_ref, wemb_ref, amask_ref, x_ref,
                    w1_ref, b1_ref, wdw_ref, bdw_ref, w2_ref, b2_ref, mmask_ref,
                    o_ref, qe_ref, v_ref, col_ref, *, heads, kk, vv, mm, ww):
    n = x_ref.shape[2]
    nq = heads * kk
    r = (mm - 1) // 2
    hf = w1_ref.shape[0]

    sc = scale_ref[:, 0:1]
    sh = shift_ref[:, 0:1]
    proj = proj_ref[0].astype(jnp.float32)                      # (rows, n)

    # Train-mode BatchNorm folded into per-channel scale/shift (keys: no BN).
    q = proj[:nq] * sc[:nq] + sh[:nq]                           # (heads*kk, n)
    v = proj[nq:nq + vv] * sc[nq:nq + vv] + sh[nq:nq + vv]      # (vv, n)
    keys = proj[nq + vv:nq + vv + kk]                           # (kk, n)

    # softmax over positions, per key channel (f32, approx recip -> EUP)
    e = jnp.exp(keys - jnp.max(keys, axis=-1, keepdims=True))
    sm = e * pl.reciprocal(jnp.sum(e, axis=-1, keepdims=True), approx=True)

    q_bf = q.astype(jnp.bfloat16)
    v_ref[...] = v                                              # VMEM copy for taps

    # content lambda^T (vv, kk) = V @ softmax^T, then ONE block-diagonal
    # (heads*vv, heads*kk) @ (heads*kk, n) MXU call for all heads.
    lam_ct = jax.lax.dot_general(
        v.astype(jnp.bfloat16), sm.astype(jnp.bfloat16),
        (((1,), (1,)), ((), ())), preferred_element_type=jnp.float32)
    zero_blk = jnp.zeros((vv, kk), jnp.float32)
    rows_bd = []
    for h in range(heads):
        blocks = [zero_blk] * heads
        blocks[h] = lam_ct
        rows_bd.append(jnp.concatenate(blocks, axis=1))
    lam_bd = jnp.concatenate(rows_bd, axis=0).astype(jnp.bfloat16)
    y = jnp.dot(lam_bd, q_bf, preferred_element_type=jnp.float32)   # y_c (heads*vv, n)

    # qe[t*heads + h, :] = sum_k emb[k, t] * q[h*kk + k, :]  -- ONE block-diag
    # MXU matmul for all heads/taps; stored to VMEM scratch for the tap loop.
    qe_ref[...] = jnp.dot(wemb_ref[...], q_bf, preferred_element_type=jnp.float32)

    # Positional lambdas: 11x11 conv3d reorganised as per-tap accumulation
    #   y_p += (emb^T q)[t] * mask[t] * shift_t(V)
    # V is rolled in VMEM with pltpu.roll (XLU, dynamic shift) -- no HBM im2col.
    def row_body(ty, y_row):
        def col_body(tx, y_acc):
            t = ty * mm + tx
            off = (ty - r) * ww + (tx - r)
            shift = jnp.where(off > 0, n - off, -off)           # (-off) mod n
            rolled = pltpu.roll(v_ref[...], shift, axis=1)      # (vv, n)
            am = amask_ref[pl.ds(t, 1), :]                      # (1, n)
            t4 = t * heads
            parts = [(qe_ref[pl.ds(t4 + h, 1), :] * am) * rolled
                     for h in range(heads)]
            return y_acc + jnp.concatenate(parts, axis=0)       # (heads*vv, n)
        return jax.lax.fori_loop(0, mm, col_body, y_row)
    y = jax.lax.fori_loop(0, mm, row_body, y)

    x1 = x_ref[0] + y                                           # residual 1 (C, n)

    # ---- MLP: fc1 -> grouped 3x3 DWConv -> exact GELU -> fc2 (fused) ----
    h1 = jnp.dot(w1_ref[...], x1.astype(jnp.bfloat16),
                 preferred_element_type=jnp.float32) + b1_ref[...]   # (hf, n)
    for t in range(9):
        off = (t // 3 - 1) * ww + (t % 3 - 1)
        rolled = h1 if off == 0 else pltpu.roll(h1, (-off) % n, axis=1)
        col_ref[pl.ds(t * hf, hf), :] = (
            rolled * mmask_ref[pl.ds(t, 1), :]).astype(jnp.bfloat16)
    z = jnp.dot(wdw_ref[...], col_ref[...],
                preferred_element_type=jnp.float32) + bdw_ref[...]
    g = _gelu_exact(z)
    out2 = jnp.dot(w2_ref[...], g.astype(jnp.bfloat16),
                   preferred_element_type=jnp.float32) + b2_ref[...]  # (C, n)
    o_ref[0] = x1 + out2                                        # residual 2


# ----------------------------- Pallas wrappers -----------------------------

def _qkv_project(x3, w_qvk, gamma, beta, *, eps=1e-5, row_split=1):
    bsz, c, n = x3.shape
    rows = w_qvk.shape[0]
    assert rows % row_split == 0 and (rows // row_split) % 8 == 0
    rblk = rows // row_split
    tn = _pick_tile(n, bsz * row_split)
    kern = functools.partial(_qkv_proj_kernel, inv_count=1.0 / (bsz * n), eps=eps)
    return pl.pallas_call(
        kern,
        out_shape=(jax.ShapeDtypeStruct((bsz, rows, n), jnp.bfloat16),
                   jax.ShapeDtypeStruct((rows, 128), jnp.float32),
                   jax.ShapeDtypeStruct((rows, 128), jnp.float32)),
        grid=(row_split, bsz, n // tn),
        in_specs=[pl.BlockSpec((rblk, c), lambda i, b, j: (i, 0)),
                  pl.BlockSpec((1, c, tn), lambda i, b, j: (b, 0, j)),
                  pl.BlockSpec((rblk, 1), lambda i, b, j: (i, 0)),
                  pl.BlockSpec((rblk, 1), lambda i, b, j: (i, 0))],
        out_specs=(pl.BlockSpec((1, rblk, tn), lambda i, b, j: (b, i, j)),
                   pl.BlockSpec((rblk, 128), lambda i, b, j: (i, 0)),
                   pl.BlockSpec((rblk, 128), lambda i, b, j: (i, 0))),
        scratch_shapes=[pltpu.VMEM((rblk, 128), jnp.float32),
                        pltpu.VMEM((rblk, 128), jnp.float32)],
        compiler_params=pltpu.CompilerParams(
            # row halves are BN-independent -> megacore split on v7x;
            # stats accumulate across (batch, lane-tile) -> arbitrary.
            dimension_semantics=("parallel", "arbitrary", "arbitrary"),
            vmem_limit_bytes=32 * 1024 * 1024),
    )(w_qvk, x3, gamma, beta)


def _attn_mlp_block(proj, scale, shift, params, amask, mmask, x3, *,
                    heads, kk, vv, mm, ww):
    bsz, c, n = x3.shape
    rows = proj.shape[1]
    hf = params['w1'].shape[0]
    taps = mm * mm
    kern = functools.partial(_tfblock_kernel, heads=heads, kk=kk, vv=vv,
                             mm=mm, ww=ww)
    return pl.pallas_call(
        kern,
        out_shape=jax.ShapeDtypeStruct((bsz, c, n), jnp.float32),
        grid=(bsz,),
        in_specs=[
            pl.BlockSpec((1, rows, n), lambda b: (b, 0, 0)),       # proj (bf16)
            pl.BlockSpec((rows, 128), lambda b: (0, 0)),           # BN scale
            pl.BlockSpec((rows, 128), lambda b: (0, 0)),           # BN shift
            pl.BlockSpec((taps * heads, heads * kk), lambda b: (0, 0)),  # emb (block-diag)
            pl.BlockSpec((taps, n), lambda b: (0, 0)),             # 11x11 tap masks
            pl.BlockSpec((1, c, n), lambda b: (b, 0, 0)),          # x (residual)
            pl.BlockSpec((hf, c), lambda b: (0, 0)),               # fc1 w
            pl.BlockSpec((hf, 1), lambda b: (0, 0)),               # fc1 b
            pl.BlockSpec((hf, 9 * hf), lambda b: (0, 0)),          # dwconv (tap-stacked)
            pl.BlockSpec((hf, 1), lambda b: (0, 0)),               # dwconv b
            pl.BlockSpec((c, hf), lambda b: (0, 0)),               # fc2 w
            pl.BlockSpec((c, 1), lambda b: (0, 0)),                # fc2 b
            pl.BlockSpec((9, n), lambda b: (0, 0)),                # 3x3 tap masks
        ],
        out_specs=pl.BlockSpec((1, c, n), lambda b: (b, 0, 0)),
        scratch_shapes=[pltpu.VMEM((taps * heads, n), jnp.float32),   # qe
                        pltpu.VMEM((vv, n), jnp.float32),             # V
                        pltpu.VMEM((9 * hf, n), jnp.bfloat16)],       # dwconv im2col
        compiler_params=pltpu.CompilerParams(
            dimension_semantics=("parallel",),     # batches independent (v7x 2 TCs)
            vmem_limit_bytes=32 * 1024 * 1024),
    )(proj, scale, shift, params['w_emb_bd'], amask, x3,
      params['w1'], params['b1'], params['wdw'], params['bdw'],
      params['w2'], params['b2'], mmask)


# ----------------------------- model forward -----------------------------

def tf_block(x, params, heads=4, kk=16, mm=11, row_split=1):
    # TFBlock with in_channels == out_channels (identity shortcut),
    # drop / drop_path = 0, train-mode BatchNorm.
    # row_split=2 recommended on v7x (2 TensorCores) for the projection kernel.
    b, c, hh, ww = x.shape
    n = hh * ww
    vv = c // heads
    assert c == heads * vv and c % 16 == 0, "channels must be a multiple of 16"
    assert n % 128 == 0, "H*W must be a multiple of 128 (lane-dense per-image tiles)"

    x3 = x.reshape(b, c, n)                      # free: NCHW is already (B, C, H*W)

    proj, scale, shift = _qkv_project(x3, params['w_qvk'], params['bn_gamma'],
                                      params['bn_beta'], row_split=row_split)

    amask = _shift_masks(hh, ww, mm)             # (121, n) trace-time constants
    mmask = _shift_masks(hh, ww, 3)              # (9, n)

    out = _attn_mlp_block(proj, scale, shift, params, amask, mmask, x3,
                          heads=heads, kk=kk, vv=vv, mm=mm, ww=ww)
    return out.reshape(b, c, hh, ww)             # free reshape back to NCHW


# ----------------------------- deterministic params -----------------------------

def init_params(key, c, heads=4, kk=16, mm=11):
    assert c % 16 == 0
    vv = c // heads
    hf = c // 4                      # Mlp hidden = out_features // 4
    dw_groups = hf // 4              # DWConv groups = dim // 4
    ks = jax.random.split(key, 7)

    def conv_w(k, cout, cin, kh=1, kw=1, groups=1):
        fan_out = kh * kw * cout // groups
        std = math.sqrt(2.0 / fan_out)
        return std * jax.random.normal(k, (cout, cin // groups, kh, kw), jnp.float32)

    q_w = conv_w(ks[0], kk * heads, c).reshape(kk * heads, c)
    k_w = conv_w(ks[1], kk, c).reshape(kk, c)
    v_w = conv_w(ks[2], vv, c).reshape(vv, c)
    emb = jax.random.normal(ks[3], (kk, 1, 1, mm, mm), jnp.float32)   # torch.randn
    fc1_w = conv_w(ks[4], hf, c).reshape(hf, c)
    dw_w = conv_w(ks[5], hf, hf, 3, 3, groups=dw_groups)              # (hf, hf/g, 3, 3)
    fc2_w = conv_w(ks[6], c, hf).reshape(c, hf)

    rows = kk * heads + vv + kk
    # BatchNorm2d affine params (default gamma=1, beta=0); the trailing kk rows
    # (keys) have no BN and are never read back through scale/shift.
    bn_gamma = jnp.ones((rows, 1), jnp.float32)
    bn_beta = jnp.zeros((rows, 1), jnp.float32)

    # Block-diagonal positional-embedding weight: row t*heads+h holds emb[:, t]
    # in the columns of head h, so ONE (taps*heads, heads*kk) @ (heads*kk, n)
    # matmul produces qe for every head/tap in tap-major order.
    emb2 = np.asarray(emb).reshape(kk, mm * mm)
    w_emb_bd = np.zeros((mm * mm * heads, heads * kk), np.float32)
    for t in range(mm * mm):
        for h in range(heads):
            w_emb_bd[t * heads + h, h * kk:(h + 1) * kk] = emb2[:, t]

    # Tap-stacked dense packing of the grouped 3x3 DWConv weight: (hf, 9*hf),
    # column block t*hf:(t+1)*hf holds the block-diagonal weight of tap t.
    dw_np = np.asarray(dw_w)
    opg = hf // dw_groups
    wdw = np.zeros((hf, 9 * hf), np.float32)
    for t in range(9):
        dy, dx = t // 3, t % 3
        for g in range(dw_groups):
            wdw[g * opg:(g + 1) * opg,
                t * hf + g * opg:t * hf + (g + 1) * opg] = dw_np[g * opg:(g + 1) * opg, :, dy, dx]

    return {
        # concatenated [q ; v ; k] 1x1-conv weights, bf16 for the MXU
        'w_qvk': jnp.concatenate([q_w, v_w, k_w], axis=0).astype(jnp.bfloat16),
        'bn_gamma': bn_gamma,
        'bn_beta': bn_beta,
        'w_emb_bd': jnp.asarray(w_emb_bd).astype(jnp.bfloat16),      # (484, 64)
        'w1': fc1_w.astype(jnp.bfloat16),
        'b1': jnp.zeros((hf, 1), jnp.float32),
        'wdw': jnp.asarray(wdw).astype(jnp.bfloat16),                 # (hf, 9*hf)
        'bdw': jnp.zeros((hf, 1), jnp.float32),
        'w2': fc2_w.astype(jnp.bfloat16),
        'b2': jnp.zeros((c, 1), jnp.float32),
    }
    # TODO(synk): BatchNorm running-stat buffers (eval-mode BN) are not modeled;
    # the forward matches PyTorch .train()-mode batch statistics.


if __name__ == "__main__":
    key = jax.random.PRNGKey(0)
    kx, kp = jax.random.split(key)
    # TFBlock(64, 64): heads=4, k=16, vv=16, mlp hidden=16, dwconv groups=4.
    B, C, H, W = 2, 64, 16, 16
    x = jax.random.normal(kx, (B, C, H, W), jnp.float32)
    params = init_params(kp, C)

    fwd = jax.jit(tf_block)
    y = jax.block_until_ready(fwd(x, params))
    assert y.shape == x.shape
    assert bool(jnp.all(jnp.isfinite(y)))
    print("KERNEL_OK")
</pallas_src>

<mosaic_0001>
module attributes {stable_mosaic.version = 11 : i64} {
  func.func @_qkv_proj_kernel(%arg0: i32, %arg1: i32, %arg2: i32, %arg3: memref<96x64xbf16, #tpu.memory_space<vmem>>, %arg4: memref<1x64x256xf32, #tpu.memory_space<vmem>>, %arg5: memref<96x1xf32, #tpu.memory_space<vmem>>, %arg6: memref<96x1xf32, #tpu.memory_space<vmem>>, %arg7: memref<1x96x256xbf16, #tpu.memory_space<vmem>>, %arg8: memref<96x128xf32, #tpu.memory_space<vmem>>, %arg9: memref<96x128xf32, #tpu.memory_space<vmem>>, %arg10: memref<96x128xf32, #tpu.memory_space<vmem>>, %arg11: memref<96x128xf32, #tpu.memory_space<vmem>>) attributes {dimension_semantics = [#tpu.dimension_semantics<parallel>, #tpu.dimension_semantics<arbitrary>, #tpu.dimension_semantics<arbitrary>], iteration_bounds = array<i64: 1, 2, 1>, scalar_prefetch = 0 : i64, scratch_operands = 2 : i64, tpu.core_type = #tpu.core_type<tc>, window_params = [{transform_indices = @transform_0, window_bounds = array<i64: 96, 64>}, {transform_indices = @transform_1, window_bounds = array<i64: 1, 64, 256>}, {transform_indices = @transform_2, window_bounds = array<i64: 96, 1>}, {transform_indices = @transform_3, window_bounds = array<i64: 96, 1>}, {transform_indices = @transform_4, window_bounds = array<i64: 1, 96, 256>}, {transform_indices = @transform_5, window_bounds = array<i64: 96, 128>}, {transform_indices = @transform_6, window_bounds = array<i64: 96, 128>}]} {
    %c0_i32 = arith.constant 0 : i32
    %0 = arith.cmpi eq, %arg1, %c0_i32 : i32
    %c0_i32_0 = arith.constant 0 : i32
    %1 = arith.cmpi eq, %arg2, %c0_i32_0 : i32
    %2 = arith.andi %0, %1 : i1
    %3 = arith.extui %2 : i1 to i32
    %c0_i32_1 = arith.constant 0 : i32
    %4 = arith.cmpi ne, %3, %c0_i32_1 : i32
    scf.if %4 {
      %cst_19 = arith.constant 0.000000e+00 : f32
      %31 = vector.broadcast %cst_19 : f32 to vector<96x128xf32>
      %c0_20 = arith.constant 0 : index
      %c0_21 = arith.constant 0 : index
      %32 = vector.load %arg10[%c0_20, %c0_21] : memref<96x128xf32, #tpu.memory_space<vmem>>, vector<96x128xf32>
      tpu.vector_store %arg10[%c0_20, %c0_21], %31 {strides = array<i32>} : memref<96x128xf32, #tpu.memory_space<vmem>>, vector<96x128xf32>,
      %cst_22 = arith.constant 0.000000e+00 : f32
      %33 = vector.broadcast %cst_22 : f32 to vector<96x128xf32>
      %c0_23 = arith.constant 0 : index
      %c0_24 = arith.constant 0 : index
      %34 = vector.load %arg11[%c0_23, %c0_24] : memref<96x128xf32, #tpu.memory_space<vmem>>, vector<96x128xf32>
      tpu.vector_store %arg11[%c0_23, %c0_24], %33 {strides = array<i32>} : memref<96x128xf32, #tpu.memory_space<vmem>>, vector<96x128xf32>,
    } else {
    }
    %c0 = arith.constant 0 : index
    %c0_2 = arith.constant 0 : index
    %5 = vector.load %arg3[%c0, %c0_2] : memref<96x64xbf16, #tpu.memory_space<vmem>>, vector<96x64xbf16>
    %c0_3 = arith.constant 0 : index
    %c0_4 = arith.constant 0 : index
    %c0_5 = arith.constant 0 : index
    %6 = vector.load %arg4[%c0_3, %c0_4, %c0_5] : memref<1x64x256xf32, #tpu.memory_space<vmem>>, vector<1x64x256xf32>
    %7 = vector.shape_cast %6 : vector<1x64x256xf32> to vector<64x256xf32>
    %8 = arith.truncf %7 : vector<64x256xf32> to vector<64x256xbf16>
    %cst = arith.constant dense<0.000000e+00> : vector<96x256xf32>
    %9 = tpu.matmul %5, %8, %cst {dimension_numbers = #tpu.dot_dimension_numbers<[1], [0], [0], [1], [0, 0, 1, 1], [], []>} : vector<96x64xbf16>, vector<64x256xbf16>, vector<96x256xf32> -> vector<96x256xf32>
    %10 = arith.truncf %9 : vector<96x256xf32> to vector<96x256xbf16>
    %c0_6 = arith.constant 0 : index
    %c0_7 = arith.constant 0 : index
    %c0_8 = arith.constant 0 : index
    %11 = vector.load %arg7[%c0_6, %c0_7, %c0_8] : memref<1x96x256xbf16, #tpu.memory_space<vmem>>, vector<1x96x256xbf16>
    %12 = vector.shape_cast %11 : vector<1x96x256xbf16> to vector<96x256xbf16>
    %13 = vector.shape_cast %10 : vector<96x256xbf16> to vector<1x96x256xbf16>
    tpu.vector_store %arg7[%c0_6, %c0_7, %c0_8], %13 {strides = array<i32>} : memref<1x96x256xbf16, #tpu.memory_space<vmem>>, vector<1x96x256xbf16>,
    %14 = vector.extract_strided_slice %9 {offsets = [0, 0], sizes = [96, 128], strides = [1, 1]} : vector<96x256xf32> to vector<96x128xf32>
    %15 = arith.mulf %14, %14 : vector<96x128xf32>
    %16 = vector.extract_strided_slice %9 {offsets = [0, 128], sizes = [96, 128], strides = [1, 1]} : vector<96x256xf32> to vector<96x128xf32>
    %17 = arith.addf %14, %16 : vector<96x128xf32>
    %18 = arith.mulf %16, %16 : vector<96x128xf32>
    %19 = arith.addf %15, %18 : vector<96x128xf32>
    %c0_9 = arith.constant 0 : index
    %c0_10 = arith.constant 0 : index
    %20 = vector.load %arg10[%c0_9, %c0_10] : memref<96x128xf32, #tpu.memory_space<vmem>>, vector<96x128xf32>
    %21 = arith.addf %20, %17 : vector<96x128xf32>
    %c0_11 = arith.constant 0 : index
    %c0_12 = arith.constant 0 : index
    %22 = vector.load %arg10[%c0_11, %c0_12] : memref<96x128xf32, #tpu.memory_space<vmem>>, vector<96x128xf32>
    tpu.vector_store %arg10[%c0_11, %c0_12], %21 {strides = array<i32>} : memref<96x128xf32, #tpu.memory_space<vmem>>, vector<96x128xf32>,
    %c0_13 = arith.constant 0 : index
    %c0_14 = arith.constant 0 : index
    %23 = vector.load %arg11[%c0_13, %c0_14] : memref<96x128xf32, #tpu.memory_space<vmem>>, vector<96x128xf32>
    %24 = arith.addf %23, %19 : vector<96x128xf32>
    %c0_15 = arith.constant 0 : index
    %c0_16 = arith.constant 0 : index
    %25 = vector.load %arg11[%c0_15, %c0_16] : memref<96x128xf32, #tpu.memory_space<vmem>>, vector<96x128xf32>
    tpu.vector_store %arg11[%c0_15, %c0_16], %24 {strides = array<i32>} : memref<96x128xf32, #tpu.memory_space<vmem>>, vector<96x128xf32>,
    %c1_i32 = arith.constant 1 : i32
    %26 = arith.cmpi eq, %arg1, %c1_i32 : i32
    %c0_i32_17 = arith.constant 0 : i32
    %27 = arith.cmpi eq, %arg2, %c0_i32_17 : i32
    %28 = arith.andi %26, %27 : i1
    %29 = arith.extui %28 : i1 to i32
    %c0_i32_18 = arith.constant 0 : i32
    %30 = arith.cmpi ne, %29, %c0_i32_18 : i32
    scf.if %30 {
      %c0_19 = arith.constant 0 : index
      %c0_20 = arith.constant 0 : index
      %31 = vector.load %arg10[%c0_19, %c0_20] : memref<96x128xf32, #tpu.memory_space<vmem>>, vector<96x128xf32>
      %cst_21 = arith.constant dense<0.000000e+00> : vector<96xf32>
      %32 = vector.multi_reduction <add>, %31, %cst_21 [1] : vector<96x128xf32> to vector<96xf32>
      %33 = vector.shape_cast %32 : vector<96xf32> to vector<96x1xf32>
      %cst_22 = arith.constant 0.001953125 : f32
      %34 = vector.broadcast %cst_22 : f32 to vector<96x1xf32>
      %35 = arith.mulf %33, %34 : vector<96x1xf32>
      %c0_23 = arith.constant 0 : index
      %c0_24 = arith.constant 0 : index
      %36 = vector.load %arg11[%c0_23, %c0_24] : memref<96x128xf32, #tpu.memory_space<vmem>>, vector<96x128xf32>
      %cst_25 = arith.constant dense<0.000000e+00> : vector<96xf32>
      %37 = vector.multi_reduction <add>, %36, %cst_25 [1] : vector<96x128xf32> to vector<96xf32>
      %38 = vector.shape_cast %37 : vector<96xf32> to vector<96x1xf32>
      %cst_26 = arith.constant 0.001953125 : f32
      %39 = vector.broadcast %cst_26 : f32 to vector<96x1xf32>
      %40 = arith.mulf %38, %39 : vector<96x1xf32>
      %41 = arith.mulf %35, %35 : vector<96x1xf32>
      %42 = arith.subf %40, %41 : vector<96x1xf32>
      %cst_27 = arith.constant 0.000000e+00 : f32
      %43 = vector.broadcast %cst_27 : f32 to vector<96x1xf32>
      %44 = arith.maximumf %42, %43 : vector<96x1xf32>
      %c0_28 = arith.constant 0 : index
      %c0_29 = arith.constant 0 : index
      %45 = vector.load %arg5[%c0_28, %c0_29] : memref<96x1xf32, #tpu.memory_space<vmem>>, vector<96x1xf32>
      %cst_30 = arith.constant 9.99999974E-6 : f32
      %46 = vector.broadcast %cst_30 : f32 to vector<96x1xf32>
      %47 = arith.addf %44, %46 : vector<96x1xf32>
      %48 = math.rsqrt %47 : vector<96x1xf32>
      %49 = arith.mulf %45, %48 : vector<96x1xf32>
      %50 = vector.shape_cast %49 : vector<96x1xf32> to vector<96x1xf32>
      %51 = vector.broadcast %50 : vector<96x1xf32> to vector<96x128xf32>
      %c0_31 = arith.constant 0 : index
      %c0_32 = arith.constant 0 : index
      %52 = vector.load %arg8[%c0_31, %c0_32] : memref<96x128xf32, #tpu.memory_space<vmem>>, vector<96x128xf32>
      tpu.vector_store %arg8[%c0_31, %c0_32], %51 {strides = array<i32>} : memref<96x128xf32, #tpu.memory_space<vmem>>, vector<96x128xf32>,
      %c0_33 = arith.constant 0 : index
      %c0_34 = arith.constant 0 : index
      %53 = vector.load %arg6[%c0_33, %c0_34] : memref<96x1xf32, #tpu.memory_space<vmem>>, vector<96x1xf32>
      %54 = arith.mulf %35, %49 : vector<96x1xf32>
      %55 = arith.subf %53, %54 : vector<96x1xf32>
      %56 = vector.shape_cast %55 : vector<96x1xf32> to vector<96x1xf32>
      %57 = vector.broadcast %56 : vector<96x1xf32> to vector<96x128xf32>
      %c0_35 = arith.constant 0 : index
      %c0_36 = arith.constant 0 : index
      %58 = vector.load %arg9[%c0_35, %c0_36] : memref<96x128xf32, #tpu.memory_space<vmem>>, vector<96x128xf32>
      tpu.vector_store %arg9[%c0_35, %c0_36], %57 {strides = array<i32>} : memref<96x128xf32, #tpu.memory_space<vmem>>, vector<96x128xf32>,
    } else {
    }
    return
  }
  func.func @transform_0(%arg0: i32, %arg1: i32, %arg2: i32) -> (i32, i32) {
    %c0_i32 = arith.constant 0 : i32
    %c0_i32_0 = arith.constant 0 : i32
    return %arg0, %c0_i32 : i32, i32
  }
  func.func @transform_1(%arg0: i32, %arg1: i32, %arg2: i32) -> (i32, i32, i32) {
    %c0_i32 = arith.constant 0 : i32
    %c0_i32_0 = arith.constant 0 : i32
    return %arg1, %c0_i32, %arg2 : i32, i32, i32
  }
  func.func @transform_2(%arg0: i32, %arg1: i32, %arg2: i32) -> (i32, i32) {
    %c0_i32 = arith.constant 0 : i32
    %c0_i32_0 = arith.constant 0 : i32
    return %arg0, %c0_i32 : i32, i32
  }
  func.func @transform_3(%arg0: i32, %arg1: i32, %arg2: i32) -> (i32, i32) {
    %c0_i32 = arith.constant 0 : i32
    %c0_i32_0 = arith.constant 0 : i32
    return %arg0, %c0_i32 : i32, i32
  }
  func.func @transform_4(%arg0: i32, %arg1: i32, %arg2: i32) -> (i32, i32, i32) {
    %c0_i32 = arith.constant 0 : i32
    return %arg1, %arg0, %arg2 : i32, i32, i32
  }
  func.func @transform_5(%arg0: i32, %arg1: i32, %arg2: i32) -> (i32, i32) {
    %c0_i32 = arith.constant 0 : i32
    %c0_i32_0 = arith.constant 0 : i32
    return %arg0, %c0_i32 : i32, i32
  }
  func.func @transform_6(%arg0: i32, %arg1: i32, %arg2: i32) -> (i32, i32) {
    %c0_i32 = arith.constant 0 : i32
    %c0_i32_0 = arith.constant 0 : i32
    return %arg0, %c0_i32 : i32, i32
  }
}

module attributes {stable_mosaic.version = 11 : i64} {
  func.func @_tfblock_kernel(%arg0: i32, %arg1: memref<1x96x256xbf16, #tpu.memory_space<vmem>>, %arg2: memref<96x128xf32, #tpu.memory_space<vmem>>, %arg3: memref<96x128xf32, #tpu.memory_space<vmem>>, %arg4: memref<484x64xbf16, #tpu.memory_space<vmem>>, %arg5: memref<121x256xf32, #tpu.memory_space<vmem>>, %arg6: memref<1x64x256xf32, #tpu.memory_space<vmem>>, %arg7: memref<16x64xbf16, #tpu.memory_space<vmem>>, %arg8: memref<16x1xf32, #tpu.memory_space<vmem>>, %arg9: memref<16x144xbf16, #tpu.memory_space<vmem>>, %arg10: memref<16x1xf32, #tpu.memory_space<vmem>>, %arg11: memref<64x16xbf16, #tpu.memory_space<vmem>>, %arg12: memref<64x1xf32, #tpu.memory_space<vmem>>, %arg13: memref<9x256xf32, #tpu.memory_space<vmem>>, %arg14: memref<1x64x256xf32, #tpu.memory_space<vmem>>, %arg15: memref<484x256xf32, #tpu.memory_space<vmem>>, %arg16: memref<16x256xf32, #tpu.memory_space<vmem>>, %arg17: memref<144x256xbf16, #tpu.memory_space<vmem>>) attributes {dimension_semantics = [#tpu.dimension_semantics<parallel>], iteration_bounds = array<i64: 2>, scalar_prefetch = 0 : i64, scratch_operands = 3 : i64, tpu.core_type = #tpu.core_type<tc>, window_params = [{transform_indices = @transform_0, window_bounds = array<i64: 1, 96, 256>}, {pipeline_mode = #tpu.pipeline_mode<synchronous>, transform_indices = @transform_1, window_bounds = array<i64: 96, 128>}, {pipeline_mode = #tpu.pipeline_mode<synchronous>, transform_indices = @transform_2, window_bounds = array<i64: 96, 128>}, {pipeline_mode = #tpu.pipeline_mode<synchronous>, transform_indices = @transform_3, window_bounds = array<i64: 484, 64>}, {pipeline_mode = #tpu.pipeline_mode<synchronous>, transform_indices = @transform_4, window_bounds = array<i64: 121, 256>}, {transform_indices = @transform_5, window_bounds = array<i64: 1, 64, 256>}, {pipeline_mode = #tpu.pipeline_mode<synchronous>, transform_indices = @transform_6, window_bounds = array<i64: 16, 64>}, {pipeline_mode = #tpu.pipeline_mode<synchronous>, transform_indices = @transform_7, window_bounds = array<i64: 16, 1>}, {pipeline_mode = #tpu.pipeline_mode<synchronous>, transform_indices = @transform_8, window_bounds = array<i64: 16, 144>}, {pipeline_mode = #tpu.pipeline_mode<synchronous>, transform_indices = @transform_9, window_bounds = array<i64: 16, 1>}, {pipeline_mode = #tpu.pipeline_mode<synchronous>, transform_indices = @transform_10, window_bounds = array<i64: 64, 16>}, {pipeline_mode = #tpu.pipeline_mode<synchronous>, transform_indices = @transform_11, window_bounds = array<i64: 64, 1>}, {pipeline_mode = #tpu.pipeline_mode<synchronous>, transform_indices = @transform_12, window_bounds = array<i64: 9, 256>}, {transform_indices = @transform_13, window_bounds = array<i64: 1, 64, 256>}]} {
    %c0 = arith.constant 0 : index
    %c0_0 = arith.constant 0 : index
    %0 = vector.load %arg2[%c0, %c0_0] : memref<96x128xf32, #tpu.memory_space<vmem>>, vector<96x1xf32>
    %c0_1 = arith.constant 0 : index
    %c0_2 = arith.constant 0 : index
    %1 = vector.load %arg3[%c0_1, %c0_2] : memref<96x128xf32, #tpu.memory_space<vmem>>, vector<96x1xf32>
    %c0_3 = arith.constant 0 : index
    %c0_4 = arith.constant 0 : index
    %c0_5 = arith.constant 0 : index
    %2 = vector.load %arg1[%c0_3, %c0_4, %c0_5] : memref<1x96x256xbf16, #tpu.memory_space<vmem>>, vector<1x96x256xbf16>
    %3 = vector.shape_cast %2 : vector<1x96x256xbf16> to vector<96x256xbf16>
    %4 = arith.extf %3 : vector<96x256xbf16> to vector<96x256xf32>
    %5 = vector.extract_strided_slice %4 {offsets = [0, 0], sizes = [64, 256], strides = [1, 1]} : vector<96x256xf32> to vector<64x256xf32>
    %6 = vector.extract_strided_slice %0 {offsets = [0, 0], sizes = [64, 1], strides = [1, 1]} : vector<96x1xf32> to vector<64x1xf32>
    %7 = vector.broadcast %6 : vector<64x1xf32> to vector<64x256xf32>
    %8 = arith.mulf %5, %7 : vector<64x256xf32>
    %9 = vector.extract_strided_slice %1 {offsets = [0, 0], sizes = [64, 1], strides = [1, 1]} : vector<96x1xf32> to vector<64x1xf32>
    %10 = vector.broadcast %9 : vector<64x1xf32> to vector<64x256xf32>
    %11 = arith.addf %8, %10 : vector<64x256xf32>
    %12 = vector.extract_strided_slice %4 {offsets = [64, 0], sizes = [16, 256], strides = [1, 1]} : vector<96x256xf32> to vector<16x256xf32>
    %13 = vector.extract_strided_slice %0 {offsets = [64, 0], sizes = [16, 1], strides = [1, 1]} : vector<96x1xf32> to vector<16x1xf32>
    %14 = vector.broadcast %13 : vector<16x1xf32> to vector<16x256xf32>
    %15 = arith.mulf %12, %14 : vector<16x256xf32>
    %16 = vector.extract_strided_slice %1 {offsets = [64, 0], sizes = [16, 1], strides = [1, 1]} : vector<96x1xf32> to vector<16x1xf32>
    %17 = vector.broadcast %16 : vector<16x1xf32> to vector<16x256xf32>
    %18 = arith.addf %15, %17 : vector<16x256xf32>
    %19 = vector.extract_strided_slice %4 {offsets = [80, 0], sizes = [16, 256], strides = [1, 1]} : vector<96x256xf32> to vector<16x256xf32>
    %cst = arith.constant dense<0xFF800000> : vector<16xf32>
    %20 = vector.multi_reduction <maximumf>, %19, %cst [1] : vector<16x256xf32> to vector<16xf32>
    %21 = vector.shape_cast %20 : vector<16xf32> to vector<16x1xf32>
    %22 = vector.broadcast %21 : vector<16x1xf32> to vector<16x256xf32>
    %23 = arith.subf %19, %22 : vector<16x256xf32>
    %24 = math.exp %23 : vector<16x256xf32>
    %cst_6 = arith.constant dense<0.000000e+00> : vector<16xf32>
    %25 = vector.multi_reduction <add>, %24, %cst_6 [1] : vector<16x256xf32> to vector<16xf32>
    %26 = vector.shape_cast %25 : vector<16xf32> to vector<16x1xf32>
    %27 = tpu.reciprocal %26 {approx = true} : vector<16x1xf32> -> vector<16x1xf32>
    %28 = vector.broadcast %27 : vector<16x1xf32> to vector<16x256xf32>
    %29 = arith.mulf %24, %28 : vector<16x256xf32>
    %30 = arith.truncf %11 : vector<64x256xf32> to vector<64x256xbf16>
    %c0_7 = arith.constant 0 : index
    %c0_8 = arith.constant 0 : index
    %31 = vector.load %arg16[%c0_7, %c0_8] : memref<16x256xf32, #tpu.memory_space<vmem>>, vector<16x256xf32>
    tpu.vector_store %arg16[%c0_7, %c0_8], %18 {strides = array<i32>} : memref<16x256xf32, #tpu.memory_space<vmem>>, vector<16x256xf32>,
    %32 = arith.truncf %18 : vector<16x256xf32> to vector<16x256xbf16>
    %33 = arith.truncf %29 : vector<16x256xf32> to vector<16x256xbf16>
    %cst_9 = arith.constant dense<0.000000e+00> : vector<16x16xf32>
    %34 = tpu.matmul %32, %33, %cst_9 {dimension_numbers = #tpu.dot_dimension_numbers<[1], [1], [0], [0], [0, 0, 1, 0], [], []>} : vector<16x256xbf16>, vector<16x256xbf16>, vector<16x16xf32> -> vector<16x16xf32>
    %cst_10 = arith.constant 0.000000e+00 : f32
    %35 = vector.broadcast %cst_10 : f32 to vector<16x16xf32>
    %36 = tpu.concatenate %34, %35, %35, %35 in 1 : vector<16x16xf32>, vector<16x16xf32>, vector<16x16xf32>, vector<16x16xf32> -> vector<16x64xf32>
    %37 = tpu.concatenate %35, %34, %35, %35 in 1 : vector<16x16xf32>, vector<16x16xf32>, vector<16x16xf32>, vector<16x16xf32> -> vector<16x64xf32>
    %38 = tpu.concatenate %35, %35, %34, %35 in 1 : vector<16x16xf32>, vector<16x16xf32>, vector<16x16xf32>, vector<16x16xf32> -> vector<16x64xf32>
    %39 = tpu.concatenate %35, %35, %35, %34 in 1 : vector<16x16xf32>, vector<16x16xf32>, vector<16x16xf32>, vector<16x16xf32> -> vector<16x64xf32>
    %40 = tpu.concatenate %36, %37, %38, %39 in 0 : vector<16x64xf32>, vector<16x64xf32>, vector<16x64xf32>, vector<16x64xf32> -> vector<64x64xf32>
    %41 = arith.truncf %40 : vector<64x64xf32> to vector<64x64xbf16>
    %cst_11 = arith.constant dense<0.000000e+00> : vector<64x256xf32>
    %42 = tpu.matmul %41, %30, %cst_11 {dimension_numbers = #tpu.dot_dimension_numbers<[1], [0], [0], [1], [0, 0, 1, 1], [], []>} : vector<64x64xbf16>, vector<64x256xbf16>, vector<64x256xf32> -> vector<64x256xf32>
    %c0_12 = arith.constant 0 : index
    %c0_13 = arith.constant 0 : index
    %43 = vector.load %arg4[%c0_12, %c0_13] : memref<484x64xbf16, #tpu.memory_space<vmem>>, vector<484x64xbf16>
    %cst_14 = arith.constant dense<0.000000e+00> : vector<484x256xf32>
    %44 = tpu.matmul %43, %30, %cst_14 {dimension_numbers = #tpu.dot_dimension_numbers<[1], [0], [0], [1], [0, 0, 1, 1], [], []>} : vector<484x64xbf16>, vector<64x256xbf16>, vector<484x256xf32> -> vector<484x256xf32>
    %c0_15 = arith.constant 0 : index
    %c0_16 = arith.constant 0 : index
    %45 = vector.load %arg15[%c0_15, %c0_16] : memref<484x256xf32, #tpu.memory_space<vmem>>, vector<484x256xf32>
    tpu.vector_store %arg15[%c0_15, %c0_16], %44 {strides = array<i32>} : memref<484x256xf32, #tpu.memory_space<vmem>>, vector<484x256xf32>,
    %c0_i32 = arith.constant 0 : i32
    %c11_i32 = arith.constant 11 : i32
    %46 = arith.addi %c0_i32, %c11_i32 : i32
    %c1_i32 = arith.constant 1 : i32
    %47 = scf.for %arg18 = %c0_i32 to %46 step %c1_i32 iter_args(%arg19 = %42) -> (vector<64x256xf32>)  : i32 {
      %c0_i32_76 = arith.constant 0 : i32
      %c11_i32_77 = arith.constant 11 : i32
      %165 = arith.addi %c0_i32_76, %c11_i32_77 : i32
      %c1_i32_78 = arith.constant 1 : i32
      %166 = scf.for %arg20 = %c0_i32_76 to %165 step %c1_i32_78 iter_args(%arg21 = %arg19) -> (vector<64x256xf32>)  : i32 {
        %c11_i32_80 = arith.constant 11 : i32
        %167 = arith.muli %arg18, %c11_i32_80 : i32
        %168 = arith.addi %167, %arg20 : i32
        %c5_i32 = arith.constant 5 : i32
        %169 = arith.subi %arg18, %c5_i32 : i32
        %c16_i32_81 = arith.constant 16 : i32
        %170 = arith.muli %169, %c16_i32_81 : i32
        %c5_i32_82 = arith.constant 5 : i32
        %171 = arith.subi %arg20, %c5_i32_82 : i32
        %172 = arith.addi %170, %171 : i32
        %c0_i32_83 = arith.constant 0 : i32
        %173 = arith.cmpi sgt, %172, %c0_i32_83 : i32
        %c256_i32 = arith.constant 256 : i32
        %174 = arith.subi %c256_i32, %172 : i32
        %c0_i32_84 = arith.constant 0 : i32
        %175 = arith.subi %c0_i32_84, %172 : i32
        %176 = arith.select %173, %174, %175 : i32
        %c0_85 = arith.constant 0 : index
        %c0_86 = arith.constant 0 : index
        %177 = vector.load %arg16[%c0_85, %c0_86] : memref<16x256xf32, #tpu.memory_space<vmem>>, vector<16x256xf32>
        %178 = tpu.dynamic_rotate %177 by %176 dim 1 : vector<16x256xf32>, i32 -> vector<16x256xf32>
        %179 = arith.index_cast %168 : i32 to index
        %c0_87 = arith.constant 0 : index
        %180 = vector.load %arg5[%179, %c0_87] : memref<121x256xf32, #tpu.memory_space<vmem>>, vector<1x256xf32>
        %c4_i32 = arith.constant 4 : i32
        %181 = arith.muli %168, %c4_i32 : i32
        %c0_i32_88 = arith.constant 0 : i32
        %182 = arith.addi %181, %c0_i32_88 : i32
        %183 = arith.index_cast %182 : i32 to index
        %c0_89 = arith.constant 0 : index
        %184 = vector.load %arg15[%183, %c0_89] : memref<484x256xf32, #tpu.memory_space<vmem>>, vector<1x256xf32>
        %185 = arith.mulf %184, %180 : vector<1x256xf32>
        %186 = vector.broadcast %185 : vector<1x256xf32> to vector<16x256xf32>
        %187 = arith.mulf %186, %178 : vector<16x256xf32>
        %c1_i32_90 = arith.constant 1 : i32
        %188 = arith.addi %181, %c1_i32_90 : i32
        %189 = arith.index_cast %188 : i32 to index
        %c0_91 = arith.constant 0 : index
        %190 = vector.load %arg15[%189, %c0_91] : memref<484x256xf32, #tpu.memory_space<vmem>>, vector<1x256xf32>
        %191 = arith.mulf %190, %180 : vector<1x256xf32>
        %192 = vector.broadcast %191 : vector<1x256xf32> to vector<16x256xf32>
        %193 = arith.mulf %192, %178 : vector<16x256xf32>
        %c2_i32 = arith.constant 2 : i32
        %194 = arith.addi %181, %c2_i32 : i32
        %195 = arith.index_cast %194 : i32 to index
        %c0_92 = arith.constant 0 : index
        %196 = vector.load %arg15[%195, %c0_92] : memref<484x256xf32, #tpu.memory_space<vmem>>, vector<1x256xf32>
        %197 = arith.mulf %196, %180 : vector<1x256xf32>
        %198 = vector.broadcast %197 : vector<1x256xf32> to vector<16x256xf32>
        %199 = arith.mulf %198, %178 : vector<16x256xf32>
        %c3_i32 = arith.constant 3 : i32
        %200 = arith.addi %181, %c3_i32 : i32
        %201 = arith.index_cast %200 : i32 to index
        %c0_93 = arith.constant 0 : index
        %202 = vector.load %arg15[%201, %c0_93] : memref<484x256xf32, #tpu.memory_space<vmem>>, vector<1x256xf32>
        %203 = arith.mulf %202, %180 : vector<1x256xf32>
        %204 = vector.broadcast %203 : vector<1x256xf32> to vector<16x256xf32>
        %205 = arith.mulf %204, %178 : vector<16x256xf32>
        %206 = tpu.concatenate %187, %193, %199, %205 in 0 : vector<16x256xf32>, vector<16x256xf32>, vector<16x256xf32>, vector<16x256xf32> -> vector<64x256xf32>
        %207 = arith.addf %arg21, %206 : vector<64x256xf32>
        scf.yield %207 : vector<64x256xf32>
      }
      %c11_i32_79 = arith.constant 11 : i32
      scf.yield %166 : vector<64x256xf32>
    }
    %c11_i32_17 = arith.constant 11 : i32
    %c0_18 = arith.constant 0 : index
    %c0_19 = arith.constant 0 : index
    %c0_20 = arith.constant 0 : index
    %48 = vector.load %arg6[%c0_18, %c0_19, %c0_20] : memref<1x64x256xf32, #tpu.memory_space<vmem>>, vector<1x64x256xf32>
    %49 = vector.shape_cast %48 : vector<1x64x256xf32> to vector<64x256xf32>
    %50 = arith.addf %49, %47 : vector<64x256xf32>
    %c0_21 = arith.constant 0 : index
    %c0_22 = arith.constant 0 : index
    %51 = vector.load %arg7[%c0_21, %c0_22] : memref<16x64xbf16, #tpu.memory_space<vmem>>, vector<16x64xbf16>
    %52 = arith.truncf %50 : vector<64x256xf32> to vector<64x256xbf16>
    %cst_23 = arith.constant dense<0.000000e+00> : vector<16x256xf32>
    %53 = tpu.matmul %51, %52, %cst_23 {dimension_numbers = #tpu.dot_dimension_numbers<[1], [0], [0], [1], [0, 0, 1, 1], [], []>} : vector<16x64xbf16>, vector<64x256xbf16>, vector<16x256xf32> -> vector<16x256xf32>
    %c0_24 = arith.constant 0 : index
    %c0_25 = arith.constant 0 : index
    %54 = vector.load %arg8[%c0_24, %c0_25] : memref<16x1xf32, #tpu.memory_space<vmem>>, vector<16x1xf32>
    %55 = vector.broadcast %54 : vector<16x1xf32> to vector<16x256xf32>
    %56 = arith.addf %53, %55 : vector<16x256xf32>
    %c17_i32 = arith.constant 17 : i32
    %57 = tpu.dynamic_rotate %56 by %c17_i32 dim 1 : vector<16x256xf32>, i32 -> vector<16x256xf32>
    %c0_26 = arith.constant 0 : index
    %c0_27 = arith.constant 0 : index
    %58 = vector.load %arg13[%c0_26, %c0_27] : memref<9x256xf32, #tpu.memory_space<vmem>>, vector<1x256xf32>
    %59 = vector.broadcast %58 : vector<1x256xf32> to vector<16x256xf32>
    %60 = arith.mulf %57, %59 : vector<16x256xf32>
    %61 = arith.truncf %60 : vector<16x256xf32> to vector<16x256xbf16>
    %c0_28 = arith.constant 0 : index
    %c0_29 = arith.constant 0 : index
    %62 = vector.load %arg17[%c0_28, %c0_29] : memref<144x256xbf16, #tpu.memory_space<vmem>>, vector<16x256xbf16>
    tpu.vector_store %arg17[%c0_28, %c0_29], %61 {strides = array<i32>} : memref<144x256xbf16, #tpu.memory_space<vmem>>, vector<16x256xbf16>,
    %c16_i32 = arith.constant 16 : i32
    %63 = tpu.dynamic_rotate %56 by %c16_i32 dim 1 : vector<16x256xf32>, i32 -> vector<16x256xf32>
    %c1 = arith.constant 1 : index
    %c0_30 = arith.constant 0 : index
    %64 = vector.load %arg13[%c1, %c0_30] : memref<9x256xf32, #tpu.memory_space<vmem>>, vector<1x256xf32>
    %65 = vector.broadcast %64 : vector<1x256xf32> to vector<16x256xf32>
    %66 = arith.mulf %63, %65 : vector<16x256xf32>
    %67 = arith.truncf %66 : vector<16x256xf32> to vector<16x256xbf16>
    %c16 = arith.constant 16 : index
    %c0_31 = arith.constant 0 : index
    %68 = vector.load %arg17[%c16, %c0_31] : memref<144x256xbf16, #tpu.memory_space<vmem>>, vector<16x256xbf16>
    tpu.vector_store %arg17[%c16, %c0_31], %67 {strides = array<i32>} : memref<144x256xbf16, #tpu.memory_space<vmem>>, vector<16x256xbf16>,
    %c15_i32 = arith.constant 15 : i32
    %69 = tpu.dynamic_rotate %56 by %c15_i32 dim 1 : vector<16x256xf32>, i32 -> vector<16x256xf32>
    %c2 = arith.constant 2 : index
    %c0_32 = arith.constant 0 : index
    %70 = vector.load %arg13[%c2, %c0_32] : memref<9x256xf32, #tpu.memory_space<vmem>>, vector<1x256xf32>
    %71 = vector.broadcast %70 : vector<1x256xf32> to vector<16x256xf32>
    %72 = arith.mulf %69, %71 : vector<16x256xf32>
    %73 = arith.truncf %72 : vector<16x256xf32> to vector<16x256xbf16>
    %c32 = arith.constant 32 : index
    %c0_33 = arith.constant 0 : index
    %74 = vector.load %arg17[%c32, %c0_33] : memref<144x256xbf16, #tpu.memory_space<vmem>>, vector<16x256xbf16>
    tpu.vector_store %arg17[%c32, %c0_33], %73 {strides = array<i32>} : memref<144x256xbf16, #tpu.memory_space<vmem>>, vector<16x256xbf16>,
    %c1_i32_34 = arith.constant 1 : i32
    %75 = tpu.dynamic_rotate %56 by %c1_i32_34 dim 1 : vector<16x256xf32>, i32 -> vector<16x256xf32>
    %c3 = arith.constant 3 : index
    %c0_35 = arith.constant 0 : index
    %76 = vector.load %arg13[%c3, %c0_35] : memref<9x256xf32, #tpu.memory_space<vmem>>, vector<1x256xf32>
    %77 = vector.broadcast %76 : vector<1x256xf32> to vector<16x256xf32>
    %78 = arith.mulf %75, %77 : vector<16x256xf32>
    %79 = arith.truncf %78 : vector<16x256xf32> to vector<16x256xbf16>
    %c48 = arith.constant 48 : index
    %c0_36 = arith.constant 0 : index
    %80 = vector.load %arg17[%c48, %c0_36] : memref<144x256xbf16, #tpu.memory_space<vmem>>, vector<16x256xbf16>
    tpu.vector_store %arg17[%c48, %c0_36], %79 {strides = array<i32>} : memref<144x256xbf16, #tpu.memory_space<vmem>>, vector<16x256xbf16>,
    %c4 = arith.constant 4 : index
    %c0_37 = arith.constant 0 : index
    %81 = vector.load %arg13[%c4, %c0_37] : memref<9x256xf32, #tpu.memory_space<vmem>>, vector<1x256xf32>
    %82 = vector.broadcast %81 : vector<1x256xf32> to vector<16x256xf32>
    %83 = arith.mulf %56, %82 : vector<16x256xf32>
    %84 = arith.truncf %83 : vector<16x256xf32> to vector<16x256xbf16>
    %c64 = arith.constant 64 : index
    %c0_38 = arith.constant 0 : index
    %85 = vector.load %arg17[%c64, %c0_38] : memref<144x256xbf16, #tpu.memory_space<vmem>>, vector<16x256xbf16>
    tpu.vector_store %arg17[%c64, %c0_38], %84 {strides = array<i32>} : memref<144x256xbf16, #tpu.memory_space<vmem>>, vector<16x256xbf16>,
    %c255_i32 = arith.constant 255 : i32
    %86 = tpu.dynamic_rotate %56 by %c255_i32 dim 1 : vector<16x256xf32>, i32 -> vector<16x256xf32>
    %c5 = arith.constant 5 : index
    %c0_39 = arith.constant 0 : index
    %87 = vector.load %arg13[%c5, %c0_39] : memref<9x256xf32, #tpu.memory_space<vmem>>, vector<1x256xf32>
    %88 = vector.broadcast %87 : vector<1x256xf32> to vector<16x256xf32>
    %89 = arith.mulf %86, %88 : vector<16x256xf32>
    %90 = arith.truncf %89 : vector<16x256xf32> to vector<16x256xbf16>
    %c80 = arith.constant 80 : index
    %c0_40 = arith.constant 0 : index
    %91 = vector.load %arg17[%c80, %c0_40] : memref<144x256xbf16, #tpu.memory_space<vmem>>, vector<16x256xbf16>
    tpu.vector_store %arg17[%c80, %c0_40], %90 {strides = array<i32>} : memref<144x256xbf16, #tpu.memory_space<vmem>>, vector<16x256xbf16>,
    %c241_i32 = arith.constant 241 : i32
    %92 = tpu.dynamic_rotate %56 by %c241_i32 dim 1 : vector<16x256xf32>, i32 -> vector<16x256xf32>
    %c6 = arith.constant 6 : index
    %c0_41 = arith.constant 0 : index
    %93 = vector.load %arg13[%c6, %c0_41] : memref<9x256xf32, #tpu.memory_space<vmem>>, vector<1x256xf32>
    %94 = vector.broadcast %93 : vector<1x256xf32> to vector<16x256xf32>
    %95 = arith.mulf %92, %94 : vector<16x256xf32>
    %96 = arith.truncf %95 : vector<16x256xf32> to vector<16x256xbf16>
    %c96 = arith.constant 96 : index
    %c0_42 = arith.constant 0 : index
    %97 = vector.load %arg17[%c96, %c0_42] : memref<144x256xbf16, #tpu.memory_space<vmem>>, vector<16x256xbf16>
    tpu.vector_store %arg17[%c96, %c0_42], %96 {strides = array<i32>} : memref<144x256xbf16, #tpu.memory_space<vmem>>, vector<16x256xbf16>,
    %c240_i32 = arith.constant 240 : i32
    %98 = tpu.dynamic_rotate %56 by %c240_i32 dim 1 : vector<16x256xf32>, i32 -> vector<16x256xf32>
    %c7 = arith.constant 7 : index
    %c0_43 = arith.constant 0 : index
    %99 = vector.load %arg13[%c7, %c0_43] : memref<9x256xf32, #tpu.memory_space<vmem>>, vector<1x256xf32>
    %100 = vector.broadcast %99 : vector<1x256xf32> to vector<16x256xf32>
    %101 = arith.mulf %98, %100 : vector<16x256xf32>
    %102 = arith.truncf %101 : vector<16x256xf32> to vector<16x256xbf16>
    %c112 = arith.constant 112 : index
    %c0_44 = arith.constant 0 : index
    %103 = vector.load %arg17[%c112, %c0_44] : memref<144x256xbf16, #tpu.memory_space<vmem>>, vector<16x256xbf16>
    tpu.vector_store %arg17[%c112, %c0_44], %102 {strides = array<i32>} : memref<144x256xbf16, #tpu.memory_space<vmem>>, vector<16x256xbf16>,
    %c239_i32 = arith.constant 239 : i32
    %104 = tpu.dynamic_rotate %56 by %c239_i32 dim 1 : vector<16x256xf32>, i32 -> vector<16x256xf32>
    %c8 = arith.constant 8 : index
    %c0_45 = arith.constant 0 : index
    %105 = vector.load %arg13[%c8, %c0_45] : memref<9x256xf32, #tpu.memory_space<vmem>>, vector<1x256xf32>
    %106 = vector.broadcast %105 : vector<1x256xf32> to vector<16x256xf32>
    %107 = arith.mulf %104, %106 : vector<16x256xf32>
    %108 = arith.truncf %107 : vector<16x256xf32> to vector<16x256xbf16>
    %c128 = arith.constant 128 : index
    %c0_46 = arith.constant 0 : index
    %109 = vector.load %arg17[%c128, %c0_46] : memref<144x256xbf16, #tpu.memory_space<vmem>>, vector<16x256xbf16>
    tpu.vector_store %arg17[%c128, %c0_46], %108 {strides = array<i32>} : memref<144x256xbf16, #tpu.memory_space<vmem>>, vector<16x256xbf16>,
    %c0_47 = arith.constant 0 : index
    %c0_48 = arith.constant 0 : index
    %110 = vector.load %arg9[%c0_47, %c0_48] : memref<16x144xbf16, #tpu.memory_space<vmem>>, vector<16x144xbf16>
    %c0_49 = arith.constant 0 : index
    %c0_50 = arith.constant 0 : index
    %111 = vector.load %arg17[%c0_49, %c0_50] : memref<144x256xbf16, #tpu.memory_space<vmem>>, vector<144x256xbf16>
    %cst_51 = arith.constant dense<0.000000e+00> : vector<16x256xf32>
    %112 = tpu.matmul %110, %111, %cst_51 {dimension_numbers = #tpu.dot_dimension_numbers<[1], [0], [0], [1], [0, 0, 1, 1], [], []>} : vector<16x144xbf16>, vector<144x256xbf16>, vector<16x256xf32> -> vector<16x256xf32>
    %c0_52 = arith.constant 0 : index
    %c0_53 = arith.constant 0 : index
    %113 = vector.load %arg10[%c0_52, %c0_53] : memref<16x1xf32, #tpu.memory_space<vmem>>, vector<16x1xf32>
    %114 = vector.broadcast %113 : vector<16x1xf32> to vector<16x256xf32>
    %115 = arith.addf %112, %114 : vector<16x256xf32>
    %cst_54 = arith.constant 5.000000e-01 : f32
    %116 = vector.broadcast %cst_54 : f32 to vector<16x256xf32>
    %117 = arith.mulf %116, %115 : vector<16x256xf32>
    %cst_55 = arith.constant 0.707106769 : f32
    %118 = vector.broadcast %cst_55 : f32 to vector<16x256xf32>
    %119 = arith.mulf %115, %118 : vector<16x256xf32>
    %120 = math.absf %119 : vector<16x256xf32>
    %cst_56 = arith.constant 0.327591091 : f32
    %121 = vector.broadcast %cst_56 : f32 to vector<16x256xf32>
    %122 = arith.mulf %121, %120 : vector<16x256xf32>
    %cst_57 = arith.constant 1.000000e+00 : f32
    %123 = vector.broadcast %cst_57 : f32 to vector<16x256xf32>
    %124 = arith.addf %123, %122 : vector<16x256xf32>
    %125 = tpu.reciprocal %124 {approx = true} : vector<16x256xf32> -> vector<16x256xf32>
    %cst_58 = arith.constant 1.06140542 : f32
    %126 = vector.broadcast %cst_58 : f32 to vector<16x256xf32>
    %127 = arith.mulf %126, %125 : vector<16x256xf32>
    %cst_59 = arith.constant -1.45315206 : f32
    %128 = vector.broadcast %cst_59 : f32 to vector<16x256xf32>
    %129 = arith.addf %127, %128 : vector<16x256xf32>
    %130 = arith.mulf %129, %125 : vector<16x256xf32>
    %cst_60 = arith.constant 1.42141378 : f32
    %131 = vector.broadcast %cst_60 : f32 to vector<16x256xf32>
    %132 = arith.addf %130, %131 : vector<16x256xf32>
    %133 = arith.mulf %132, %125 : vector<16x256xf32>
    %cst_61 = arith.constant -0.284496725 : f32
    %134 = vector.broadcast %cst_61 : f32 to vector<16x256xf32>
    %135 = arith.addf %133, %134 : vector<16x256xf32>
    %136 = arith.mulf %135, %125 : vector<16x256xf32>
    %cst_62 = arith.constant 0.254829586 : f32
    %137 = vector.broadcast %cst_62 : f32 to vector<16x256xf32>
    %138 = arith.addf %136, %137 : vector<16x256xf32>
    %139 = arith.mulf %138, %125 : vector<16x256xf32>
    %cst_63 = arith.constant 0.000000e+00 : f32
    %140 = vector.broadcast %cst_63 : f32 to vector<16x256xf32>
    %141 = arith.subf %140, %120 : vector<16x256xf32>
    %142 = arith.mulf %141, %120 : vector<16x256xf32>
    %143 = math.exp %142 : vector<16x256xf32>
    %144 = arith.mulf %139, %143 : vector<16x256xf32>
    %cst_64 = arith.constant 1.000000e+00 : f32
    %145 = vector.broadcast %cst_64 : f32 to vector<16x256xf32>
    %146 = arith.subf %145, %144 : vector<16x256xf32>
    %cst_65 = arith.constant 0.000000e+00 : f32
    %147 = vector.broadcast %cst_65 : f32 to vector<16x256xf32>
    %148 = arith.cmpf olt, %119, %147 : vector<16x256xf32>
    %cst_66 = arith.constant 0.000000e+00 : f32
    %149 = vector.broadcast %cst_66 : f32 to vector<16x256xf32>
    %150 = arith.subf %149, %146 : vector<16x256xf32>
    %151 = arith.select %148, %150, %146 : vector<16x256xi1>, vector<16x256xf32>
    %cst_67 = arith.constant 1.000000e+00 : f32
    %152 = vector.broadcast %cst_67 : f32 to vector<16x256xf32>
    %153 = arith.addf %152, %151 : vector<16x256xf32>
    %154 = arith.mulf %117, %153 : vector<16x256xf32>
    %c0_68 = arith.constant 0 : index
    %c0_69 = arith.constant 0 : index
    %155 = vector.load %arg11[%c0_68, %c0_69] : memref<64x16xbf16, #tpu.memory_space<vmem>>, vector<64x16xbf16>
    %156 = arith.truncf %154 : vector<16x256xf32> to vector<16x256xbf16>
    %cst_70 = arith.constant dense<0.000000e+00> : vector<64x256xf32>
    %157 = tpu.matmul %155, %156, %cst_70 {dimension_numbers = #tpu.dot_dimension_numbers<[1], [0], [0], [1], [0, 0, 1, 1], [], []>} : vector<64x16xbf16>, vector<16x256xbf16>, vector<64x256xf32> -> vector<64x256xf32>
    %c0_71 = arith.constant 0 : index
    %c0_72 = arith.constant 0 : index
    %158 = vector.load %arg12[%c0_71, %c0_72] : memref<64x1xf32, #tpu.memory_space<vmem>>, vector<64x1xf32>
    %159 = vector.broadcast %158 : vector<64x1xf32> to vector<64x256xf32>
    %160 = arith.addf %157, %159 : vector<64x256xf32>
    %161 = arith.addf %50, %160 : vector<64x256xf32>
    %c0_73 = arith.constant 0 : index
    %c0_74 = arith.constant 0 : index
    %c0_75 = arith.constant 0 : index
    %162 = vector.load %arg14[%c0_73, %c0_74, %c0_75] : memref<1x64x256xf32, #tpu.memory_space<vmem>>, vector<1x64x256xf32>
    %163 = vector.shape_cast %162 : vector<1x64x256xf32> to vector<64x256xf32>
    %164 = vector.shape_cast %161 : vector<64x256xf32> to vector<1x64x256xf32>
    tpu.vector_store %arg14[%c0_73, %c0_74, %c0_75], %164 {strides = array<i32>} : memref<1x64x256xf32, #tpu.memory_space<vmem>>, vector<1x64x256xf32>,
    return
  }
  func.func @transform_0(%arg0: i32) -> (i32, i32, i32) {
    %c0_i32 = arith.constant 0 : i32
    %c0_i32_0 = arith.constant 0 : i32
    %c0_i32_1 = arith.constant 0 : i32
    return %arg0, %c0_i32, %c0_i32_0 : i32, i32, i32
  }
  func.func @transform_1(%arg0: i32) -> (i32, i32) {
    %c0_i32 = arith.constant 0 : i32
    %c0_i32_0 = arith.constant 0 : i32
    %c0_i32_1 = arith.constant 0 : i32
    return %c0_i32, %c0_i32_0 : i32, i32
  }
  func.func @transform_2(%arg0: i32) -> (i32, i32) {
    %c0_i32 = arith.constant 0 : i32
    %c0_i32_0 = arith.constant 0 : i32
    %c0_i32_1 = arith.constant 0 : i32
    return %c0_i32, %c0_i32_0 : i32, i32
  }
  func.func @transform_3(%arg0: i32) -> (i32, i32) {
    %c0_i32 = arith.constant 0 : i32
    %c0_i32_0 = arith.constant 0 : i32
    %c0_i32_1 = arith.constant 0 : i32
    return %c0_i32, %c0_i32_0 : i32, i32
  }
  func.func @transform_4(%arg0: i32) -> (i32, i32) {
    %c0_i32 = arith.constant 0 : i32
    %c0_i32_0 = arith.constant 0 : i32
    %c0_i32_1 = arith.constant 0 : i32
    return %c0_i32, %c0_i32_0 : i32, i32
  }
  func.func @transform_5(%arg0: i32) -> (i32, i32, i32) {
    %c0_i32 = arith.constant 0 : i32
    %c0_i32_0 = arith.constant 0 : i32
    %c0_i32_1 = arith.constant 0 : i32
    return %arg0, %c0_i32, %c0_i32_0 : i32, i32, i32
  }
  func.func @transform_6(%arg0: i32) -> (i32, i32) {
    %c0_i32 = arith.constant 0 : i32
    %c0_i32_0 = arith.constant 0 : i32
    %c0_i32_1 = arith.constant 0 : i32
    return %c0_i32, %c0_i32_0 : i32, i32
  }
  func.func @transform_7(%arg0: i32) -> (i32, i32) {
    %c0_i32 = arith.constant 0 : i32
    %c0_i32_0 = arith.constant 0 : i32
    %c0_i32_1 = arith.constant 0 : i32
    return %c0_i32, %c0_i32_0 : i32, i32
  }
  func.func @transform_8(%arg0: i32) -> (i32, i32) {
    %c0_i32 = arith.constant 0 : i32
    %c0_i32_0 = arith.constant 0 : i32
    %c0_i32_1 = arith.constant 0 : i32
    return %c0_i32, %c0_i32_0 : i32, i32
  }
  func.func @transform_9(%arg0: i32) -> (i32, i32) {
    %c0_i32 = arith.constant 0 : i32
    %c0_i32_0 = arith.constant 0 : i32
    %c0_i32_1 = arith.constant 0 : i32
    return %c0_i32, %c0_i32_0 : i32, i32
  }
  func.func @transform_10(%arg0: i32) -> (i32, i32) {
    %c0_i32 = arith.constant 0 : i32
    %c0_i32_0 = arith.constant 0 : i32
    %c0_i32_1 = arith.constant 0 : i32
    return %c0_i32, %c0_i32_0 : i32, i32
  }
  func.func @transform_11(%arg0: i32) -> (i32, i32) {
    %c0_i32 = arith.constant 0 : i32
    %c0_i32_0 = arith.constant 0 : i32
    %c0_i32_1 = arith.constant 0 : i32
    return %c0_i32, %c0_i32_0 : i32, i32
  }
  func.func @transform_12(%arg0: i32) -> (i32, i32) {
    %c0_i32 = arith.constant 0 : i32
    %c0_i32_0 = arith.constant 0 : i32
    %c0_i32_1 = arith.constant 0 : i32
    return %c0_i32, %c0_i32_0 : i32, i32
  }
  func.func @transform_13(%arg0: i32) -> (i32, i32, i32) {
    %c0_i32 = arith.constant 0 : i32
    %c0_i32_0 = arith.constant 0 : i32
    %c0_i32_1 = arith.constant 0 : i32
    return %arg0, %c0_i32, %c0_i32_0 : i32, i32, i32
  }
}

</mosaic_0001>

<llo_original>
// kernel: tf_block.2
$region0: #{tf_block.2}
  #allocation0 [shape = 'u32[]', space=smem, size = 0x4, offset = 0x4, fixed_abs, tag = 'smem constant byte address 0x4 - core index']
  #allocation1 [shape = 'u32[144,128]{1,0:T(1,128)}', space=vmem, size = 0x12000, scoped, tag = 'internal scratch']
  #allocation2 [shape = 'f32[96,128]{1,0:T(8,128)}', space=vmem, size = 0xc000, scoped, tag = 'scratch operand']
  #allocation3 [shape = 'f32[96,128]{1,0:T(8,128)}', space=vmem, size = 0xc000, scoped, tag = 'scratch operand']
  %s0 = inlined_call_operand.vmem [shape: bf16[96,64], index: 0, kind: input, shape index: {}]
  %s1 = inlined_call_operand.vmem [shape: f32[2,64,256], index: 1, kind: input, shape index: {}]
  %s2 = inlined_call_operand.vmem [shape: f32[96,1], index: 2, kind: input, shape index: {}]
  %s3 = inlined_call_operand.vmem [shape: f32[96,1], index: 3, kind: input, shape index: {}]
  %s4 = inlined_call_operand.vmem [shape: bf16[2,96,256], index: 4, kind: output, shape index: {0}]
  %s5 = inlined_call_operand.vmem [shape: f32[96,128], index: 5, kind: output, shape index: {1}]
  %s6 = inlined_call_operand.vmem [shape: f32[96,128], index: 6, kind: output, shape index: {2}]
  %7 = xla_tuple %s4, %s5, %s6
  %s8 = sld [smem:[#allocation0]]
  $region73: #{tf_block.2} parent=0
    _
  %s10 = ssub.s32 1, %s8
  %s11 = scalar_select 0, %s10, %s8
  loop: start=0, step=1, limit=4
  $region2: #{tf_block.2} parent=0 // loop_pre_header
    _
  $region3: #{tf_block.2} parent=0 // loop_header
    %s13 = sphi 0, %s17
    %p14 = scmp.ge.s32.totalorder %s13, 4
    %s20 = sphi 0, %s39
    %s21 = sphi 0, %s35
    %s22 = sphi 0, %s31
    %s23 = sphi 0, %s20
    %s24 = sphi 0, %s21
    %s25 = sphi 0, %s22
    %s26 = sphi 0, %s23
    %s27 = sphi 0, %s24
    %s28 = sphi 0, %s25
    %s42 = sphi 0, %s44
    %s45 = sphi 0, %s42
    %s46 = sphi 0, %s45
    %s62 = sphi 0, %s46
    %s70 = sphi 0, %s72
    %s73 = sphi 0, %s70
    %s74 = sphi 0, %s73
    %s90 = sphi 0, %s74
    %s96 = sphi 0, %s98
    %s99 = sphi 0, %s96
    %s100 = sphi 0, %s99
    %s116 = sphi 0, %s100
    %s122 = sphi 0, %s124
    %s125 = sphi 0, %s122
    %s126 = sphi 0, %s125
    %s142 = sphi 0, %s126
    %s152 = sphi 0, %s154
    %s155 = sphi 0, %s152
    %s156 = sphi 0, %s155
    %s172 = sphi 0, %s156
    %s178 = sphi 0, %s180
    %s181 = sphi 0, %s178
    %s182 = sphi 0, %s181
    %s198 = sphi 0, %s182
    %s204 = sphi 0, %s206
    %s207 = sphi 0, %s204
    %s208 = sphi 0, %s207
    %s224 = sphi 0, %s208
  $region4: #{tf_block.2} parent=0 // loop_header_branch
    %16 = sbr.rel (%p14) target = $region8
  $region5: #{tf_block.2} parent=0 // loop_body
    %s18 = ssub.s32 %s13, 1
    %s19 = ssub.s32 %s13, 2
    %s29 = sadd.s32 1, %s22
    %p30 = scmp.ge.s32.totalorder %s29, 1
    %s31 = scalar_select %p30, 0, %s29
    %s32 = sadd.s32 1, %s21
    %s33 = scalar_select %p30, %s32, %s21
    %p34 = scmp.ge.s32.totalorder %s33, 2
    %s35 = scalar_select %p34, 0, %s33
    %s36 = sadd.s32 1, %s20
    %s37 = scalar_select %p34, %s36, %s20
    %p38 = scmp.ge.s32.totalorder %s37, 1
    %s39 = scalar_select %p38, 0, %s37
    %s40 = ssub.s32 %s20, %s39
    %p41 = scmp.eq.s32.totalorder %s40, 0
    %s43 = sadd.s32 %s42, 1
    %s44 = scalar_select %p41, %s42, %s43
    %p47 = pneg %p41
    %p48 = scmp.eq.s32.totalorder %s13, 1
    %p49 = por %p47, %p48
    %p50 = scmp.ne.s32.totalorder %s42, %s45
    %p51 = scmp.eq.s32.totalorder %s13, 0
    %p52 = por %p50, %p51
    %p53 = scmp.ne.s32.totalorder %s42, %s45
    %p54 = scmp.eq.s32.totalorder %s18, 1
    %p55 = por %p53, %p54
    %p56 = scmp.ne.s32.totalorder %s45, %s46
    %p57 = scmp.eq.s32.totalorder %s18, 0
    %p58 = por %p56, %p57
    %p59 = scmp.ne.s32.totalorder %s45, %s46
    %p60 = scmp.eq.s32.totalorder %s19, 1
    %p61 = por %p59, %p60
    %p63 = scmp.ne.s32.totalorder %s46, %s62
    %p64 = scmp.eq.s32.totalorder %s19, 0
    %p65 = por %p63, %p64
    %s66 = ssub.s32 %s21, %s35
    %s67 = ssub.s32 %s22, %s31
    %s68 = sor.u32 %s66, %s67
    %p69 = scmp.eq.s32.totalorder %s68, 0
    %s71 = sadd.s32 %s70, 1
    %s72 = scalar_select %p69, %s70, %s71
    %p75 = pneg %p69
    %p76 = scmp.eq.s32.totalorder %s13, 1
    %p77 = por %p75, %p76
    %p78 = scmp.ne.s32.totalorder %s70, %s73
    %p79 = scmp.eq.s32.totalorder %s13, 0
    %p80 = por %p78, %p79
    %p81 = scmp.ne.s32.totalorder %s70, %s73
    %p82 = scmp.eq.s32.totalorder %s18, 1
    %p83 = por %p81, %p82
    %p84 = scmp.ne.s32.totalorder %s73, %s74
    %p85 = scmp.eq.s32.totalorder %s18, 0
    %p86 = por %p84, %p85
    %p87 = scmp.ne.s32.totalorder %s73, %s74
    %p88 = scmp.eq.s32.totalorder %s19, 1
    %p89 = por %p87, %p88
    %p91 = scmp.ne.s32.totalorder %s74, %s90
    %p92 = scmp.eq.s32.totalorder %s19, 0
    %p93 = por %p91, %p92
    %s94 = ssub.s32 %s20, %s39
    %p95 = scmp.eq.s32.totalorder %s94, 0
    %s97 = sadd.s32 %s96, 1
    %s98 = scalar_select %p95, %s96, %s97
    %p101 = pneg %p95
    %p102 = scmp.eq.s32.totalorder %s13, 1
    %p103 = por %p101, %p102
    %p104 = scmp.ne.s32.totalorder %s96, %s99
    %p105 = scmp.eq.s32.totalorder %s13, 0
    %p106 = por %p104, %p105
    %p107 = scmp.ne.s32.totalorder %s96, %s99
    %p108 = scmp.eq.s32.totalorder %s18, 1
    %p109 = por %p107, %p108
    %p110 = scmp.ne.s32.totalorder %s99, %s100
    %p111 = scmp.eq.s32.totalorder %s18, 0
    %p112 = por %p110, %p111
    %p113 = scmp.ne.s32.totalorder %s99, %s100
    %p114 = scmp.eq.s32.totalorder %s19, 1
    %p115 = por %p113, %p114
    %p117 = scmp.ne.s32.totalorder %s100, %s116
    %p118 = scmp.eq.s32.totalorder %s19, 0
    %p119 = por %p117, %p118
    %s120 = ssub.s32 %s20, %s39
    %p121 = scmp.eq.s32.totalorder %s120, 0
    %s123 = sadd.s32 %s122, 1
    %s124 = scalar_select %p121, %s122, %s123
    %p127 = pneg %p121
    %p128 = scmp.eq.s32.totalorder %s13, 1
    %p129 = por %p127, %p128
    %p130 = scmp.ne.s32.totalorder %s122, %s125
    %p131 = scmp.eq.s32.totalorder %s13, 0
    %p132 = por %p130, %p131
    %p133 = scmp.ne.s32.totalorder %s122, %s125
    %p134 = scmp.eq.s32.totalorder %s18, 1
    %p135 = por %p133, %p134
    %p136 = scmp.ne.s32.totalorder %s125, %s126
    %p137 = scmp.eq.s32.totalorder %s18, 0
    %p138 = por %p136, %p137
    %p139 = scmp.ne.s32.totalorder %s125, %s126
    %p140 = scmp.eq.s32.totalorder %s19, 1
    %p141 = por %p139, %p140
    %p143 = scmp.ne.s32.totalorder %s126, %s142
    %p144 = scmp.eq.s32.totalorder %s19, 0
    %p145 = por %p143, %p144
    %s146 = ssub.s32 %s21, %s35
    %s147 = ssub.s32 %s20, %s39
    %s148 = sor.u32 %s146, %s147
    %s149 = ssub.s32 %s22, %s31
    %s150 = sor.u32 %s148, %s149
    %p151 = scmp.eq.s32.totalorder %s150, 0
    %s153 = sadd.s32 %s152, 1
    %s154 = scalar_select %p151, %s152, %s153
    %p157 = pneg %p151
    %p158 = scmp.eq.s32.totalorder %s13, 1
    %p159 = por %p157, %p158
    %p160 = scmp.ne.s32.totalorder %s152, %s155
    %p161 = scmp.eq.s32.totalorder %s13, 0
    %p162 = por %p160, %p161
    %p163 = scmp.ne.s32.totalorder %s152, %s155
    %p164 = scmp.eq.s32.totalorder %s18, 1
    %p165 = por %p163, %p164
    %p166 = scmp.ne.s32.totalorder %s155, %s156
    %p167 = scmp.eq.s32.totalorder %s18, 0
    %p168 = por %p166, %p167
    %p169 = scmp.ne.s32.totalorder %s155, %s156
    %p170 = scmp.eq.s32.totalorder %s19, 1
    %p171 = por %p169, %p170
    %p173 = scmp.ne.s32.totalorder %s156, %s172
    %p174 = scmp.eq.s32.totalorder %s19, 0
    %p175 = por %p173, %p174
    %s176 = ssub.s32 %s20, %s39
    %p177 = scmp.eq.s32.totalorder %s176, 0
    %s179 = sadd.s32 %s178, 1
    %s180 = scalar_select %p177, %s178, %s179
    %p183 = pneg %p177
    %p184 = scmp.eq.s32.totalorder %s13, 1
    %p185 = por %p183, %p184
    %p186 = scmp.ne.s32.totalorder %s178, %s181
    %p187 = scmp.eq.s32.totalorder %s13, 0
    %p188 = por %p186, %p187
    %p189 = scmp.ne.s32.totalorder %s178, %s181
    %p190 = scmp.eq.s32.totalorder %s18, 1
    %p191 = por %p189, %p190
    %p192 = scmp.ne.s32.totalorder %s181, %s182
    %p193 = scmp.eq.s32.totalorder %s18, 0
    %p194 = por %p192, %p193
    %p195 = scmp.ne.s32.totalorder %s181, %s182
    %p196 = scmp.eq.s32.totalorder %s19, 1
    %p197 = por %p195, %p196
    %p199 = scmp.ne.s32.totalorder %s182, %s198
    %p200 = scmp.eq.s32.totalorder %s19, 0
    %p201 = por %p199, %p200
    %s202 = ssub.s32 %s20, %s39
    %p203 = scmp.eq.s32.totalorder %s202, 0
    %s205 = sadd.s32 %s204, 1
    %s206 = scalar_select %p203, %s204, %s205
    %p209 = pneg %p203
    %p210 = scmp.eq.s32.totalorder %s13, 1
    %p211 = por %p209, %p210
    %p212 = scmp.ne.s32.totalorder %s204, %s207
    %p213 = scmp.eq.s32.totalorder %s13, 0
    %p214 = por %p212, %p213
    %p215 = scmp.ne.s32.totalorder %s204, %s207
    %p216 = scmp.eq.s32.totalorder %s18, 1
    %p217 = por %p215, %p216
    %p218 = scmp.ne.s32.totalorder %s207, %s208
    %p219 = scmp.eq.s32.totalorder %s18, 0
    %p220 = por %p218, %p219
    %p221 = scmp.ne.s32.totalorder %s207, %s208
    %p222 = scmp.eq.s32.totalorder %s19, 1
    %p223 = por %p221, %p222
    %p225 = scmp.ne.s32.totalorder %s208, %s224
    %p226 = scmp.eq.s32.totalorder %s19, 0
    %p227 = por %p225, %p226
    %p228 = scmp.le.s32.totalorder 1, %s13
    %p229 = scmp.lt.s32.totalorder %s13, 3
    %p230 = pnand %p228, %p229
    %p231 = pneg %p230
    // Predicated region
    $region9: #{tf_block.2} parent=5 // pred_check
      _
    $region10: #{tf_block.2} parent=5 // pred_check_branch
      %233 = sbr.rel (%p230) target = $region12
    $region11: #{tf_block.2} parent=5 // pred_region
      %s234 = ssub.s32 %s13, 1
      // Predicated region
      $region13: #{tf_block.2} parent=11 // pred_check
        %p235 = pneg %p58
      $region14: #{tf_block.2} parent=11 // pred_check_branch
        %237 = sbr.rel (%p235) target = $region16
      $region15: #{tf_block.2} parent=11 // pred_region
        %s238 = smul.u32 12, %s23
        %p239 = scmp.lt.s32.totalorder %s238, 11
        %s240 = scalar_select %p239, %s238, 11
        %s241 = smul.addr %s240, 4
        %s242 = scalar_lea.vmem %s0, %s241
        %s243 = smul.u32 12, %s23
      $region16: #{tf_block.2} parent=11 // pred_fallthru
        _
      // Predicated region
      $region17: #{tf_block.2} parent=11 // pred_check
        %p244 = pneg %p112
      $region18: #{tf_block.2} parent=11 // pred_check_branch
        %246 = sbr.rel (%p244) target = $region20
      $region19: #{tf_block.2} parent=11 // pred_region
        %s247 = smul.u32 12, %s23
        %p248 = scmp.lt.s32.totalorder %s247, 11
        %s249 = scalar_select %p248, %s247, 11
        %s250 = smul.addr %s249, 8
        %s251 = scalar_lea.vmem %s2, %s250
        %s252 = smul.u32 12, %s23
      $region20: #{tf_block.2} parent=11 // pred_fallthru
        _
      // Predicated region
      $region21: #{tf_block.2} parent=11 // pred_check
        %p253 = pneg %p138
      $region22: #{tf_block.2} parent=11 // pred_check_branch
        %255 = sbr.rel (%p253) target = $region24
      $region23: #{tf_block.2} parent=11 // pred_region
        %s256 = smul.u32 12, %s23
        %p257 = scmp.lt.s32.totalorder %s256, 11
        %s258 = scalar_select %p257, %s256, 11
        %s259 = smul.addr %s258, 8
        %s260 = scalar_lea.vmem %s3, %s259
        %s261 = smul.u32 12, %s23
      $region24: #{tf_block.2} parent=11 // pred_fallthru
        _
    $region12: #{tf_block.2} parent=5 // pred_fallthru
      _
    %p262 = scmp.lt.s32.totalorder %s13, 2
    // Predicated region
    $region25: #{tf_block.2} parent=5 // pred_check
      %p263 = pneg %p262
    $region26: #{tf_block.2} parent=5 // pred_check_branch
      %265 = sbr.rel (%p263) target = $region28
    $region27: #{tf_block.2} parent=5 // pred_region
      // Predicated region
      $region29: #{tf_block.2} parent=27 // pred_check
        %p266 = pneg %p80
      $region30: #{tf_block.2} parent=27 // pred_check_branch
        %268 = sbr.rel (%p266) target = $region32
      $region31: #{tf_block.2} parent=27 // pred_region
        %s269 = smul.u32 2, %s22
        %p270 = scmp.lt.s32.totalorder %s21, 1
        %s271 = scalar_select %p270, %s21, 1
        %p272 = scmp.lt.s32.totalorder %s269, 1
        %s273 = scalar_select %p272, %s269, 1
        %s274 = smul.addr %s271, 16
        %s275 = sadd.s32 %s273, %s274
        %s276 = smul.addr %s275, 8
        %s277 = scalar_lea.vmem %s1, %s276
        %s278 = smul.u32 2, %s22
      $region32: #{tf_block.2} parent=27 // pred_fallthru
        _
    $region28: #{tf_block.2} parent=5 // pred_fallthru
      _
    %p279 = scmp.le.s32.totalorder 1, %s13
    %p280 = scmp.lt.s32.totalorder %s13, 3
    %p281 = pnand %p279, %p280
    %p282 = pneg %p281
    // Predicated region
    $region33: #{tf_block.2} parent=5 // pred_check
      _
    $region34: #{tf_block.2} parent=5 // pred_check_branch
      %284 = sbr.rel (%p281) target = $region36
    $region35: #{tf_block.2} parent=5 // pred_region
      %s285 = ssub.s32 %s13, 1
      %s286 = smul.u32 12, %s23
      %p287 = scmp.lt.s32.totalorder %s286, 11
      %s288 = scalar_select %p287, %s286, 11
      %s289 = smul.addr %s288, 4
      %s290 = scalar_lea.vmem %s0, %s289
      %p291 = pneg %p58
      %p292 = pneg %p55
      %s293 = smul.u32 2, %s25
      %p294 = scmp.lt.s32.totalorder %s24, 1
      %s295 = scalar_select %p294, %s24, 1
      %p296 = scmp.lt.s32.totalorder %s293, 1
      %s297 = scalar_select %p296, %s293, 1
      %s298 = smul.addr %s295, 16
      %s299 = sadd.s32 %s297, %s298
      %s300 = smul.addr %s299, 8
      %s301 = scalar_lea.vmem %s1, %s300
      %p302 = pneg %p86
      %p303 = pneg %p83
      %s304 = smul.u32 12, %s23
      %p305 = scmp.lt.s32.totalorder %s304, 11
      %s306 = scalar_select %p305, %s304, 11
      %s307 = smul.addr %s306, 8
      %s308 = scalar_lea.vmem %s2, %s307
      %p309 = pneg %p112
      %p310 = pneg %p109
      %s311 = smul.u32 12, %s23
      %p312 = scmp.lt.s32.totalorder %s311, 11
      %s313 = scalar_select %p312, %s311, 11
      %s314 = smul.addr %s313, 8
      %s315 = scalar_lea.vmem %s3, %s314
      %p316 = pneg %p138
      %p317 = pneg %p135
      %p318 = pneg %p168
      %p319 = pneg %p165
      %s320 = smul.u32 12, %s23
      %s321 = smul.u32 2, %s25
      %p322 = scmp.lt.s32.totalorder %s24, 1
      %s323 = scalar_select %p322, %s24, 1
      %p324 = scmp.lt.s32.totalorder %s320, 11
      %s325 = scalar_select %p324, %s320, 11
      %p326 = scmp.lt.s32.totalorder %s321, 1
      %s327 = scalar_select %p326, %s321, 1
      %s328 = smul.addr %s325, 2
      %s329 = sadd.s32 %s327, %s328
      %s330 = smul.addr %s323, 24
      %s331 = sadd.s32 %s329, %s330
      %s332 = smul.addr %s331, 4
      %s333 = scalar_lea.vmem %s4, %s332
      %p334 = pneg %p194
      %p335 = pneg %p191
      %s336 = smul.u32 12, %s23
      %p337 = scmp.lt.s32.totalorder %s336, 11
      %s338 = scalar_select %p337, %s336, 11
      %s339 = smul.addr %s338, 8
      %s340 = scalar_lea.vmem %s5, %s339
      %p341 = pneg %p220
      %p342 = pneg %p217
      %s343 = smul.u32 12, %s23
      %p344 = scmp.lt.s32.totalorder %s343, 11
      %s345 = scalar_select %p344, %s343, 11
      %s346 = smul.addr %s345, 8
      %s347 = scalar_lea.vmem %s6, %s346
      %s348 = smul.u32 12, %s23
      %p349 = scmp.lt.s32.totalorder %s348, 11
      %s350 = scalar_select %p349, %s348, 11
      %s351 = smul.addr %s350, 4
      %s352 = scalar_lea.vmem %s0, %s351
      %s353 = smul.u32 12, %s23
      %s354 = smul.u32 2, %s25
      %p355 = scmp.lt.s32.totalorder %s24, 1
      %s356 = scalar_select %p355, %s24, 1
      %p357 = scmp.lt.s32.totalorder %s354, 1
      %s358 = scalar_select %p357, %s354, 1
      %s359 = smul.addr %s356, 16
      %s360 = sadd.s32 %s358, %s359
      %s361 = smul.addr %s360, 8
      %s362 = scalar_lea.vmem %s1, %s361
      %s363 = smul.u32 2, %s25
      %s364 = smul.u32 12, %s23
      %p365 = scmp.lt.s32.totalorder %s364, 11
      %s366 = scalar_select %p365, %s364, 11
      %s367 = smul.addr %s366, 8
      %s368 = scalar_lea.vmem %s2, %s367
      %s369 = smul.u32 12, %s23
      %s370 = smul.u32 12, %s23
      %p371 = scmp.lt.s32.totalorder %s370, 11
      %s372 = scalar_select %p371, %s370, 11
      %s373 = smul.addr %s372, 8
      %s374 = scalar_lea.vmem %s3, %s373
      %s375 = smul.u32 12, %s23
      %s376 = smul.u32 12, %s23
      %s377 = smul.u32 2, %s25
      %p378 = scmp.lt.s32.totalorder %s24, 1
      %s379 = scalar_select %p378, %s24, 1
      %p380 = scmp.lt.s32.totalorder %s376, 11
      %s381 = scalar_select %p380, %s376, 11
      %p382 = scmp.lt.s32.totalorder %s377, 1
      %s383 = scalar_select %p382, %s377, 1
      %s384 = smul.addr %s381, 2
      %s385 = sadd.s32 %s383, %s384
      %s386 = smul.addr %s379, 24
      %s387 = sadd.s32 %s385, %s386
      %s388 = smul.addr %s387, 4
      %s389 = scalar_lea.vmem %s4, %s388
      %s390 = smul.u32 12, %s23
      %s391 = smul.u32 2, %s25
      %s392 = smul.u32 12, %s23
      %p393 = scmp.lt.s32.totalorder %s392, 11
      %s394 = scalar_select %p393, %s392, 11
      %s395 = smul.addr %s394, 8
      %s396 = scalar_lea.vmem %s5, %s395
      %s397 = smul.u32 12, %s23
      %s398 = smul.u32 12, %s23
      %p399 = scmp.lt.s32.totalorder %s398, 11
      %s400 = scalar_select %p399, %s398, 11
      %s401 = smul.addr %s400, 8
      %s402 = scalar_lea.vmem %s6, %s401
      %s403 = smul.u32 12, %s23
      %p405 = scmp.eq.s32.totalorder %s24, 0
      %p406 = scmp.eq.s32.totalorder %s25, 0
      %p407 = pnand %p405, %p406
      %p408 = pneg %p407
      // Predicated region
      $region37: #{tf_block.2} parent=35 // pred_check
        _
      $region38: #{tf_block.2} parent=35 // pred_check_branch
        %410 = sbr.rel (%p407) target = $region40
      $region39: #{tf_block.2} parent=35 // pred_region
        %411 = vst [vmem:[#allocation2] sm:$0xff] 0.0
        %412 = vst [vmem:[#allocation2 + $0x8] sm:$0xff] 0.0
        %413 = vst [vmem:[#allocation2 + $0x10] sm:$0xff] 0.0
        %414 = vst [vmem:[#allocation2 + $0x18] sm:$0xff] 0.0
        %415 = vst [vmem:[#allocation2 + $0x20] sm:$0xff] 0.0
        %416 = vst [vmem:[#allocation2 + $0x28] sm:$0xff] 0.0
        %417 = vst [vmem:[#allocation2 + $0x30] sm:$0xff] 0.0
        %418 = vst [vmem:[#allocation2 + $0x38] sm:$0xff] 0.0
        %419 = vst [vmem:[#allocation2 + $0x40] sm:$0xff] 0.0
        %420 = vst [vmem:[#allocation2 + $0x48] sm:$0xff] 0.0
        %421 = vst [vmem:[#allocation2 + $0x50] sm:$0xff] 0.0
        %422 = vst [vmem:[#allocation2 + $0x58] sm:$0xff] 0.0
        %423 = vst [vmem:[#allocation3] sm:$0xff] 0.0
        %424 = vst [vmem:[#allocation3 + $0x8] sm:$0xff] 0.0
        %425 = vst [vmem:[#allocation3 + $0x10] sm:$0xff] 0.0
        %426 = vst [vmem:[#allocation3 + $0x18] sm:$0xff] 0.0
        %427 = vst [vmem:[#allocation3 + $0x20] sm:$0xff] 0.0
        %428 = vst [vmem:[#allocation3 + $0x28] sm:$0xff] 0.0
        %429 = vst [vmem:[#allocation3 + $0x30] sm:$0xff] 0.0
        %430 = vst [vmem:[#allocation3 + $0x38] sm:$0xff] 0.0
        %431 = vst [vmem:[#allocation3 + $0x40] sm:$0xff] 0.0
        %432 = vst [vmem:[#allocation3 + $0x48] sm:$0xff] 0.0
        %433 = vst [vmem:[#allocation3 + $0x50] sm:$0xff] 0.0
        %434 = vst [vmem:[#allocation3 + $0x58] sm:$0xff] 0.0
      $region40: #{tf_block.2} parent=35 // pred_fallthru
        _
      %v435 = vld [vmem:[%s352] sm:$0xf]
      %v436 = vld [vmem:[%s352 + $0x4] sm:$0xf]
      %v437 = vld [vmem:[%s352 + $0x8] sm:$0xf]
      %v438 = vld [vmem:[%s352 + $0xc] sm:$0xf]
      %v439 = vld [vmem:[%s352 + $0x10] sm:$0xf]
      %v440 = vld [vmem:[%s352 + $0x14] sm:$0xf]
      %v441 = vld [vmem:[%s352 + $0x18] sm:$0xf]
      %v442 = vld [vmem:[%s352 + $0x1c] sm:$0xf]
      %v443 = vld [vmem:[%s352 + $0x20] sm:$0xf]
      %v444 = vld [vmem:[%s352 + $0x24] sm:$0xf]
      %v445 = vld [vmem:[%s352 + $0x28] sm:$0xf]
      %v446 = vld [vmem:[%s352 + $0x2c] sm:$0xf]
      %v447 = vld [vmem:[%s362] sm:$0xff]
      %v448 = vld [vmem:[%s362 + $0x8] sm:$0xff]
      %v449 = vld [vmem:[%s362 + $0x10] sm:$0xff]
      %v450 = vld [vmem:[%s362 + $0x18] sm:$0xff]
      %v451 = vld [vmem:[%s362 + $0x20] sm:$0xff]
      %v452 = vld [vmem:[%s362 + $0x28] sm:$0xff]
      %v453 = vld [vmem:[%s362 + $0x30] sm:$0xff]
      %v454 = vld [vmem:[%s362 + $0x38] sm:$0xff]
      %v455 = vld [vmem:[%s362 + $0x40] sm:$0xff]
      %v456 = vld [vmem:[%s362 + $0x48] sm:$0xff]
      %v457 = vld [vmem:[%s362 + $0x50] sm:$0xff]
      %v458 = vld [vmem:[%s362 + $0x58] sm:$0xff]
      %v459 = vld [vmem:[%s362 + $0x60] sm:$0xff]
      %v460 = vld [vmem:[%s362 + $0x68] sm:$0xff]
      %v461 = vld [vmem:[%s362 + $0x70] sm:$0xff]
      %v462 = vld [vmem:[%s362 + $0x78] sm:$0xff]
      %v463 = vpack.c.bf16 %v449, %v447
      %v464 = vpack.c.bf16 %v450, %v448
      %v465 = vpack.c.bf16 %v453, %v451
      %v466 = vpack.c.bf16 %v454, %v452
      %v467 = vpack.c.bf16 %v457, %v455
      %v468 = vpack.c.bf16 %v458, %v456
      %v469 = vpack.c.bf16 %v461, %v459
      %v470 = vpack.c.bf16 %v462, %v460
      %v483 = vunpack.c.l.b16 %v435
      %v484 = vunpack.c.l.b16 %v436
      %v485 = vunpack.c.l.b16 %v437
      %v486 = vunpack.c.l.b16 %v438
      %v487 = vunpack.c.l.b16 %v439
      %v488 = vunpack.c.l.b16 %v440
      %v489 = vunpack.c.l.b16 %v441
      %v490 = vunpack.c.l.b16 %v442
      %v491 = vunpack.c.l.b16 %v443
      %v492 = vunpack.c.l.b16 %v444
      %v493 = vunpack.c.l.b16 %v445
      %v494 = vunpack.c.l.b16 %v446
      %v495 = vpack.c.b16 %v484, %v483
      %v496 = vpack.c.b16 %v486, %v485
      %v497 = vpack.c.b16 %v488, %v487
      %v498 = vpack.c.b16 %v490, %v489
      %v499 = vpack.c.b16 %v492, %v491
      %v500 = vpack.c.b16 %v494, %v493
      %vm501 = vcmask 523264
      %v503 = vsel %vm501, %v495, 0
      %v506 = vsel %vm501, %v496, 0
      %v509 = vsel %vm501, %v497, 0
      %v512 = vsel %vm501, %v498, 0
      %v515 = vsel %vm501, %v499, 0
      %v518 = vsel %vm501, %v500, 0
      %520 = vmatprep.subr.bf16.mxu0 0
      %521 = vmatpush1.bf16.msra.mxu0 0
      %522 = vmatprep.subr.bf16.mxu0 0
      %523 = vmatpush1.bf16.msra.mxu0 0
      %524 = vmatprep.subr.bf16.mxu0 0
      %525 = vmatpush1.bf16.msra.mxu0 0
      %526 = vmatprep.subr.bf16.mxu0 0
      %527 = vmatpush1.bf16.msra.mxu0 0
      %528 = vmatprep.subr.bf16.mxu0 %v470
      %529 = vmatpush1.bf16.msra.mxu0 %v469
      %530 = vmatprep.subr.bf16.mxu0 %v468
      %531 = vmatpush1.bf16.msra.mxu0 %v467
      %532 = vmatprep.subr.bf16.mxu0 %v466
      %533 = vmatpush1.bf16.msra.mxu0 %v465
      %534 = vmatprep.subr.bf16.mxu0 %v464
      %535 = vmatpush1.bf16.msra.mxu0 %v463
      %536 = vmatprep.subr.bf16.mxu0 0
      %537 = vmatpush2.bf16.msra.mxu0 0
      %538 = vmatprep.subr.bf16.mxu0 0
      %539 = vmatpush2.bf16.msra.mxu0 0
      %540 = vmatprep.subr.bf16.mxu0 0
      %541 = vmatpush2.bf16.msra.mxu0 0
      %542 = vmatprep.subr.bf16.mxu0 0
      %543 = vmatpush2.bf16.msra.mxu0 0
      %544 = vmatprep.subr.bf16.mxu0 0
      %545 = vmatpush2.bf16.msra.mxu0 0
      %546 = vmatprep.subr.bf16.mxu0 0
      %547 = vmatpush2.bf16.msra.mxu0 0
      %548 = vmatprep.subr.bf16.mxu0 0
      %549 = vmatpush2.bf16.msra.mxu0 0
      %550 = vmatprep.subr.bf16.mxu0 0
      %551 = vmatpush2.bf16.msra.mxu0 0
      %552 = vmatprep.mubr.bf16.mxu0 0
      %553 = vmatmul.mubr.bf16.gmra.mxu0 %v503
      %v554 = vpop.f32.mrf.mxu0
      %v555 = vadd.f32 0.0, %v554
      %v556 = vpop.f32.mrf.mxu0
      %v557 = vadd.f32 0.0, %v556
      %v558 = vpop.f32.mrf.mxu0
      %v559 = vadd.f32 0.0, %v558
      %v560 = vpop.f32.mrf.mxu0
      %v561 = vadd.f32 0.0, %v560
      %562 = vmatprep.mubr.bf16.mxu0 0
      %563 = vmatmul.mubr.bf16.gmra.mxu0 %v506
      %v564 = vpop.f32.mrf.mxu0
      %v565 = vadd.f32 0.0, %v564
      %v566 = vpop.f32.mrf.mxu0
      %v567 = vadd.f32 0.0, %v566
      %v568 = vpop.f32.mrf.mxu0
      %v569 = vadd.f32 0.0, %v568
      %v570 = vpop.f32.mrf.mxu0
      %v571 = vadd.f32 0.0, %v570
      %572 = vmatprep.mubr.bf16.mxu0 0
      %573 = vmatmul.mubr.bf16.gmra.mxu0 %v509
      %v574 = vpop.f32.mrf.mxu0
      %v575 = vadd.f32 0.0, %v574
      %v576 = vpop.f32.mrf.mxu0
      %v577 = vadd.f32 0.0, %v576
      %v578 = vpop.f32.mrf.mxu0
      %v579 = vadd.f32 0.0, %v578
      %v580 = vpop.f32.mrf.mxu0
      %v581 = vadd.f32 0.0, %v580
      %582 = vmatprep.mubr.bf16.mxu0 0
      %583 = vmatmul.mubr.bf16.gmra.mxu0 %v512
      %v584 = vpop.f32.mrf.mxu0
      %v585 = vadd.f32 0.0, %v584
      %v586 = vpop.f32.mrf.mxu0
      %v587 = vadd.f32 0.0, %v586
      %v588 = vpop.f32.mrf.mxu0
      %v589 = vadd.f32 0.0, %v588
      %v590 = vpop.f32.mrf.mxu0
      %v591 = vadd.f32 0.0, %v590
      %592 = vmatprep.mubr.bf16.mxu0 0
      %593 = vmatmul.mubr.bf16.gmra.mxu0 %v515
      %v594 = vpop.f32.mrf.mxu0
      %v595 = vadd.f32 0.0, %v594
      %v596 = vpop.f32.mrf.mxu0
      %v597 = vadd.f32 0.0, %v596
      %v598 = vpop.f32.mrf.mxu0
      %v599 = vadd.f32 0.0, %v598
      %v600 = vpop.f32.mrf.mxu0
      %v601 = vadd.f32 0.0, %v600
      %602 = vmatprep.mubr.bf16.mxu0 0
      %603 = vmatmul.mubr.bf16.gmra.mxu0 %v518
      %v604 = vpop.f32.mrf.mxu0
      %v605 = vadd.f32 0.0, %v604
      %v606 = vpop.f32.mrf.mxu0
      %v607 = vadd.f32 0.0, %v606
      %v608 = vpop.f32.mrf.mxu0
      %v609 = vadd.f32 0.0, %v608
      %v610 = vpop.f32.mrf.mxu0
      %v611 = vadd.f32 0.0, %v610
      %612 = vdwg.mxu0
      %v613 = vpack.c.bf16 %v559, %v555
      %v614 = vpack.c.bf16 %v561, %v557
      %v615 = vpack.c.bf16 %v569, %v565
      %v616 = vpack.c.bf16 %v571, %v567
      %v617 = vpack.c.bf16 %v579, %v575
      %v618 = vpack.c.bf16 %v581, %v577
      %v619 = vpack.c.bf16 %v589, %v585
      %v620 = vpack.c.bf16 %v591, %v587
      %v621 = vpack.c.bf16 %v599, %v595
      %v622 = vpack.c.bf16 %v601, %v597
      %v623 = vpack.c.bf16 %v609, %v605
      %v624 = vpack.c.bf16 %v611, %v607
      %v637 = vunpack.c.l.b16 %v613
      %v638 = vunpack.c.l.b16 %v614
      %v639 = vunpack.c.h.b16 %v613
      %v640 = vunpack.c.h.b16 %v614
      %v641 = vunpack.c.l.b16 %v615
      %v642 = vunpack.c.l.b16 %v616
      %v643 = vunpack.c.h.b16 %v615
      %v644 = vunpack.c.h.b16 %v616
      %v645 = vunpack.c.l.b16 %v617
      %v646 = vunpack.c.l.b16 %v618
      %v647 = vunpack.c.h.b16 %v617
      %v648 = vunpack.c.h.b16 %v618
      %v649 = vunpack.c.l.b16 %v619
      %v650 = vunpack.c.l.b16 %v620
      %v651 = vunpack.c.h.b16 %v619
      %v652 = vunpack.c.h.b16 %v620
      %v653 = vunpack.c.l.b16 %v621
      %v654 = vunpack.c.l.b16 %v622
      %v655 = vunpack.c.h.b16 %v621
      %v656 = vunpack.c.h.b16 %v622
      %v657 = vunpack.c.l.b16 %v623
      %v658 = vunpack.c.l.b16 %v624
      %v659 = vunpack.c.h.b16 %v623
      %v660 = vunpack.c.h.b16 %v624
      %v661 = vpack.c.b16 %v638, %v637
      %v662 = vpack.c.b16 %v640, %v639
      %v663 = vpack.c.b16 %v642, %v641
      %v664 = vpack.c.b16 %v644, %v643
      %v665 = vpack.c.b16 %v646, %v645
      %v666 = vpack.c.b16 %v648, %v647
      %v667 = vpack.c.b16 %v650, %v649
      %v668 = vpack.c.b16 %v652, %v651
      %v669 = vpack.c.b16 %v654, %v653
      %v670 = vpack.c.b16 %v656, %v655
      %v671 = vpack.c.b16 %v658, %v657
      %v672 = vpack.c.b16 %v660, %v659
      %685 = vst [vmem:[%s389] sm:$0xff] %v661
      %686 = vst [vmem:[%s389 + $0x8] sm:$0xff] %v662
      %687 = vst [vmem:[%s389 + $0x10] sm:$0xff] %v663
      %688 = vst [vmem:[%s389 + $0x18] sm:$0xff] %v664
      %689 = vst [vmem:[%s389 + $0x20] sm:$0xff] %v665
      %690 = vst [vmem:[%s389 + $0x28] sm:$0xff] %v666
      %691 = vst [vmem:[%s389 + $0x30] sm:$0xff] %v667
      %692 = vst [vmem:[%s389 + $0x38] sm:$0xff] %v668
      %693 = vst [vmem:[%s389 + $0x40] sm:$0xff] %v669
      %694 = vst [vmem:[%s389 + $0x48] sm:$0xff] %v670
      %695 = vst [vmem:[%s389 + $0x50] sm:$0xff] %v671
      %696 = vst [vmem:[%s389 + $0x58] sm:$0xff] %v672
      %v697 = vmul.f32 %v555, %v555
      %v698 = vmul.f32 %v559, %v559
      %v699 = vmul.f32 %v565, %v565
      %v700 = vmul.f32 %v569, %v569
      %v701 = vmul.f32 %v575, %v575
      %v702 = vmul.f32 %v579, %v579
      %v703 = vmul.f32 %v585, %v585
      %v704 = vmul.f32 %v589, %v589
      %v705 = vmul.f32 %v595, %v595
      %v706 = vmul.f32 %v599, %v599
      %v707 = vmul.f32 %v605, %v605
      %v708 = vmul.f32 %v609, %v609
      %v709 = vadd.f32 %v555, %v557
      %v710 = vadd.f32 %v559, %v561
      %v711 = vadd.f32 %v565, %v567
      %v712 = vadd.f32 %v569, %v571
      %v713 = vadd.f32 %v575, %v577
      %v714 = vadd.f32 %v579, %v581
      %v715 = vadd.f32 %v585, %v587
      %v716 = vadd.f32 %v589, %v591
      %v717 = vadd.f32 %v595, %v597
      %v718 = vadd.f32 %v599, %v601
      %v719 = vadd.f32 %v605, %v607
      %v720 = vadd.f32 %v609, %v611
      %v721 = vmul.f32 %v557, %v557
      %v722 = vmul.f32 %v561, %v561
      %v723 = vmul.f32 %v567, %v567
      %v724 = vmul.f32 %v571, %v571
      %v725 = vmul.f32 %v577, %v577
      %v726 = vmul.f32 %v581, %v581
      %v727 = vmul.f32 %v587, %v587
      %v728 = vmul.f32 %v591, %v591
      %v729 = vmul.f32 %v597, %v597
      %v730 = vmul.f32 %v601, %v601
      %v731 = vmul.f32 %v607, %v607
      %v732 = vmul.f32 %v611, %v611
      %v733 = vadd.f32 %v697, %v721
      %v734 = vadd.f32 %v698, %v722
      %v735 = vadd.f32 %v699, %v723
      %v736 = vadd.f32 %v700, %v724
      %v737 = vadd.f32 %v701, %v725
      %v738 = vadd.f32 %v702, %v726
      %v739 = vadd.f32 %v703, %v727
      %v740 = vadd.f32 %v704, %v728
      %v741 = vadd.f32 %v705, %v729
      %v742 = vadd.f32 %v706, %v730
      %v743 = vadd.f32 %v707, %v731
      %v744 = vadd.f32 %v708, %v732
      %v745 = vld [vmem:[#allocation2] sm:$0xff]
      %v746 = vld [vmem:[#allocation2 + $0x8] sm:$0xff]
      %v747 = vld [vmem:[#allocation2 + $0x10] sm:$0xff]
      %v748 = vld [vmem:[#allocation2 + $0x18] sm:$0xff]
      %v749 = vld [vmem:[#allocation2 + $0x20] sm:$0xff]
      %v750 = vld [vmem:[#allocation2 + $0x28] sm:$0xff]
      %v751 = vld [vmem:[#allocation2 + $0x30] sm:$0xff]
      %v752 = vld [vmem:[#allocation2 + $0x38] sm:$0xff]
      %v753 = vld [vmem:[#allocation2 + $0x40] sm:$0xff]
      %v754 = vld [vmem:[#allocation2 + $0x48] sm:$0xff]
      %v755 = vld [vmem:[#allocation2 + $0x50] sm:$0xff]
      %v756 = vld [vmem:[#allocation2 + $0x58] sm:$0xff]
      %v757 = vadd.f32 %v745, %v709
      %v758 = vadd.f32 %v746, %v710
      %v759 = vadd.f32 %v747, %v711
      %v760 = vadd.f32 %v748, %v712
      %v761 = vadd.f32 %v749, %v713
      %v762 = vadd.f32 %v750, %v714
      %v763 = vadd.f32 %v751, %v715
      %v764 = vadd.f32 %v752, %v716
      %v765 = vadd.f32 %v753, %v717
      %v766 = vadd.f32 %v754, %v718
      %v767 = vadd.f32 %v755, %v719
      %v768 = vadd.f32 %v756, %v720
      %769 = vst [vmem:[#allocation2] sm:$0xff] %v757
      %770 = vst [vmem:[#allocation2 + $0x8] sm:$0xff] %v758
      %771 = vst [vmem:[#allocation2 + $0x10] sm:$0xff] %v759
      %772 = vst [vmem:[#allocation2 + $0x18] sm:$0xff] %v760
      %773 = vst [vmem:[#allocation2 + $0x20] sm:$0xff] %v761
      %774 = vst [vmem:[#allocation2 + $0x28] sm:$0xff] %v762
      %775 = vst [vmem:[#allocation2 + $0x30] sm:$0xff] %v763
      %776 = vst [vmem:[#allocation2 + $0x38] sm:$0xff] %v764
      %777 = vst [vmem:[#allocation2 + $0x40] sm:$0xff] %v765
      %778 = vst [vmem:[#allocation2 + $0x48] sm:$0xff] %v766
      %779 = vst [vmem:[#allocation2 + $0x50] sm:$0xff] %v767
      %780 = vst [vmem:[#allocation2 + $0x58] sm:$0xff] %v768
      %v781 = vld [vmem:[#allocation3] sm:$0xff]
      %v782 = vld [vmem:[#allocation3 + $0x8] sm:$0xff]
      %v783 = vld [vmem:[#allocation3 + $0x10] sm:$0xff]
      %v784 = vld [vmem:[#allocation3 + $0x18] sm:$0xff]
      %v785 = vld [vmem:[#allocation3 + $0x20] sm:$0xff]
      %v786 = vld [vmem:[#allocation3 + $0x28] sm:$0xff]
      %v787 = vld [vmem:[#allocation3 + $0x30] sm:$0xff]
      %v788 = vld [vmem:[#allocation3 + $0x38] sm:$0xff]
      %v789 = vld [vmem:[#allocation3 + $0x40] sm:$0xff]
      %v790 = vld [vmem:[#allocation3 + $0x48] sm:$0xff]
      %v791 = vld [vmem:[#allocation3 + $0x50] sm:$0xff]
      %v792 = vld [vmem:[#allocation3 + $0x58] sm:$0xff]
      %v793 = vadd.f32 %v781, %v733
      %v794 = vadd.f32 %v782, %v734
      %v795 = vadd.f32 %v783, %v735
      %v796 = vadd.f32 %v784, %v736
      %v797 = vadd.f32 %v785, %v737
      %v798 = vadd.f32 %v786, %v738
      %v799 = vadd.f32 %v787, %v739
      %v800 = vadd.f32 %v788, %v740
      %v801 = vadd.f32 %v789, %v741
      %v802 = vadd.f32 %v790, %v742
      %v803 = vadd.f32 %v791, %v743
      %v804 = vadd.f32 %v792, %v744
      %805 = vst [vmem:[#allocation3] sm:$0xff] %v793
      %806 = vst [vmem:[#allocation3 + $0x8] sm:$0xff] %v794
      %807 = vst [vmem:[#allocation3 + $0x10] sm:$0xff] %v795
      %808 = vst [vmem:[#allocation3 + $0x18] sm:$0xff] %v796
      %809 = vst [vmem:[#allocation3 + $0x20] sm:$0xff] %v797
      %810 = vst [vmem:[#allocation3 + $0x28] sm:$0xff] %v798
      %811 = vst [vmem:[#allocation3 + $0x30] sm:$0xff] %v799
      %812 = vst [vmem:[#allocation3 + $0x38] sm:$0xff] %v800
      %813 = vst [vmem:[#allocation3 + $0x40] sm:$0xff] %v801
      %814 = vst [vmem:[#allocation3 + $0x48] sm:$0xff] %v802
      %815 = vst [vmem:[#allocation3 + $0x50] sm:$0xff] %v803
      %816 = vst [vmem:[#allocation3 + $0x58] sm:$0xff] %v804
      %p817 = scmp.eq.s32.totalorder %s24, 1
      %p818 = pnand %p817, %p406
      %p819 = pneg %p818
      // Predicated region
      $region41: #{tf_block.2} parent=35 // pred_check
        _
      $region42: #{tf_block.2} parent=35 // pred_check_branch
        %821 = sbr.rel (%p818) target = $region44
      $region43: #{tf_block.2} parent=35 // pred_region
        %v822 = vld [vmem:[#allocation2] sm:$0xff]
        %v823 = vld [vmem:[#allocation2 + $0x8] sm:$0xff]
        %v824 = vld [vmem:[#allocation2 + $0x10] sm:$0xff]
        %v825 = vld [vmem:[#allocation2 + $0x18] sm:$0xff]
        %v826 = vld [vmem:[#allocation2 + $0x20] sm:$0xff]
        %v827 = vld [vmem:[#allocation2 + $0x28] sm:$0xff]
        %v828 = vld [vmem:[#allocation2 + $0x30] sm:$0xff]
        %v829 = vld [vmem:[#allocation2 + $0x38] sm:$0xff]
        %v830 = vld [vmem:[#allocation2 + $0x40] sm:$0xff]
        %v831 = vld [vmem:[#allocation2 + $0x48] sm:$0xff]
        %v832 = vld [vmem:[#allocation2 + $0x50] sm:$0xff]
        %v833 = vld [vmem:[#allocation2 + $0x58] sm:$0xff]
        %834 = vadd.xlane.f32.xlu0 %v822
        %v835 = vpop.xlane.xlu0 %834
        %836 = vadd.xlane.f32.xlu0 %v823
        %v837 = vpop.xlane.xlu0 %836
        %838 = vadd.xlane.f32.xlu0 %v824
        %v839 = vpop.xlane.xlu0 %838
        %840 = vadd.xlane.f32.xlu0 %v825
        %v841 = vpop.xlane.xlu0 %840
        %842 = vadd.xlane.f32.xlu0 %v826
        %v843 = vpop.xlane.xlu0 %842
        %844 = vadd.xlane.f32.xlu0 %v827
        %v845 = vpop.xlane.xlu0 %844
        %846 = vadd.xlane.f32.xlu0 %v828
        %v847 = vpop.xlane.xlu0 %846
        %848 = vadd.xlane.f32.xlu0 %v829
        %v849 = vpop.xlane.xlu0 %848
        %850 = vadd.xlane.f32.xlu0 %v830
        %v851 = vpop.xlane.xlu0 %850
        %852 = vadd.xlane.f32.xlu0 %v831
        %v853 = vpop.xlane.xlu0 %852
        %854 = vadd.xlane.f32.xlu0 %v832
        %v855 = vpop.xlane.xlu0 %854
        %856 = vadd.xlane.f32.xlu0 %v833
        %v857 = vpop.xlane.xlu0 %856
        %v858 = vmul.f32 %v835, 0.001953125
        %v859 = vmul.f32 %v837, 0.001953125
        %v860 = vmul.f32 %v839, 0.001953125
        %v861 = vmul.f32 %v841, 0.001953125
        %v862 = vmul.f32 %v843, 0.001953125
        %v863 = vmul.f32 %v845, 0.001953125
        %v864 = vmul.f32 %v847, 0.001953125
        %v865 = vmul.f32 %v849, 0.001953125
        %v866 = vmul.f32 %v851, 0.001953125
        %v867 = vmul.f32 %v853, 0.001953125
        %v868 = vmul.f32 %v855, 0.001953125
        %v869 = vmul.f32 %v857, 0.001953125
        %v870 = vld [vmem:[#allocation3] sm:$0xff]
        %v871 = vld [vmem:[#allocation3 + $0x8] sm:$0xff]
        %v872 = vld [vmem:[#allocation3 + $0x10] sm:$0xff]
        %v873 = vld [vmem:[#allocation3 + $0x18] sm:$0xff]
        %v874 = vld [vmem:[#allocation3 + $0x20] sm:$0xff]
        %v875 = vld [vmem:[#allocation3 + $0x28] sm:$0xff]
        %v876 = vld [vmem:[#allocation3 + $0x30] sm:$0xff]
        %v877 = vld [vmem:[#allocation3 + $0x38] sm:$0xff]
        %v878 = vld [vmem:[#allocation3 + $0x40] sm:$0xff]
        %v879 = vld [vmem:[#allocation3 + $0x48] sm:$0xff]
        %v880 = vld [vmem:[#allocation3 + $0x50] sm:$0xff]
        %v881 = vld [vmem:[#allocation3 + $0x58] sm:$0xff]
        %882 = vadd.xlane.f32.xlu0 %v870
        %v883 = vpop.xlane.xlu0 %882
        %884 = vadd.xlane.f32.xlu0 %v871
        %v885 = vpop.xlane.xlu0 %884
        %886 = vadd.xlane.f32.xlu0 %v872
        %v887 = vpop.xlane.xlu0 %886
        %888 = vadd.xlane.f32.xlu0 %v873
        %v889 = vpop.xlane.xlu0 %888
        %890 = vadd.xlane.f32.xlu0 %v874
        %v891 = vpop.xlane.xlu0 %890
        %892 = vadd.xlane.f32.xlu0 %v875
        %v893 = vpop.xlane.xlu0 %892
        %894 = vadd.xlane.f32.xlu0 %v876
        %v895 = vpop.xlane.xlu0 %894
        %896 = vadd.xlane.f32.xlu0 %v877
        %v897 = vpop.xlane.xlu0 %896
        %898 = vadd.xlane.f32.xlu0 %v878
        %v899 = vpop.xlane.xlu0 %898
        %900 = vadd.xlane.f32.xlu0 %v879
        %v901 = vpop.xlane.xlu0 %900
        %902 = vadd.xlane.f32.xlu0 %v880
        %v903 = vpop.xlane.xlu0 %902
        %904 = vadd.xlane.f32.xlu0 %v881
        %v905 = vpop.xlane.xlu0 %904
        %v906 = vmul.f32 %v883, 0.001953125
        %v907 = vmul.f32 %v885, 0.001953125
        %v908 = vmul.f32 %v887, 0.001953125
        %v909 = vmul.f32 %v889, 0.001953125
        %v910 = vmul.f32 %v891, 0.001953125
        %v911 = vmul.f32 %v893, 0.001953125
        %v912 = vmul.f32 %v895, 0.001953125
        %v913 = vmul.f32 %v897, 0.001953125
        %v914 = vmul.f32 %v899, 0.001953125
        %v915 = vmul.f32 %v901, 0.001953125
        %v916 = vmul.f32 %v903, 0.001953125
        %v917 = vmul.f32 %v905, 0.001953125
        %v918 = vmul.f32 %v858, %v858
        %v919 = vmul.f32 %v859, %v859
        %v920 = vmul.f32 %v860, %v860
        %v921 = vmul.f32 %v861, %v861
        %v922 = vmul.f32 %v862, %v862
        %v923 = vmul.f32 %v863, %v863
        %v924 = vmul.f32 %v864, %v864
        %v925 = vmul.f32 %v865, %v865
        %v926 = vmul.f32 %v866, %v866
        %v927 = vmul.f32 %v867, %v867
        %v928 = vmul.f32 %v868, %v868
        %v929 = vmul.f32 %v869, %v869
        %v930 = vsub.f32 %v906, %v918
        %v931 = vsub.f32 %v907, %v919
        %v932 = vsub.f32 %v908, %v920
        %v933 = vsub.f32 %v909, %v921
        %v934 = vsub.f32 %v910, %v922
        %v935 = vsub.f32 %v911, %v923
        %v936 = vsub.f32 %v912, %v924
        %v937 = vsub.f32 %v913, %v925
        %v938 = vsub.f32 %v914, %v926
        %v939 = vsub.f32 %v915, %v927
        %v940 = vsub.f32 %v916, %v928
        %v941 = vsub.f32 %v917, %v929
        %v942 = vmax.f32 %v930, 0.0
        %v943 = vmax.f32 %v931, 0.0
        %v944 = vmax.f32 %v932, 0.0
        %v945 = vmax.f32 %v933, 0.0
        %v946 = vmax.f32 %v934, 0.0
        %v947 = vmax.f32 %v935, 0.0
        %v948 = vmax.f32 %v936, 0.0
        %v949 = vmax.f32 %v937, 0.0
        %v950 = vmax.f32 %v938, 0.0
        %v951 = vmax.f32 %v939, 0.0
        %v952 = vmax.f32 %v940, 0.0
        %v953 = vmax.f32 %v941, 0.0
        %v954 = vld [vmem:[%s368] sm:$0xff]
        %v955 = vld [vmem:[%s368 + $0x8] sm:$0xff]
        %v956 = vld [vmem:[%s368 + $0x10] sm:$0xff]
        %v957 = vld [vmem:[%s368 + $0x18] sm:$0xff]
        %v958 = vld [vmem:[%s368 + $0x20] sm:$0xff]
        %v959 = vld [vmem:[%s368 + $0x28] sm:$0xff]
        %v960 = vld [vmem:[%s368 + $0x30] sm:$0xff]
        %v961 = vld [vmem:[%s368 + $0x38] sm:$0xff]
        %v962 = vld [vmem:[%s368 + $0x40] sm:$0xff]
        %v963 = vld [vmem:[%s368 + $0x48] sm:$0xff]
        %v964 = vld [vmem:[%s368 + $0x50] sm:$0xff]
        %v965 = vld [vmem:[%s368 + $0x58] sm:$0xff]
        %v966 = vadd.f32 %v942, 1e-05
        %v967 = vadd.f32 %v943, 1e-05
        %v968 = vadd.f32 %v944, 1e-05
        %v969 = vadd.f32 %v945, 1e-05
        %v970 = vadd.f32 %v946, 1e-05
        %v971 = vadd.f32 %v947, 1e-05
        %v972 = vadd.f32 %v948, 1e-05
        %v973 = vadd.f32 %v949, 1e-05
        %v974 = vadd.f32 %v950, 1e-05
        %v975 = vadd.f32 %v951, 1e-05
        %v976 = vadd.f32 %v952, 1e-05
        %v977 = vadd.f32 %v953, 1e-05
        %v978 = vrsqrt.pop %v966
        %v979 = vrsqrt.pop %v967
        %v980 = vrsqrt.pop %v968
        %v981 = vrsqrt.pop %v969
        %v982 = vrsqrt.pop %v970
        %v983 = vrsqrt.pop %v971
        %v984 = vrsqrt.pop %v972
        %v985 = vrsqrt.pop %v973
        %v986 = vrsqrt.pop %v974
        %v987 = vrsqrt.pop %v975
        %v988 = vrsqrt.pop %v976
        %v989 = vrsqrt.pop %v977
        %v990 = vmul.f32 %v954, %v978
        %v991 = vmul.f32 %v955, %v979
        %v992 = vmul.f32 %v956, %v980
        %v993 = vmul.f32 %v957, %v981
        %v994 = vmul.f32 %v958, %v982
        %v995 = vmul.f32 %v959, %v983
        %v996 = vmul.f32 %v960, %v984
        %v997 = vmul.f32 %v961, %v985
        %v998 = vmul.f32 %v962, %v986
        %v999 = vmul.f32 %v963, %v987
        %v1000 = vmul.f32 %v964, %v988
        %v1001 = vmul.f32 %v965, %v989
        %1003 = vset.pattern.permute.xlu0 0
        %1004 = vperm.xlu0 %1003, %v990
        %v1005 = vpop.permute.xlu0 %1004
        %1008 = vset.pattern.permute.xlu0 0
        %1009 = vperm.xlu0 %1008, %v991
        %v1010 = vpop.permute.xlu0 %1009
        %1013 = vset.pattern.permute.xlu0 0
        %1014 = vperm.xlu0 %1013, %v992
        %v1015 = vpop.permute.xlu0 %1014
        %1018 = vset.pattern.permute.xlu0 0
        %1019 = vperm.xlu0 %1018, %v993
        %v1020 = vpop.permute.xlu0 %1019
        %1023 = vset.pattern.permute.xlu0 0
        %1024 = vperm.xlu0 %1023, %v994
        %v1025 = vpop.permute.xlu0 %1024
        %1028 = vset.pattern.permute.xlu0 0
        %1029 = vperm.xlu0 %1028, %v995
        %v1030 = vpop.permute.xlu0 %1029
        %1033 = vset.pattern.permute.xlu0 0
        %1034 = vperm.xlu0 %1033, %v996
        %v1035 = vpop.permute.xlu0 %1034
        %1038 = vset.pattern.permute.xlu0 0
        %1039 = vperm.xlu0 %1038, %v997
        %v1040 = vpop.permute.xlu0 %1039
        %1043 = vset.pattern.permute.xlu0 0
        %1044 = vperm.xlu0 %1043, %v998
        %v1045 = vpop.permute.xlu0 %1044
        %1048 = vset.pattern.permute.xlu0 0
        %1049 = vperm.xlu0 %1048, %v999
        %v1050 = vpop.permute.xlu0 %1049
        %1053 = vset.pattern.permute.xlu0 0
        %1054 = vperm.xlu0 %1053, %v1000
        %v1055 = vpop.permute.xlu0 %1054
        %1058 = vset.pattern.permute.xlu0 0
        %1059 = vperm.xlu0 %1058, %v1001
        %v1060 = vpop.permute.xlu0 %1059
        %1062 = vst [vmem:[%s396] sm:$0xff] %v1005
        %1063 = vst [vmem:[%s396 + $0x8] sm:$0xff] %v1010
        %1064 = vst [vmem:[%s396 + $0x10] sm:$0xff] %v1015
        %1065 = vst [vmem:[%s396 + $0x18] sm:$0xff] %v1020
        %1066 = vst [vmem:[%s396 + $0x20] sm:$0xff] %v1025
        %1067 = vst [vmem:[%s396 + $0x28] sm:$0xff] %v1030
        %1068 = vst [vmem:[%s396 + $0x30] sm:$0xff] %v1035
        %1069 = vst [vmem:[%s396 + $0x38] sm:$0xff] %v1040
        %1070 = vst [vmem:[%s396 + $0x40] sm:$0xff] %v1045
        %1071 = vst [vmem:[%s396 + $0x48] sm:$0xff] %v1050
        %1072 = vst [vmem:[%s396 + $0x50] sm:$0xff] %v1055
        %1073 = vst [vmem:[%s396 + $0x58] sm:$0xff] %v1060
        %v1074 = vld [vmem:[%s374] sm:$0xff]
        %v1075 = vld [vmem:[%s374 + $0x8] sm:$0xff]
        %v1076 = vld [vmem:[%s374 + $0x10] sm:$0xff]
        %v1077 = vld [vmem:[%s374 + $0x18] sm:$0xff]
        %v1078 = vld [vmem:[%s374 + $0x20] sm:$0xff]
        %v1079 = vld [vmem:[%s374 + $0x28] sm:$0xff]
        %v1080 = vld [vmem:[%s374 + $0x30] sm:$0xff]
        %v1081 = vld [vmem:[%s374 + $0x38] sm:$0xff]
        %v1082 = vld [vmem:[%s374 + $0x40] sm:$0xff]
        %v1083 = vld [vmem:[%s374 + $0x48] sm:$0xff]
        %v1084 = vld [vmem:[%s374 + $0x50] sm:$0xff]
        %v1085 = vld [vmem:[%s374 + $0x58] sm:$0xff]
        %v1086 = vmul.f32 %v858, %v990
        %v1087 = vmul.f32 %v859, %v991
        %v1088 = vmul.f32 %v860, %v992
        %v1089 = vmul.f32 %v861, %v993
        %v1090 = vmul.f32 %v862, %v994
        %v1091 = vmul.f32 %v863, %v995
        %v1092 = vmul.f32 %v864, %v996
        %v1093 = vmul.f32 %v865, %v997
        %v1094 = vmul.f32 %v866, %v998
        %v1095 = vmul.f32 %v867, %v999
        %v1096 = vmul.f32 %v868, %v1000
        %v1097 = vmul.f32 %v869, %v1001
        %v1098 = vsub.f32 %v1074, %v1086
        %v1099 = vsub.f32 %v1075, %v1087
        %v1100 = vsub.f32 %v1076, %v1088
        %v1101 = vsub.f32 %v1077, %v1089
        %v1102 = vsub.f32 %v1078, %v1090
        %v1103 = vsub.f32 %v1079, %v1091
        %v1104 = vsub.f32 %v1080, %v1092
        %v1105 = vsub.f32 %v1081, %v1093
        %v1106 = vsub.f32 %v1082, %v1094
        %v1107 = vsub.f32 %v1083, %v1095
        %v1108 = vsub.f32 %v1084, %v1096
        %v1109 = vsub.f32 %v1085, %v1097
        %1111 = vset.pattern.permute.xlu0 0
        %1112 = vperm.xlu0 %1111, %v1098
        %v1113 = vpop.permute.xlu0 %1112
        %1116 = vset.pattern.permute.xlu0 0
        %1117 = vperm.xlu0 %1116, %v1099
        %v1118 = vpop.permute.xlu0 %1117
        %1121 = vset.pattern.permute.xlu0 0
        %1122 = vperm.xlu0 %1121, %v1100
        %v1123 = vpop.permute.xlu0 %1122
        %1126 = vset.pattern.permute.xlu0 0
        %1127 = vperm.xlu0 %1126, %v1101
        %v1128 = vpop.permute.xlu0 %1127
        %1131 = vset.pattern.permute.xlu0 0
        %1132 = vperm.xlu0 %1131, %v1102
        %v1133 = vpop.permute.xlu0 %1132
        %1136 = vset.pattern.permute.xlu0 0
        %1137 = vperm.xlu0 %1136, %v1103
        %v1138 = vpop.permute.xlu0 %1137
        %1141 = vset.pattern.permute.xlu0 0
        %1142 = vperm.xlu0 %1141, %v1104
        %v1143 = vpop.permute.xlu0 %1142
        %1146 = vset.pattern.permute.xlu0 0
        %1147 = vperm.xlu0 %1146, %v1105
        %v1148 = vpop.permute.xlu0 %1147
        %1151 = vset.pattern.permute.xlu0 0
        %1152 = vperm.xlu0 %1151, %v1106
        %v1153 = vpop.permute.xlu0 %1152
        %1156 = vset.pattern.permute.xlu0 0
        %1157 = vperm.xlu0 %1156, %v1107
        %v1158 = vpop.permute.xlu0 %1157
        %1161 = vset.pattern.permute.xlu0 0
        %1162 = vperm.xlu0 %1161, %v1108
        %v1163 = vpop.permute.xlu0 %1162
        %1166 = vset.pattern.permute.xlu0 0
        %1167 = vperm.xlu0 %1166, %v1109
        %v1168 = vpop.permute.xlu0 %1167
        %1170 = vst [vmem:[%s402] sm:$0xff] %v1113
        %1171 = vst [vmem:[%s402 + $0x8] sm:$0xff] %v1118
        %1172 = vst [vmem:[%s402 + $0x10] sm:$0xff] %v1123
        %1173 = vst [vmem:[%s402 + $0x18] sm:$0xff] %v1128
        %1174 = vst [vmem:[%s402 + $0x20] sm:$0xff] %v1133
        %1175 = vst [vmem:[%s402 + $0x28] sm:$0xff] %v1138
        %1176 = vst [vmem:[%s402 + $0x30] sm:$0xff] %v1143
        %1177 = vst [vmem:[%s402 + $0x38] sm:$0xff] %v1148
        %1178 = vst [vmem:[%s402 + $0x40] sm:$0xff] %v1153
        %1179 = vst [vmem:[%s402 + $0x48] sm:$0xff] %v1158
        %1180 = vst [vmem:[%s402 + $0x50] sm:$0xff] %v1163
        %1181 = vst [vmem:[%s402 + $0x58] sm:$0xff] %v1168
      $region44: #{tf_block.2} parent=35 // pred_fallthru
        _
      %s1182 = smul.u32 12, %s23
      %s1183 = smul.u32 2, %s25
      %p1184 = scmp.lt.s32.totalorder %s24, 1
      %s1185 = scalar_select %p1184, %s24, 1
      %p1186 = scmp.lt.s32.totalorder %s1182, 11
      %s1187 = scalar_select %p1186, %s1182, 11
      %p1188 = scmp.lt.s32.totalorder %s1183, 1
      %s1189 = scalar_select %p1188, %s1183, 1
      %s1190 = smul.addr %s1187, 2
      %s1191 = sadd.s32 %s1189, %s1190
      %s1192 = smul.addr %s1185, 24
      %s1193 = sadd.s32 %s1191, %s1192
      %s1194 = smul.addr %s1193, 4
      %s1195 = scalar_lea.vmem %s4, %s1194
      %s1196 = smul.u32 12, %s23
      %p1197 = scmp.lt.s32.totalorder %s1196, 11
      %s1198 = scalar_select %p1197, %s1196, 11
      %s1199 = smul.addr %s1198, 8
      %s1200 = scalar_lea.vmem %s5, %s1199
      %s1201 = smul.u32 12, %s23
      %p1202 = scmp.lt.s32.totalorder %s1201, 11
      %s1203 = scalar_select %p1202, %s1201, 11
      %s1204 = smul.addr %s1203, 8
      %s1205 = scalar_lea.vmem %s6, %s1204
      // Predicated region
      $region45: #{tf_block.2} parent=35 // pred_check
        %p1206 = pneg %p165
      $region46: #{tf_block.2} parent=35 // pred_check_branch
        %1208 = sbr.rel (%p1206) target = $region48
      $region47: #{tf_block.2} parent=35 // pred_region
        %s1209 = smul.u32 12, %s23
        %s1210 = smul.u32 2, %s25
      $region48: #{tf_block.2} parent=35 // pred_fallthru
        _
      // Predicated region
      $region49: #{tf_block.2} parent=35 // pred_check
        %p1211 = pneg %p191
      $region50: #{tf_block.2} parent=35 // pred_check_branch
        %1213 = sbr.rel (%p1211) target = $region52
      $region51: #{tf_block.2} parent=35 // pred_region
        %s1214 = smul.u32 12, %s23
      $region52: #{tf_block.2} parent=35 // pred_fallthru
        _
      // Predicated region
      $region53: #{tf_block.2} parent=35 // pred_check
        %p1215 = pneg %p217
      $region54: #{tf_block.2} parent=35 // pred_check_branch
        %1217 = sbr.rel (%p1215) target = $region56
      $region55: #{tf_block.2} parent=35 // pred_region
        %s1218 = smul.u32 12, %s23
      $region56: #{tf_block.2} parent=35 // pred_fallthru
        _
      // Predicated region
      $region57: #{tf_block.2} parent=35 // pred_check
        %p1219 = pneg %p191
      $region58: #{tf_block.2} parent=35 // pred_check_branch
        %1221 = sbr.rel (%p1219) target = $region60
      $region59: #{tf_block.2} parent=35 // pred_region
        %s1222 = smul.u32 12, %s23
        %p1223 = scmp.lt.s32.totalorder %s1222, 11
        %s1224 = scalar_select %p1223, %s1222, 11
        %s1225 = smul.addr %s1224, 8
        %s1226 = scalar_lea.vmem %s5, %s1225
      $region60: #{tf_block.2} parent=35 // pred_fallthru
        _
      // Predicated region
      $region61: #{tf_block.2} parent=35 // pred_check
        %p1227 = pneg %p217
      $region62: #{tf_block.2} parent=35 // pred_check_branch
        %1229 = sbr.rel (%p1227) target = $region64
      $region63: #{tf_block.2} parent=35 // pred_region
        %s1230 = smul.u32 12, %s23
        %p1231 = scmp.lt.s32.totalorder %s1230, 11
        %s1232 = scalar_select %p1231, %s1230, 11
        %s1233 = smul.addr %s1232, 8
        %s1234 = scalar_lea.vmem %s6, %s1233
      $region64: #{tf_block.2} parent=35 // pred_fallthru
        _
    $region36: #{tf_block.2} parent=5 // pred_fallthru
      _
    %p1235 = scmp.le.s32.totalorder 2, %s13
    // Predicated region
    $region65: #{tf_block.2} parent=5 // pred_check
      %p1236 = pneg %p1235
    $region66: #{tf_block.2} parent=5 // pred_check_branch
      %1238 = sbr.rel (%p1236) target = $region68
    $region67: #{tf_block.2} parent=5 // pred_region
      %s1239 = ssub.s32 %s13, 2
      // Predicated region
      $region69: #{tf_block.2} parent=67 // pred_check
        %p1240 = pneg %p171
      $region70: #{tf_block.2} parent=67 // pred_check_branch
        %1242 = sbr.rel (%p1240) target = $region72
      $region71: #{tf_block.2} parent=67 // pred_region
        %s1243 = smul.u32 12, %s26
        %s1244 = smul.u32 2, %s28
        %p1245 = scmp.lt.s32.totalorder %s27, 1
        %s1246 = scalar_select %p1245, %s27, 1
        %p1247 = scmp.lt.s32.totalorder %s1243, 11
        %s1248 = scalar_select %p1247, %s1243, 11
        %p1249 = scmp.lt.s32.totalorder %s1244, 1
        %s1250 = scalar_select %p1249, %s1244, 1
        %s1251 = smul.addr %s1248, 2
        %s1252 = sadd.s32 %s1250, %s1251
        %s1253 = smul.addr %s1246, 24
        %s1254 = sadd.s32 %s1252, %s1253
        %s1255 = smul.addr %s1254, 4
        %s1256 = scalar_lea.vmem %s4, %s1255
      $region72: #{tf_block.2} parent=67 // pred_fallthru
        _
    $region68: #{tf_block.2} parent=5 // pred_fallthru
      _
  $region6: #{tf_block.2} parent=0 // loop_footer
    %s17 = sadd.s32 1, %s13
  $region7: #{tf_block.2} parent=0 // loop_footer_branch
    %12 = sbr.rel target = $region3
  $region8: #{tf_block.2} parent=0 // loop_exit
    _

// kernel: tf_block.3
$region0: #{tf_block.3}
  #allocation0 [shape = 'u32[]', space=smem, size = 0x4, offset = 0x4, fixed_abs, tag = 'smem constant byte address 0x4 - core index']
  #allocation1 [shape = 'u32[144,128]{1,0:T(1,128)}', space=vmem, size = 0x12000, scoped, tag = 'internal scratch']
  #allocation2 [shape = 'f32[484,256]{1,0:T(8,128)}', space=vmem, size = 0x7a000, scoped, tag = 'scratch operand']
  #allocation3 [shape = 'f32[16,256]{1,0:T(8,128)}', space=vmem, size = 0x4000, scoped, tag = 'scratch operand']
  #allocation4 [shape = 'bf16[144,256]{1,0:T(8,128)(2,1)}', space=vmem, size = 0x12000, scoped, tag = 'scratch operand']
  %s0 = inlined_call_operand.vmem [shape: bf16[2,96,256], index: 0, kind: input, shape index: {}]
  %s1 = inlined_call_operand.vmem [shape: f32[96,128], index: 1, kind: input, shape index: {}]
  %s2 = inlined_call_operand.vmem [shape: f32[96,128], index: 2, kind: input, shape index: {}]
  %s3 = inlined_call_operand.vmem [shape: bf16[484,64], index: 3, kind: input, shape index: {}]
  %s4 = inlined_call_operand.vmem [shape: f32[121,256], index: 4, kind: input, shape index: {}]
  %s5 = inlined_call_operand.vmem [shape: f32[2,64,256], index: 5, kind: input, shape index: {}]
  %s6 = inlined_call_operand.vmem [shape: bf16[16,64], index: 6, kind: input, shape index: {}]
  %s7 = inlined_call_operand.vmem [shape: f32[16,1], index: 7, kind: input, shape index: {}]
  %s8 = inlined_call_operand.vmem [shape: bf16[16,144], index: 8, kind: input, shape index: {}]
  %s9 = inlined_call_operand.vmem [shape: f32[16,1], index: 9, kind: input, shape index: {}]
  %s10 = inlined_call_operand.vmem [shape: bf16[64,16], index: 10, kind: input, shape index: {}]
  %s11 = inlined_call_operand.vmem [shape: f32[64,1], index: 11, kind: input, shape index: {}]
  %s12 = inlined_call_operand.vmem [shape: f32[9,256], index: 12, kind: input, shape index: {}]
  %s13 = inlined_call_operand.vmem [shape: f32[2,64,256], index: 13, kind: output, shape index: {}]
  %s14 = sld [smem:[#allocation0]]
  $region99: #{tf_block.3} parent=0
    _
  %s16 = ssub.s32 1, %s14
  %s17 = scalar_select 0, %s16, %s14
  loop: start=0, step=1, limit=4
  $region2: #{tf_block.3} parent=0 // loop_pre_header
    _
  $region3: #{tf_block.3} parent=0 // loop_header
    %s19 = sphi 0, %s23
    %p20 = scmp.ge.s32.totalorder %s19, 4
    %s29 = sphi 0, %s31
    %s32 = sphi 0, %s29
    %s33 = sphi 0, %s32
    %s49 = sphi 0, %s33
    %s53 = sphi 0, %s53
    %s55 = sphi 0, %s53
    %s56 = sphi 0, %s55
    %s70 = sphi 0, %s56
    %s74 = sphi 0, %s74
    %s76 = sphi 0, %s74
    %s77 = sphi 0, %s76
    %s91 = sphi 0, %s77
    %s95 = sphi 0, %s95
    %s97 = sphi 0, %s95
    %s98 = sphi 0, %s97
    %s112 = sphi 0, %s98
    %s116 = sphi 0, %s116
    %s118 = sphi 0, %s116
    %s119 = sphi 0, %s118
    %s133 = sphi 0, %s119
    %s139 = sphi 0, %s141
    %s142 = sphi 0, %s139
    %s143 = sphi 0, %s142
    %s159 = sphi 0, %s143
    %s163 = sphi 0, %s163
    %s165 = sphi 0, %s163
    %s166 = sphi 0, %s165
    %s180 = sphi 0, %s166
    %s184 = sphi 0, %s184
    %s186 = sphi 0, %s184
    %s187 = sphi 0, %s186
    %s201 = sphi 0, %s187
    %s205 = sphi 0, %s205
    %s207 = sphi 0, %s205
    %s208 = sphi 0, %s207
    %s222 = sphi 0, %s208
    %s226 = sphi 0, %s226
    %s228 = sphi 0, %s226
    %s229 = sphi 0, %s228
    %s243 = sphi 0, %s229
    %s247 = sphi 0, %s247
    %s249 = sphi 0, %s247
    %s250 = sphi 0, %s249
    %s264 = sphi 0, %s250
    %s268 = sphi 0, %s268
    %s270 = sphi 0, %s268
    %s271 = sphi 0, %s270
    %s285 = sphi 0, %s271
    %s289 = sphi 0, %s289
    %s291 = sphi 0, %s289
    %s292 = sphi 0, %s291
    %s306 = sphi 0, %s292
    %s312 = sphi 0, %s314
    %s315 = sphi 0, %s312
    %s316 = sphi 0, %s315
    %s332 = sphi 0, %s316
  $region4: #{tf_block.3} parent=0 // loop_header_branch
    %22 = sbr.rel (%p20) target = $region8
  $region5: #{tf_block.3} parent=0 // loop_body
    %s24 = ssub.s32 %s19, 1
    %s25 = ssub.s32 %s19, 2
    %s26 = sadd.s32 %s19, 1
    %s27 = ssub.s32 %s19, %s26
    %p28 = scmp.eq.s32.totalorder %s27, 0
    %s30 = sadd.s32 %s29, 1
    %s31 = scalar_select %p28, %s29, %s30
    %p34 = pneg %p28
    %p35 = scmp.eq.s32.totalorder %s19, 1
    %p36 = por %p34, %p35
    %p37 = scmp.ne.s32.totalorder %s29, %s32
    %p38 = scmp.eq.s32.totalorder %s19, 0
    %p39 = por %p37, %p38
    %p40 = scmp.ne.s32.totalorder %s29, %s32
    %p41 = scmp.eq.s32.totalorder %s24, 1
    %p42 = por %p40, %p41
    %p43 = scmp.ne.s32.totalorder %s32, %s33
    %p44 = scmp.eq.s32.totalorder %s24, 0
    %p45 = por %p43, %p44
    %p46 = scmp.ne.s32.totalorder %s32, %s33
    %p47 = scmp.eq.s32.totalorder %s25, 1
    %p48 = por %p46, %p47
    %p50 = scmp.ne.s32.totalorder %s33, %s49
    %p51 = scmp.eq.s32.totalorder %s25, 0
    %p52 = por %p50, %p51
    %s54 = sadd.s32 %s53, 1
    %p57 = scmp.eq.s32.totalorder %s19, 1
    %p58 = scmp.ne.s32.totalorder %s53, %s55
    %p59 = scmp.eq.s32.totalorder %s19, 0
    %p60 = por %p58, %p59
    %p61 = scmp.ne.s32.totalorder %s53, %s55
    %p62 = scmp.eq.s32.totalorder %s24, 1
    %p63 = por %p61, %p62
    %p64 = scmp.ne.s32.totalorder %s55, %s56
    %p65 = scmp.eq.s32.totalorder %s24, 0
    %p66 = por %p64, %p65
    %p67 = scmp.ne.s32.totalorder %s55, %s56
    %p68 = scmp.eq.s32.totalorder %s25, 1
    %p69 = por %p67, %p68
    %p71 = scmp.ne.s32.totalorder %s56, %s70
    %p72 = scmp.eq.s32.totalorder %s25, 0
    %p73 = por %p71, %p72
    %s75 = sadd.s32 %s74, 1
    %p78 = scmp.eq.s32.totalorder %s19, 1
    %p79 = scmp.ne.s32.totalorder %s74, %s76
    %p80 = scmp.eq.s32.totalorder %s19, 0
    %p81 = por %p79, %p80
    %p82 = scmp.ne.s32.totalorder %s74, %s76
    %p83 = scmp.eq.s32.totalorder %s24, 1
    %p84 = por %p82, %p83
    %p85 = scmp.ne.s32.totalorder %s76, %s77
    %p86 = scmp.eq.s32.totalorder %s24, 0
    %p87 = por %p85, %p86
    %p88 = scmp.ne.s32.totalorder %s76, %s77
    %p89 = scmp.eq.s32.totalorder %s25, 1
    %p90 = por %p88, %p89
    %p92 = scmp.ne.s32.totalorder %s77, %s91
    %p93 = scmp.eq.s32.totalorder %s25, 0
    %p94 = por %p92, %p93
    %s96 = sadd.s32 %s95, 1
    %p99 = scmp.eq.s32.totalorder %s19, 1
    %p100 = scmp.ne.s32.totalorder %s95, %s97
    %p101 = scmp.eq.s32.totalorder %s19, 0
    %p102 = por %p100, %p101
    %p103 = scmp.ne.s32.totalorder %s95, %s97
    %p104 = scmp.eq.s32.totalorder %s24, 1
    %p105 = por %p103, %p104
    %p106 = scmp.ne.s32.totalorder %s97, %s98
    %p107 = scmp.eq.s32.totalorder %s24, 0
    %p108 = por %p106, %p107
    %p109 = scmp.ne.s32.totalorder %s97, %s98
    %p110 = scmp.eq.s32.totalorder %s25, 1
    %p111 = por %p109, %p110
    %p113 = scmp.ne.s32.totalorder %s98, %s112
    %p114 = scmp.eq.s32.totalorder %s25, 0
    %p115 = por %p113, %p114
    %s117 = sadd.s32 %s116, 1
    %p120 = scmp.eq.s32.totalorder %s19, 1
    %p121 = scmp.ne.s32.totalorder %s116, %s118
    %p122 = scmp.eq.s32.totalorder %s19, 0
    %p123 = por %p121, %p122
    %p124 = scmp.ne.s32.totalorder %s116, %s118
    %p125 = scmp.eq.s32.totalorder %s24, 1
    %p126 = por %p124, %p125
    %p127 = scmp.ne.s32.totalorder %s118, %s119
    %p128 = scmp.eq.s32.totalorder %s24, 0
    %p129 = por %p127, %p128
    %p130 = scmp.ne.s32.totalorder %s118, %s119
    %p131 = scmp.eq.s32.totalorder %s25, 1
    %p132 = por %p130, %p131
    %p134 = scmp.ne.s32.totalorder %s119, %s133
    %p135 = scmp.eq.s32.totalorder %s25, 0
    %p136 = por %p134, %p135
    %s137 = ssub.s32 %s19, %s26
    %p138 = scmp.eq.s32.totalorder %s137, 0
    %s140 = sadd.s32 %s139, 1
    %s141 = scalar_select %p138, %s139, %s140
    %p144 = pneg %p138
    %p145 = scmp.eq.s32.totalorder %s19, 1
    %p146 = por %p144, %p145
    %p147 = scmp.ne.s32.totalorder %s139, %s142
    %p148 = scmp.eq.s32.totalorder %s19, 0
    %p149 = por %p147, %p148
    %p150 = scmp.ne.s32.totalorder %s139, %s142
    %p151 = scmp.eq.s32.totalorder %s24, 1
    %p152 = por %p150, %p151
    %p153 = scmp.ne.s32.totalorder %s142, %s143
    %p154 = scmp.eq.s32.totalorder %s24, 0
    %p155 = por %p153, %p154
    %p156 = scmp.ne.s32.totalorder %s142, %s143
    %p157 = scmp.eq.s32.totalorder %s25, 1
    %p158 = por %p156, %p157
    %p160 = scmp.ne.s32.totalorder %s143, %s159
    %p161 = scmp.eq.s32.totalorder %s25, 0
    %p162 = por %p160, %p161
    %s164 = sadd.s32 %s163, 1
    %p167 = scmp.eq.s32.totalorder %s19, 1
    %p168 = scmp.ne.s32.totalorder %s163, %s165
    %p169 = scmp.eq.s32.totalorder %s19, 0
    %p170 = por %p168, %p169
    %p171 = scmp.ne.s32.totalorder %s163, %s165
    %p172 = scmp.eq.s32.totalorder %s24, 1
    %p173 = por %p171, %p172
    %p174 = scmp.ne.s32.totalorder %s165, %s166
    %p175 = scmp.eq.s32.totalorder %s24, 0
    %p176 = por %p174, %p175
    %p177 = scmp.ne.s32.totalorder %s165, %s166
    %p178 = scmp.eq.s32.totalorder %s25, 1
    %p179 = por %p177, %p178
    %p181 = scmp.ne.s32.totalorder %s166, %s180
    %p182 = scmp.eq.s32.totalorder %s25, 0
    %p183 = por %p181, %p182
    %s185 = sadd.s32 %s184, 1
    %p188 = scmp.eq.s32.totalorder %s19, 1
    %p189 = scmp.ne.s32.totalorder %s184, %s186
    %p190 = scmp.eq.s32.totalorder %s19, 0
    %p191 = por %p189, %p190
    %p192 = scmp.ne.s32.totalorder %s184, %s186
    %p193 = scmp.eq.s32.totalorder %s24, 1
    %p194 = por %p192, %p193
    %p195 = scmp.ne.s32.totalorder %s186, %s187
    %p196 = scmp.eq.s32.totalorder %s24, 0
    %p197 = por %p195, %p196
    %p198 = scmp.ne.s32.totalorder %s186, %s187
    %p199 = scmp.eq.s32.totalorder %s25, 1
    %p200 = por %p198, %p199
    %p202 = scmp.ne.s32.totalorder %s187, %s201
    %p203 = scmp.eq.s32.totalorder %s25, 0
    %p204 = por %p202, %p203
    %s206 = sadd.s32 %s205, 1
    %p209 = scmp.eq.s32.totalorder %s19, 1
    %p210 = scmp.ne.s32.totalorder %s205, %s207
    %p211 = scmp.eq.s32.totalorder %s19, 0
    %p212 = por %p210, %p211
    %p213 = scmp.ne.s32.totalorder %s205, %s207
    %p214 = scmp.eq.s32.totalorder %s24, 1
    %p215 = por %p213, %p214
    %p216 = scmp.ne.s32.totalorder %s207, %s208
    %p217 = scmp.eq.s32.totalorder %s24, 0
    %p218 = por %p216, %p217
    %p219 = scmp.ne.s32.totalorder %s207, %s208
    %p220 = scmp.eq.s32.totalorder %s25, 1
    %p221 = por %p219, %p220
    %p223 = scmp.ne.s32.totalorder %s208, %s222
    %p224 = scmp.eq.s32.totalorder %s25, 0
    %p225 = por %p223, %p224
    %s227 = sadd.s32 %s226, 1
    %p230 = scmp.eq.s32.totalorder %s19, 1
    %p231 = scmp.ne.s32.totalorder %s226, %s228
    %p232 = scmp.eq.s32.totalorder %s19, 0
    %p233 = por %p231, %p232
    %p234 = scmp.ne.s32.totalorder %s226, %s228
    %p235 = scmp.eq.s32.totalorder %s24, 1
    %p236 = por %p234, %p235
    %p237 = scmp.ne.s32.totalorder %s228, %s229
    %p238 = scmp.eq.s32.totalorder %s24, 0
    %p239 = por %p237, %p238
    %p240 = scmp.ne.s32.totalorder %s228, %s229
    %p241 = scmp.eq.s32.totalorder %s25, 1
    %p242 = por %p240, %p241
    %p244 = scmp.ne.s32.totalorder %s229, %s243
    %p245 = scmp.eq.s32.totalorder %s25, 0
    %p246 = por %p244, %p245
    %s248 = sadd.s32 %s247, 1
    %p251 = scmp.eq.s32.totalorder %s19, 1
    %p252 = scmp.ne.s32.totalorder %s247, %s249
    %p253 = scmp.eq.s32.totalorder %s19, 0
    %p254 = por %p252, %p253
    %p255 = scmp.ne.s32.totalorder %s247, %s249
    %p256 = scmp.eq.s32.totalorder %s24, 1
    %p257 = por %p255, %p256
    %p258 = scmp.ne.s32.totalorder %s249, %s250
    %p259 = scmp.eq.s32.totalorder %s24, 0
    %p260 = por %p258, %p259
    %p261 = scmp.ne.s32.totalorder %s249, %s250
    %p262 = scmp.eq.s32.totalorder %s25, 1
    %p263 = por %p261, %p262
    %p265 = scmp.ne.s32.totalorder %s250, %s264
    %p266 = scmp.eq.s32.totalorder %s25, 0
    %p267 = por %p265, %p266
    %s269 = sadd.s32 %s268, 1
    %p272 = scmp.eq.s32.totalorder %s19, 1
    %p273 = scmp.ne.s32.totalorder %s268, %s270
    %p274 = scmp.eq.s32.totalorder %s19, 0
    %p275 = por %p273, %p274
    %p276 = scmp.ne.s32.totalorder %s268, %s270
    %p277 = scmp.eq.s32.totalorder %s24, 1
    %p278 = por %p276, %p277
    %p279 = scmp.ne.s32.totalorder %s270, %s271
    %p280 = scmp.eq.s32.totalorder %s24, 0
    %p281 = por %p279, %p280
    %p282 = scmp.ne.s32.totalorder %s270, %s271
    %p283 = scmp.eq.s32.totalorder %s25, 1
    %p284 = por %p282, %p283
    %p286 = scmp.ne.s32.totalorder %s271, %s285
    %p287 = scmp.eq.s32.totalorder %s25, 0
    %p288 = por %p286, %p287
    %s290 = sadd.s32 %s289, 1
    %p293 = scmp.eq.s32.totalorder %s19, 1
    %p294 = scmp.ne.s32.totalorder %s289, %s291
    %p295 = scmp.eq.s32.totalorder %s19, 0
    %p296 = por %p294, %p295
    %p297 = scmp.ne.s32.totalorder %s289, %s291
    %p298 = scmp.eq.s32.totalorder %s24, 1
    %p299 = por %p297, %p298
    %p300 = scmp.ne.s32.totalorder %s291, %s292
    %p301 = scmp.eq.s32.totalorder %s24, 0
    %p302 = por %p300, %p301
    %p303 = scmp.ne.s32.totalorder %s291, %s292
    %p304 = scmp.eq.s32.totalorder %s25, 1
    %p305 = por %p303, %p304
    %p307 = scmp.ne.s32.totalorder %s292, %s306
    %p308 = scmp.eq.s32.totalorder %s25, 0
    %p309 = por %p307, %p308
    %s310 = ssub.s32 %s19, %s26
    %p311 = scmp.eq.s32.totalorder %s310, 0
    %s313 = sadd.s32 %s312, 1
    %s314 = scalar_select %p311, %s312, %s313
    %p317 = pneg %p311
    %p318 = scmp.eq.s32.totalorder %s19, 1
    %p319 = por %p317, %p318
    %p320 = scmp.ne.s32.totalorder %s312, %s315
    %p321 = scmp.eq.s32.totalorder %s19, 0
    %p322 = por %p320, %p321
    %p323 = scmp.ne.s32.totalorder %s312, %s315
    %p324 = scmp.eq.s32.totalorder %s24, 1
    %p325 = por %p323, %p324
    %p326 = scmp.ne.s32.totalorder %s315, %s316
    %p327 = scmp.eq.s32.totalorder %s24, 0
    %p328 = por %p326, %p327
    %p329 = scmp.ne.s32.totalorder %s315, %s316
    %p330 = scmp.eq.s32.totalorder %s25, 1
    %p331 = por %p329, %p330
    %p333 = scmp.ne.s32.totalorder %s316, %s332
    %p334 = scmp.eq.s32.totalorder %s25, 0
    %p335 = por %p333, %p334
    %p336 = scmp.le.s32.totalorder 1, %s19
    %p337 = scmp.lt.s32.totalorder %s19, 3
    %p338 = pnand %p336, %p337
    %p339 = pneg %p338
    // Predicated region
    $region9: #{tf_block.3} parent=5 // pred_check
      _
    $region10: #{tf_block.3} parent=5 // pred_check_branch
      %341 = sbr.rel (%p338) target = $region12
    $region11: #{tf_block.3} parent=5 // pred_region
      %s342 = ssub.s32 %s19, 1
      // Predicated region
      $region13: #{tf_block.3} parent=11 // pred_check
        %p343 = pneg %p66
      $region14: #{tf_block.3} parent=11 // pred_check_branch
        %345 = sbr.rel (%p343) target = $region16
      $region15: #{tf_block.3} parent=11 // pred_region
        _
      $region16: #{tf_block.3} parent=11 // pred_fallthru
        _
      // Predicated region
      $region17: #{tf_block.3} parent=11 // pred_check
        %p346 = pneg %p87
      $region18: #{tf_block.3} parent=11 // pred_check_branch
        %348 = sbr.rel (%p346) target = $region20
      $region19: #{tf_block.3} parent=11 // pred_region
        _
      $region20: #{tf_block.3} parent=11 // pred_fallthru
        _
      // Predicated region
      $region21: #{tf_block.3} parent=11 // pred_check
        %p349 = pneg %p108
      $region22: #{tf_block.3} parent=11 // pred_check_branch
        %351 = sbr.rel (%p349) target = $region24
      $region23: #{tf_block.3} parent=11 // pred_region
        _
      $region24: #{tf_block.3} parent=11 // pred_fallthru
        _
      // Predicated region
      $region25: #{tf_block.3} parent=11 // pred_check
        %p352 = pneg %p129
      $region26: #{tf_block.3} parent=11 // pred_check_branch
        %354 = sbr.rel (%p352) target = $region28
      $region27: #{tf_block.3} parent=11 // pred_region
        _
      $region28: #{tf_block.3} parent=11 // pred_fallthru
        _
      // Predicated region
      $region29: #{tf_block.3} parent=11 // pred_check
        %p355 = pneg %p176
      $region30: #{tf_block.3} parent=11 // pred_check_branch
        %357 = sbr.rel (%p355) target = $region32
      $region31: #{tf_block.3} parent=11 // pred_region
        _
      $region32: #{tf_block.3} parent=11 // pred_fallthru
        _
      // Predicated region
      $region33: #{tf_block.3} parent=11 // pred_check
        %p358 = pneg %p197
      $region34: #{tf_block.3} parent=11 // pred_check_branch
        %360 = sbr.rel (%p358) target = $region36
      $region35: #{tf_block.3} parent=11 // pred_region
        _
      $region36: #{tf_block.3} parent=11 // pred_fallthru
        _
      // Predicated region
      $region37: #{tf_block.3} parent=11 // pred_check
        %p361 = pneg %p218
      $region38: #{tf_block.3} parent=11 // pred_check_branch
        %363 = sbr.rel (%p361) target = $region40
      $region39: #{tf_block.3} parent=11 // pred_region
        _
      $region40: #{tf_block.3} parent=11 // pred_fallthru
        _
      // Predicated region
      $region41: #{tf_block.3} parent=11 // pred_check
        %p364 = pneg %p239
      $region42: #{tf_block.3} parent=11 // pred_check_branch
        %366 = sbr.rel (%p364) target = $region44
      $region43: #{tf_block.3} parent=11 // pred_region
        _
      $region44: #{tf_block.3} parent=11 // pred_fallthru
        _
      // Predicated region
      $region45: #{tf_block.3} parent=11 // pred_check
        %p367 = pneg %p260
      $region46: #{tf_block.3} parent=11 // pred_check_branch
        %369 = sbr.rel (%p367) target = $region48
      $region47: #{tf_block.3} parent=11 // pred_region
        _
      $region48: #{tf_block.3} parent=11 // pred_fallthru
        _
      // Predicated region
      $region49: #{tf_block.3} parent=11 // pred_check
        %p370 = pneg %p281
      $region50: #{tf_block.3} parent=11 // pred_check_branch
        %372 = sbr.rel (%p370) target = $region52
      $region51: #{tf_block.3} parent=11 // pred_region
        _
      $region52: #{tf_block.3} parent=11 // pred_fallthru
        _
      // Predicated region
      $region53: #{tf_block.3} parent=11 // pred_check
        %p373 = pneg %p302
      $region54: #{tf_block.3} parent=11 // pred_check_branch
        %375 = sbr.rel (%p373) target = $region56
      $region55: #{tf_block.3} parent=11 // pred_region
        _
      $region56: #{tf_block.3} parent=11 // pred_fallthru
        _
    $region12: #{tf_block.3} parent=5 // pred_fallthru
      _
    %p376 = scmp.lt.s32.totalorder %s19, 2
    // Predicated region
    $region57: #{tf_block.3} parent=5 // pred_check
      %p377 = pneg %p376
    $region58: #{tf_block.3} parent=5 // pred_check_branch
      %379 = sbr.rel (%p377) target = $region60
    $region59: #{tf_block.3} parent=5 // pred_region
      // Predicated region
      $region61: #{tf_block.3} parent=59 // pred_check
        %p380 = pneg %p39
      $region62: #{tf_block.3} parent=59 // pred_check_branch
        %382 = sbr.rel (%p380) target = $region64
      $region63: #{tf_block.3} parent=59 // pred_region
        %p383 = scmp.lt.s32.totalorder %s19, 1
        %s384 = scalar_select %p383, %s19, 1
        %s385 = smul.addr %s384, 24
        %s386 = smul.addr %s385, 4
        %s387 = scalar_lea.vmem %s0, %s386
      $region64: #{tf_block.3} parent=59 // pred_fallthru
        _
      // Predicated region
      $region65: #{tf_block.3} parent=59 // pred_check
        %p388 = pneg %p149
      $region66: #{tf_block.3} parent=59 // pred_check_branch
        %390 = sbr.rel (%p388) target = $region68
      $region67: #{tf_block.3} parent=59 // pred_region
        %p391 = scmp.lt.s32.totalorder %s19, 1
        %s392 = scalar_select %p391, %s19, 1
        %s393 = smul.addr %s392, 16
        %s394 = smul.addr %s393, 8
        %s395 = scalar_lea.vmem %s5, %s394
      $region68: #{tf_block.3} parent=59 // pred_fallthru
        _
    $region60: #{tf_block.3} parent=5 // pred_fallthru
      _
    %p396 = scmp.le.s32.totalorder 1, %s19
    %p397 = scmp.lt.s32.totalorder %s19, 3
    %p398 = pnand %p396, %p397
    %p399 = pneg %p398
    // Predicated region
    $region69: #{tf_block.3} parent=5 // pred_check
      _
    $region70: #{tf_block.3} parent=5 // pred_check_branch
      %401 = sbr.rel (%p398) target = $region72
    $region71: #{tf_block.3} parent=5 // pred_region
      %s402 = ssub.s32 %s19, 1
      %p403 = scmp.lt.s32.totalorder %s24, 1
      %s404 = scalar_select %p403, %s24, 1
      %s405 = smul.addr %s404, 24
      %s406 = smul.addr %s405, 4
      %s407 = scalar_lea.vmem %s0, %s406
      %p408 = pneg %p45
      %p409 = pneg %p42
      %p410 = pneg %p66
      %p411 = pneg %p63
      %p412 = pneg %p87
      %p413 = pneg %p84
      %p414 = pneg %p108
      %p415 = pneg %p105
      %p416 = pneg %p129
      %p417 = pneg %p126
      %p418 = scmp.lt.s32.totalorder %s24, 1
      %s419 = scalar_select %p418, %s24, 1
      %s420 = smul.addr %s419, 16
      %s421 = smul.addr %s420, 8
      %s422 = scalar_lea.vmem %s5, %s421
      %p423 = pneg %p155
      %p424 = pneg %p152
      %p425 = pneg %p176
      %p426 = pneg %p173
      %p427 = pneg %p197
      %p428 = pneg %p194
      %p429 = pneg %p218
      %p430 = pneg %p215
      %p431 = pneg %p239
      %p432 = pneg %p236
      %p433 = pneg %p260
      %p434 = pneg %p257
      %p435 = pneg %p281
      %p436 = pneg %p278
      %p437 = pneg %p302
      %p438 = pneg %p299
      %p439 = pneg %p328
      %p440 = pneg %p325
      %p441 = scmp.lt.s32.totalorder %s24, 1
      %s442 = scalar_select %p441, %s24, 1
      %s443 = smul.addr %s442, 16
      %s444 = smul.addr %s443, 8
      %s445 = scalar_lea.vmem %s13, %s444
      %p446 = scmp.lt.s32.totalorder %s24, 1
      %s447 = scalar_select %p446, %s24, 1
      %s448 = smul.addr %s447, 24
      %s449 = smul.addr %s448, 4
      %s450 = scalar_lea.vmem %s0, %s449
      %p451 = scmp.lt.s32.totalorder %s24, 1
      %s452 = scalar_select %p451, %s24, 1
      %s453 = smul.addr %s452, 16
      %s454 = smul.addr %s453, 8
      %s455 = scalar_lea.vmem %s5, %s454
      %p456 = scmp.lt.s32.totalorder %s24, 1
      %s457 = scalar_select %p456, %s24, 1
      %s458 = smul.addr %s457, 16
      %s459 = smul.addr %s458, 8
      %s460 = scalar_lea.vmem %s13, %s459
      %v462 = vld [vmem:[%s1] sm:$0xff]
      %v463 = vld [vmem:[%s1 + $0x8] sm:$0xff]
      %v464 = vld [vmem:[%s1 + $0x10] sm:$0xff]
      %v465 = vld [vmem:[%s1 + $0x18] sm:$0xff]
      %v466 = vld [vmem:[%s1 + $0x20] sm:$0xff]
      %v467 = vld [vmem:[%s1 + $0x28] sm:$0xff]
      %v468 = vld [vmem:[%s1 + $0x30] sm:$0xff]
      %v469 = vld [vmem:[%s1 + $0x38] sm:$0xff]
      %v470 = vld [vmem:[%s1 + $0x40] sm:$0xff]
      %v471 = vld [vmem:[%s1 + $0x48] sm:$0xff]
      %v472 = vld [vmem:[%s2] sm:$0xff]
      %v473 = vld [vmem:[%s2 + $0x8] sm:$0xff]
      %v474 = vld [vmem:[%s2 + $0x10] sm:$0xff]
      %v475 = vld [vmem:[%s2 + $0x18] sm:$0xff]
      %v476 = vld [vmem:[%s2 + $0x20] sm:$0xff]
      %v477 = vld [vmem:[%s2 + $0x28] sm:$0xff]
      %v478 = vld [vmem:[%s2 + $0x30] sm:$0xff]
      %v479 = vld [vmem:[%s2 + $0x38] sm:$0xff]
      %v480 = vld [vmem:[%s2 + $0x40] sm:$0xff]
      %v481 = vld [vmem:[%s2 + $0x48] sm:$0xff]
      %v482 = vld [vmem:[%s450] sm:$0xff]
      %v483 = vld [vmem:[%s450 + $0x8] sm:$0xff]
      %v484 = vld [vmem:[%s450 + $0x10] sm:$0xff]
      %v485 = vld [vmem:[%s450 + $0x18] sm:$0xff]
      %v486 = vld [vmem:[%s450 + $0x20] sm:$0xff]
      %v487 = vld [vmem:[%s450 + $0x28] sm:$0xff]
      %v488 = vld [vmem:[%s450 + $0x30] sm:$0xff]
      %v489 = vld [vmem:[%s450 + $0x38] sm:$0xff]
      %v490 = vld [vmem:[%s450 + $0x40] sm:$0xff]
      %v491 = vld [vmem:[%s450 + $0x48] sm:$0xff]
      %v492 = vld [vmem:[%s450 + $0x50] sm:$0xff]
      %v493 = vld [vmem:[%s450 + $0x58] sm:$0xff]
      %v494 = vunpack.c.l.bf16 %v482
      %v495 = vunpack.c.h.bf16 %v482
      %v496 = vunpack.c.l.bf16 %v483
      %v497 = vunpack.c.h.bf16 %v483
      %v498 = vunpack.c.l.bf16 %v484
      %v499 = vunpack.c.h.bf16 %v484
      %v500 = vunpack.c.l.bf16 %v485
      %v501 = vunpack.c.h.bf16 %v485
      %v502 = vunpack.c.l.bf16 %v486
      %v503 = vunpack.c.h.bf16 %v486
      %v504 = vunpack.c.l.bf16 %v487
      %v505 = vunpack.c.h.bf16 %v487
      %v506 = vunpack.c.l.bf16 %v488
      %v507 = vunpack.c.h.bf16 %v488
      %v508 = vunpack.c.l.bf16 %v489
      %v509 = vunpack.c.h.bf16 %v489
      %v510 = vunpack.c.l.bf16 %v490
      %v511 = vunpack.c.h.bf16 %v490
      %v512 = vunpack.c.l.bf16 %v491
      %v513 = vunpack.c.h.bf16 %v491
      %v514 = vunpack.c.l.bf16 %v492
      %v515 = vunpack.c.h.bf16 %v492
      %v516 = vunpack.c.l.bf16 %v493
      %v517 = vunpack.c.h.bf16 %v493
      %519 = vset.pattern.permute.xlu0 0
      %520 = vperm.xlu0 %519, %v462
      %v521 = vpop.permute.xlu0 %520
      %524 = vset.pattern.permute.xlu0 0
      %525 = vperm.xlu0 %524, %v463
      %v526 = vpop.permute.xlu0 %525
      %529 = vset.pattern.permute.xlu0 0
      %530 = vperm.xlu0 %529, %v464
      %v531 = vpop.permute.xlu0 %530
      %534 = vset.pattern.permute.xlu0 0
      %535 = vperm.xlu0 %534, %v465
      %v536 = vpop.permute.xlu0 %535
      %539 = vset.pattern.permute.xlu0 0
      %540 = vperm.xlu0 %539, %v466
      %v541 = vpop.permute.xlu0 %540
      %544 = vset.pattern.permute.xlu0 0
      %545 = vperm.xlu0 %544, %v467
      %v546 = vpop.permute.xlu0 %545
      %549 = vset.pattern.permute.xlu0 0
      %550 = vperm.xlu0 %549, %v468
      %v551 = vpop.permute.xlu0 %550
      %554 = vset.pattern.permute.xlu0 0
      %555 = vperm.xlu0 %554, %v469
      %v556 = vpop.permute.xlu0 %555
      %v558 = vmul.f32 %v494, %v521
      %v559 = vmul.f32 %v495, %v521
      %v560 = vmul.f32 %v496, %v526
      %v561 = vmul.f32 %v497, %v526
      %v562 = vmul.f32 %v498, %v531
      %v563 = vmul.f32 %v499, %v531
      %v564 = vmul.f32 %v500, %v536
      %v565 = vmul.f32 %v501, %v536
      %v566 = vmul.f32 %v502, %v541
      %v567 = vmul.f32 %v503, %v541
      %v568 = vmul.f32 %v504, %v546
      %v569 = vmul.f32 %v505, %v546
      %v570 = vmul.f32 %v506, %v551
      %v571 = vmul.f32 %v507, %v551
      %v572 = vmul.f32 %v508, %v556
      %v573 = vmul.f32 %v509, %v556
      %575 = vset.pattern.permute.xlu0 0
      %576 = vperm.xlu0 %575, %v472
      %v577 = vpop.permute.xlu0 %576
      %580 = vset.pattern.permute.xlu0 0
      %581 = vperm.xlu0 %580, %v473
      %v582 = vpop.permute.xlu0 %581
      %585 = vset.pattern.permute.xlu0 0
      %586 = vperm.xlu0 %585, %v474
      %v587 = vpop.permute.xlu0 %586
      %590 = vset.pattern.permute.xlu0 0
      %591 = vperm.xlu0 %590, %v475
      %v592 = vpop.permute.xlu0 %591
      %595 = vset.pattern.permute.xlu0 0
      %596 = vperm.xlu0 %595, %v476
      %v597 = vpop.permute.xlu0 %596
      %600 = vset.pattern.permute.xlu0 0
      %601 = vperm.xlu0 %600, %v477
      %v602 = vpop.permute.xlu0 %601
      %605 = vset.pattern.permute.xlu0 0
      %606 = vperm.xlu0 %605, %v478
      %v607 = vpop.permute.xlu0 %606
      %610 = vset.pattern.permute.xlu0 0
      %611 = vperm.xlu0 %610, %v479
      %v612 = vpop.permute.xlu0 %611
      %v614 = vadd.f32 %v558, %v577
      %v615 = vadd.f32 %v559, %v577
      %v616 = vadd.f32 %v560, %v582
      %v617 = vadd.f32 %v561, %v582
      %v618 = vadd.f32 %v562, %v587
      %v619 = vadd.f32 %v563, %v587
      %v620 = vadd.f32 %v564, %v592
      %v621 = vadd.f32 %v565, %v592
      %v622 = vadd.f32 %v566, %v597
      %v623 = vadd.f32 %v567, %v597
      %v624 = vadd.f32 %v568, %v602
      %v625 = vadd.f32 %v569, %v602
      %v626 = vadd.f32 %v570, %v607
      %v627 = vadd.f32 %v571, %v607
      %v628 = vadd.f32 %v572, %v612
      %v629 = vadd.f32 %v573, %v612
      %631 = vset.pattern.permute.xlu0 0
      %632 = vperm.xlu0 %631, %v470
      %v633 = vpop.permute.xlu0 %632
      %636 = vset.pattern.permute.xlu0 0
      %637 = vperm.xlu0 %636, %v471
      %v638 = vpop.permute.xlu0 %637
      %v640 = vmul.f32 %v510, %v633
      %v641 = vmul.f32 %v511, %v633
      %v642 = vmul.f32 %v512, %v638
      %v643 = vmul.f32 %v513, %v638
      %645 = vset.pattern.permute.xlu0 0
      %646 = vperm.xlu0 %645, %v480
      %v647 = vpop.permute.xlu0 %646
      %650 = vset.pattern.permute.xlu0 0
      %651 = vperm.xlu0 %650, %v481
      %v652 = vpop.permute.xlu0 %651
      %v654 = vadd.f32 %v640, %v647
      %v655 = vadd.f32 %v641, %v647
      %v656 = vadd.f32 %v642, %v652
      %v657 = vadd.f32 %v643, %v652
      %v658 = vmax.f32 %v514, %v515
      %659 = vmax.xlane.f32.xlu0 %v658
      %v660 = vpop.xlane.xlu0 %659
      %v661 = vmax.f32 %v516, %v517
      %662 = vmax.xlane.f32.xlu0 %v661
      %v663 = vpop.xlane.xlu0 %662
      %v664 = vsub.f32 %v514, %v660
      %v665 = vsub.f32 %v515, %v660
      %v666 = vsub.f32 %v516, %v663
      %v667 = vsub.f32 %v517, %v663
      %v668 = vmul.f32 %v664, 1.442695
      %v669 = vpow.pop %v668
      %v670 = vmul.f32 %v665, 1.442695
      %v671 = vpow.pop %v670
      %v672 = vmul.f32 %v666, 1.442695
      %v673 = vpow.pop %v672
      %v674 = vmul.f32 %v667, 1.442695
      %v675 = vpow.pop %v674
      %v676 = vadd.f32 %v669, %v671
      %677 = vadd.xlane.f32.xlu0 %v676
      %v678 = vpop.xlane.xlu0 %677
      %v679 = vadd.f32 %v673, %v675
      %680 = vadd.xlane.f32.xlu0 %v679
      %v681 = vpop.xlane.xlu0 %680
      %v682 = vrcp.pop %v678
      %v683 = vrcp.pop %v681
      %v684 = vmul.f32 %v669, %v682
      %v685 = vmul.f32 %v671, %v682
      %v686 = vmul.f32 %v673, %v683
      %v687 = vmul.f32 %v675, %v683
      %v688 = vpack.c.bf16 %v616, %v614
      %v689 = vpack.c.bf16 %v617, %v615
      %v690 = vpack.c.bf16 %v620, %v618
      %v691 = vpack.c.bf16 %v621, %v619
      %v692 = vpack.c.bf16 %v624, %v622
      %v693 = vpack.c.bf16 %v625, %v623
      %v694 = vpack.c.bf16 %v628, %v626
      %v695 = vpack.c.bf16 %v629, %v627
      %696 = vst [vmem:[#allocation3] sm:$0xff] %v654
      %697 = vst [vmem:[#allocation3 + $0x8] sm:$0xff] %v655
      %698 = vst [vmem:[#allocation3 + $0x10] sm:$0xff] %v656
      %699 = vst [vmem:[#allocation3 + $0x18] sm:$0xff] %v657
      %v700 = vpack.c.bf16 %v656, %v654
      %v701 = vpack.c.bf16 %v657, %v655
      %v702 = vpack.c.bf16 %v686, %v684
      %v703 = vpack.c.bf16 %v687, %v685
      %704 = vmatprep.subr.bf16.mxu0 0
      %705 = vmatpush1.bf16.xpose.msra.mxu0 0
      %706 = vmatprep.subr.bf16.mxu0 0
      %707 = vmatpush1.bf16.xpose.msra.mxu0 0
      %708 = vmatprep.subr.bf16.mxu0 0
      %709 = vmatpush1.bf16.xpose.msra.mxu0 0
      %710 = vmatprep.subr.bf16.mxu0 0
      %711 = vmatpush1.bf16.xpose.msra.mxu0 0
      %712 = vmatprep.subr.bf16.mxu0 0
      %713 = vmatpush1.bf16.xpose.msra.mxu0 0
      %714 = vmatprep.subr.bf16.mxu0 0
      %715 = vmatpush1.bf16.xpose.msra.mxu0 0
      %716 = vmatprep.subr.bf16.mxu0 0
      %717 = vmatpush1.bf16.xpose.msra.mxu0 0
      %718 = vmatprep.subr.bf16.mxu0 %v703
      %719 = vmatpush1.bf16.xpose.msra.mxu0 %v702
      %720 = vmatprep.subr.bf16.mxu0 0
      %721 = vmatpush2.bf16.xpose.msra.mxu0 0
      %722 = vmatprep.subr.bf16.mxu0 0
      %723 = vmatpush2.bf16.xpose.msra.mxu0 0
      %724 = vmatprep.subr.bf16.mxu0 0
      %725 = vmatpush2.bf16.xpose.msra.mxu0 0
      %726 = vmatprep.subr.bf16.mxu0 0
      %727 = vmatpush2.bf16.xpose.msra.mxu0 0
      %728 = vmatprep.subr.bf16.mxu0 0
      %729 = vmatpush2.bf16.xpose.msra.mxu0 0
      %730 = vmatprep.subr.bf16.mxu0 0
      %731 = vmatpush2.bf16.xpose.msra.mxu0 0
      %732 = vmatprep.subr.bf16.mxu0 0
      %733 = vmatpush2.bf16.xpose.msra.mxu0 0
      %734 = vmatprep.subr.bf16.mxu0 0
      %735 = vmatpush2.bf16.xpose.msra.mxu0 0
      %736 = vmatprep.mubr.bf16.mxu0 %v701
      %737 = vmatmul.mubr.bf16.gmra.mxu0 %v700
      %v738 = vpop.f32.mrf.mxu0
      %v739 = vadd.f32 0.0, %v738
      %v740 = vpop.f32.mrf.mxu0
      %v741 = vpop.f32.mrf.mxu0
      %v742 = vadd.f32 0.0, %v741
      %v743 = vpop.f32.mrf.mxu0
      %744 = vdwg.mxu0
      %vm745 = vcmask 130048
      %v746 = vsel %vm745, %v739, 0.0
      %v747 = vsel %vm745, %v742, 0.0
      %vm748 = vcmask 261120
      %v749 = vsel %vm748, %v746, 0.0
      %v750 = vsel %vm748, %v747, 0.0
      %vm751 = vcmask 392192
      %v752 = vsel %vm751, %v749, 0.0
      %v753 = vsel %vm751, %v750, 0.0
      %756 = vrot.lane.b32.xlu0 %v739, 16
      %v757 = vpop.permute.xlu0 %756
      %758 = vrot.lane.b32.xlu0 %v742, 16
      %v759 = vpop.permute.xlu0 %758
      %v762 = vsel %vm745, 0.0, %v757
      %v763 = vsel %vm745, 0.0, %v759
      %v764 = vsel %vm748, %v762, 0.0
      %v765 = vsel %vm748, %v763, 0.0
      %v766 = vsel %vm751, %v764, 0.0
      %v767 = vsel %vm751, %v765, 0.0
      %768 = vrot.lane.b32.xlu0 %v739, 32
      %v769 = vpop.permute.xlu0 %768
      %770 = vrot.lane.b32.xlu0 %v742, 32
      %v771 = vpop.permute.xlu0 %770
      %v774 = vsel %vm748, 0.0, %v769
      %v775 = vsel %vm748, 0.0, %v771
      %v776 = vsel %vm751, %v774, 0.0
      %v777 = vsel %vm751, %v775, 0.0
      %778 = vrot.lane.b32.xlu0 %v739, 48
      %v779 = vpop.permute.xlu0 %778
      %780 = vrot.lane.b32.xlu0 %v742, 48
      %v781 = vpop.permute.xlu0 %780
      %v784 = vsel %vm751, 0.0, %v779
      %v785 = vsel %vm751, 0.0, %v781
      %v786 = vpack.c.bf16 %v753, %v752
      %v787 = vpack.c.bf16 %v767, %v766
      %v788 = vpack.c.bf16 %v777, %v776
      %v789 = vpack.c.bf16 %v785, %v784
      %vm790 = vcmask 523264
      %v792 = vsel %vm790, %v786, 0
      %v795 = vsel %vm790, %v787, 0
      %v798 = vsel %vm790, %v788, 0
      %v801 = vsel %vm790, %v789, 0
      %803 = vmatprep.subr.bf16.mxu0 0
      %804 = vmatpush1.bf16.msra.mxu0 0
      %805 = vmatprep.subr.bf16.mxu0 0
      %806 = vmatpush1.bf16.msra.mxu0 0
      %807 = vmatprep.subr.bf16.mxu0 0
      %808 = vmatpush1.bf16.msra.mxu0 0
      %809 = vmatprep.subr.bf16.mxu0 0
      %810 = vmatpush1.bf16.msra.mxu0 0
      %811 = vmatprep.subr.bf16.mxu0 %v695
      %812 = vmatpush1.bf16.msra.mxu0 %v694
      %813 = vmatprep.subr.bf16.mxu0 %v693
      %814 = vmatpush1.bf16.msra.mxu0 %v692
      %815 = vmatprep.subr.bf16.mxu0 %v691
      %816 = vmatpush1.bf16.msra.mxu0 %v690
      %817 = vmatprep.subr.bf16.mxu0 %v689
      %818 = vmatpush1.bf16.msra.mxu0 %v688
      %819 = vmatprep.subr.bf16.mxu0 0
      %820 = vmatpush2.bf16.msra.mxu0 0
      %821 = vmatprep.subr.bf16.mxu0 0
      %822 = vmatpush2.bf16.msra.mxu0 0
      %823 = vmatprep.subr.bf16.mxu0 0
      %824 = vmatpush2.bf16.msra.mxu0 0
      %825 = vmatprep.subr.bf16.mxu0 0
      %826 = vmatpush2.bf16.msra.mxu0 0
      %827 = vmatprep.subr.bf16.mxu0 0
      %828 = vmatpush2.bf16.msra.mxu0 0
      %829 = vmatprep.subr.bf16.mxu0 0
      %830 = vmatpush2.bf16.msra.mxu0 0
      %831 = vmatprep.subr.bf16.mxu0 0
      %832 = vmatpush2.bf16.msra.mxu0 0
      %833 = vmatprep.subr.bf16.mxu0 0
      %834 = vmatpush2.bf16.msra.mxu0 0
      %835 = vmatprep.mubr.bf16.mxu0 0
      %836 = vmatmul.mubr.bf16.gmra.mxu0 %v792
      %v837 = vpop.f32.mrf.mxu0
      %v838 = vadd.f32 0.0, %v837
      %v839 = vpop.f32.mrf.mxu0
      %v840 = vadd.f32 0.0, %v839
      %v841 = vpop.f32.mrf.mxu0
      %v842 = vadd.f32 0.0, %v841
      %v843 = vpop.f32.mrf.mxu0
      %v844 = vadd.f32 0.0, %v843
      %845 = vmatprep.mubr.bf16.mxu0 0
      %846 = vmatmul.mubr.bf16.gmra.mxu0 %v795
      %v847 = vpop.f32.mrf.mxu0
      %v848 = vadd.f32 0.0, %v847
      %v849 = vpop.f32.mrf.mxu0
      %v850 = vadd.f32 0.0, %v849
      %v851 = vpop.f32.mrf.mxu0
      %v852 = vadd.f32 0.0, %v851
      %v853 = vpop.f32.mrf.mxu0
      %v854 = vadd.f32 0.0, %v853
      %855 = vmatprep.mubr.bf16.mxu0 0
      %856 = vmatmul.mubr.bf16.gmra.mxu0 %v798
      %v857 = vpop.f32.mrf.mxu0
      %v858 = vadd.f32 0.0, %v857
      %v859 = vpop.f32.mrf.mxu0
      %v860 = vadd.f32 0.0, %v859
      %v861 = vpop.f32.mrf.mxu0
      %v862 = vadd.f32 0.0, %v861
      %v863 = vpop.f32.mrf.mxu0
      %v864 = vadd.f32 0.0, %v863
      %865 = vmatprep.mubr.bf16.mxu0 0
      %866 = vmatmul.mubr.bf16.gmra.mxu0 %v801
      %v867 = vpop.f32.mrf.mxu0
      %v868 = vadd.f32 0.0, %v867
      %v869 = vpop.f32.mrf.mxu0
      %v870 = vadd.f32 0.0, %v869
      %v871 = vpop.f32.mrf.mxu0
      %v872 = vadd.f32 0.0, %v871
      %v873 = vpop.f32.mrf.mxu0
      %v874 = vadd.f32 0.0, %v873
      %875 = vdwg.mxu0
      %v876 = vld [vmem:[%s3] sm:$0xf]
      %v877 = vld [vmem:[%s3 + $0x4] sm:$0xf]
      %v878 = vld [vmem:[%s3 + $0x8] sm:$0xf]
      %v879 = vld [vmem:[%s3 + $0xc] sm:$0xf]
      %v880 = vld [vmem:[%s3 + $0x10] sm:$0xf]
      %v881 = vld [vmem:[%s3 + $0x14] sm:$0xf]
      %v882 = vld [vmem:[%s3 + $0x18] sm:$0xf]
      %v883 = vld [vmem:[%s3 + $0x1c] sm:$0xf]
      %v884 = vld [vmem:[%s3 + $0x20] sm:$0xf]
      %v885 = vld [vmem:[%s3 + $0x24] sm:$0xf]
      %v886 = vld [vmem:[%s3 + $0x28] sm:$0xf]
      %v887 = vld [vmem:[%s3 + $0x2c] sm:$0xf]
      %v888 = vld [vmem:[%s3 + $0x30] sm:$0xf]
      %v889 = vld [vmem:[%s3 + $0x34] sm:$0xf]
      %v890 = vld [vmem:[%s3 + $0x38] sm:$0xf]
      %v891 = vld [vmem:[%s3 + $0x3c] sm:$0xf]
      %v892 = vld [vmem:[%s3 + $0x40] sm:$0xf]
      %v893 = vld [vmem:[%s3 + $0x44] sm:$0xf]
      %v894 = vld [vmem:[%s3 + $0x48] sm:$0xf]
      %v895 = vld [vmem:[%s3 + $0x4c] sm:$0xf]
      %v896 = vld [vmem:[%s3 + $0x50] sm:$0xf]
      %v897 = vld [vmem:[%s3 + $0x54] sm:$0xf]
      %v898 = vld [vmem:[%s3 + $0x58] sm:$0xf]
      %v899 = vld [vmem:[%s3 + $0x5c] sm:$0xf]
      %v900 = vld [vmem:[%s3 + $0x60] sm:$0xf]
      %v901 = vld [vmem:[%s3 + $0x64] sm:$0xf]
      %v902 = vld [vmem:[%s3 + $0x68] sm:$0xf]
      %v903 = vld [vmem:[%s3 + $0x6c] sm:$0xf]
      %v904 = vld [vmem:[%s3 + $0x70] sm:$0xf]
      %v905 = vld [vmem:[%s3 + $0x74] sm:$0xf]
      %v906 = vld [vmem:[%s3 + $0x78] sm:$0xf]
      %v907 = vld [vmem:[%s3 + $0x7c] sm:$0xf]
      %v908 = vld [vmem:[%s3 + $0x80] sm:$0xf]
      %v909 = vld [vmem:[%s3 + $0x84] sm:$0xf]
      %v910 = vld [vmem:[%s3 + $0x88] sm:$0xf]
      %v911 = vld [vmem:[%s3 + $0x8c] sm:$0xf]
      %v912 = vld [vmem:[%s3 + $0x90] sm:$0xf]
      %v913 = vld [vmem:[%s3 + $0x94] sm:$0xf]
      %v914 = vld [vmem:[%s3 + $0x98] sm:$0xf]
      %v915 = vld [vmem:[%s3 + $0x9c] sm:$0xf]
      %v916 = vld [vmem:[%s3 + $0xa0] sm:$0xf]
      %v917 = vld [vmem:[%s3 + $0xa4] sm:$0xf]
      %v918 = vld [vmem:[%s3 + $0xa8] sm:$0xf]
      %v919 = vld [vmem:[%s3 + $0xac] sm:$0xf]
      %v920 = vld [vmem:[%s3 + $0xb0] sm:$0xf]
      %v921 = vld [vmem:[%s3 + $0xb4] sm:$0xf]
      %v922 = vld [vmem:[%s3 + $0xb8] sm:$0xf]
      %v923 = vld [vmem:[%s3 + $0xbc] sm:$0xf]
      %v924 = vld [vmem:[%s3 + $0xc0] sm:$0xf]
      %v925 = vld [vmem:[%s3 + $0xc4] sm:$0xf]
      %v926 = vld [vmem:[%s3 + $0xc8] sm:$0xf]
      %v927 = vld [vmem:[%s3 + $0xcc] sm:$0xf]
      %v928 = vld [vmem:[%s3 + $0xd0] sm:$0xf]
      %v929 = vld [vmem:[%s3 + $0xd4] sm:$0xf]
      %v930 = vld [vmem:[%s3 + $0xd8] sm:$0xf]
      %v931 = vld [vmem:[%s3 + $0xdc] sm:$0xf]
      %v932 = vld [vmem:[%s3 + $0xe0] sm:$0xf]
      %v933 = vld [vmem:[%s3 + $0xe4] sm:$0xf]
      %v934 = vld [vmem:[%s3 + $0xe8] sm:$0xf]
      %v935 = vld [vmem:[%s3 + $0xec] sm:$0xf]
      %v936 = vld [vmem:[%s3 + $0xf0] sm:$0x3]
      %v998 = vunpack.c.l.b16 %v876
      %v999 = vunpack.c.l.b16 %v877
      %v1000 = vunpack.c.l.b16 %v878
      %v1001 = vunpack.c.l.b16 %v879
      %v1002 = vunpack.c.l.b16 %v880
      %v1003 = vunpack.c.l.b16 %v881
      %v1004 = vunpack.c.l.b16 %v882
      %v1005 = vunpack.c.l.b16 %v883
      %v1006 = vunpack.c.l.b16 %v884
      %v1007 = vunpack.c.l.b16 %v885
      %v1008 = vunpack.c.l.b16 %v886
      %v1009 = vunpack.c.l.b16 %v887
      %v1010 = vunpack.c.l.b16 %v888
      %v1011 = vunpack.c.l.b16 %v889
      %v1012 = vunpack.c.l.b16 %v890
      %v1013 = vunpack.c.l.b16 %v891
      %v1014 = vunpack.c.l.b16 %v892
      %v1015 = vunpack.c.l.b16 %v893
      %v1016 = vunpack.c.l.b16 %v894
      %v1017 = vunpack.c.l.b16 %v895
      %v1018 = vunpack.c.l.b16 %v896
      %v1019 = vunpack.c.l.b16 %v897
      %v1020 = vunpack.c.l.b16 %v898
      %v1021 = vunpack.c.l.b16 %v899
      %v1022 = vunpack.c.l.b16 %v900
      %v1023 = vunpack.c.l.b16 %v901
      %v1024 = vunpack.c.l.b16 %v902
      %v1025 = vunpack.c.l.b16 %v903
      %v1026 = vunpack.c.l.b16 %v904
      %v1027 = vunpack.c.l.b16 %v905
      %v1028 = vunpack.c.l.b16 %v906
      %v1029 = vunpack.c.l.b16 %v907
      %v1030 = vunpack.c.l.b16 %v908
      %v1031 = vunpack.c.l.b16 %v909
      %v1032 = vunpack.c.l.b16 %v910
      %v1033 = vunpack.c.l.b16 %v911
      %v1034 = vunpack.c.l.b16 %v912
      %v1035 = vunpack.c.l.b16 %v913
      %v1036 = vunpack.c.l.b16 %v914
      %v1037 = vunpack.c.l.b16 %v915
      %v1038 = vunpack.c.l.b16 %v916
      %v1039 = vunpack.c.l.b16 %v917
      %v1040 = vunpack.c.l.b16 %v918
      %v1041 = vunpack.c.l.b16 %v919
      %v1042 = vunpack.c.l.b16 %v920
      %v1043 = vunpack.c.l.b16 %v921
      %v1044 = vunpack.c.l.b16 %v922
      %v1045 = vunpack.c.l.b16 %v923
      %v1046 = vunpack.c.l.b16 %v924
      %v1047 = vunpack.c.l.b16 %v925
      %v1048 = vunpack.c.l.b16 %v926
      %v1049 = vunpack.c.l.b16 %v927
      %v1050 = vunpack.c.l.b16 %v928
      %v1051 = vunpack.c.l.b16 %v929
      %v1052 = vunpack.c.l.b16 %v930
      %v1053 = vunpack.c.l.b16 %v931
      %v1054 = vunpack.c.l.b16 %v932
      %v1055 = vunpack.c.l.b16 %v933
      %v1056 = vunpack.c.l.b16 %v934
      %v1057 = vunpack.c.l.b16 %v935
      %v1058 = vunpack.c.l.b16 %v936
      %v1059 = vpack.c.b16 %v999, %v998
      %v1060 = vpack.c.b16 %v1001, %v1000
      %v1061 = vpack.c.b16 %v1003, %v1002
      %v1062 = vpack.c.b16 %v1005, %v1004
      %v1063 = vpack.c.b16 %v1007, %v1006
      %v1064 = vpack.c.b16 %v1009, %v1008
      %v1065 = vpack.c.b16 %v1011, %v1010
      %v1066 = vpack.c.b16 %v1013, %v1012
      %v1067 = vpack.c.b16 %v1015, %v1014
      %v1068 = vpack.c.b16 %v1017, %v1016
      %v1069 = vpack.c.b16 %v1019, %v1018
      %v1070 = vpack.c.b16 %v1021, %v1020
      %v1071 = vpack.c.b16 %v1023, %v1022
      %v1072 = vpack.c.b16 %v1025, %v1024
      %v1073 = vpack.c.b16 %v1027, %v1026
      %v1074 = vpack.c.b16 %v1029, %v1028
      %v1075 = vpack.c.b16 %v1031, %v1030
      %v1076 = vpack.c.b16 %v1033, %v1032
      %v1077 = vpack.c.b16 %v1035, %v1034
      %v1078 = vpack.c.b16 %v1037, %v1036
      %v1079 = vpack.c.b16 %v1039, %v1038
      %v1080 = vpack.c.b16 %v1041, %v1040
      %v1081 = vpack.c.b16 %v1043, %v1042
      %v1082 = vpack.c.b16 %v1045, %v1044
      %v1083 = vpack.c.b16 %v1047, %v1046
      %v1084 = vpack.c.b16 %v1049, %v1048
      %v1085 = vpack.c.b16 %v1051, %v1050
      %v1086 = vpack.c.b16 %v1053, %v1052
      %v1087 = vpack.c.b16 %v1055, %v1054
      %v1088 = vpack.c.b16 %v1057, %v1056
      %v1089 = vpack.c.b16 %v1058, %v1058
      %v1091 = vsel %vm790, %v1059, 0
      %v1094 = vsel %vm790, %v1060, 0
      %v1097 = vsel %vm790, %v1061, 0
      %v1100 = vsel %vm790, %v1062, 0
      %v1103 = vsel %vm790, %v1063, 0
      %v1106 = vsel %vm790, %v1064, 0
      %v1109 = vsel %vm790, %v1065, 0
      %v1112 = vsel %vm790, %v1066, 0
      %v1115 = vsel %vm790, %v1067, 0
      %v1118 = vsel %vm790, %v1068, 0
      %v1121 = vsel %vm790, %v1069, 0
      %v1124 = vsel %vm790, %v1070, 0
      %v1127 = vsel %vm790, %v1071, 0
      %v1130 = vsel %vm790, %v1072, 0
      %v1133 = vsel %vm790, %v1073, 0
      %v1136 = vsel %vm790, %v1074, 0
      %v1139 = vsel %vm790, %v1075, 0
      %v1142 = vsel %vm790, %v1076, 0
      %v1145 = vsel %vm790, %v1077, 0
      %v1148 = vsel %vm790, %v1078, 0
      %v1151 = vsel %vm790, %v1079, 0
      %v1154 = vsel %vm790, %v1080, 0
      %v1157 = vsel %vm790, %v1081, 0
      %v1160 = vsel %vm790, %v1082, 0
      %v1163 = vsel %vm790, %v1083, 0
      %v1166 = vsel %vm790, %v1084, 0
      %v1169 = vsel %vm790, %v1085, 0
      %v1172 = vsel %vm790, %v1086, 0
      %v1175 = vsel %vm790, %v1087, 0
      %v1178 = vsel %vm790, %v1088, 0
      %v1181 = vsel %vm790, %v1089, 0
      %1183 = vmatprep.subr.bf16.mxu0 0
      %1184 = vmatpush1.bf16.msra.mxu0 0
      %1185 = vmatprep.subr.bf16.mxu0 0
      %1186 = vmatpush1.bf16.msra.mxu0 0
      %1187 = vmatprep.subr.bf16.mxu0 0
      %1188 = vmatpush1.bf16.msra.mxu0 0
      %1189 = vmatprep.subr.bf16.mxu0 0
      %1190 = vmatpush1.bf16.msra.mxu0 0
      %1191 = vmatprep.subr.bf16.mxu0 %v695
      %1192 = vmatpush1.bf16.msra.mxu0 %v694
      %1193 = vmatprep.subr.bf16.mxu0 %v693
      %1194 = vmatpush1.bf16.msra.mxu0 %v692
      %1195 = vmatprep.subr.bf16.mxu0 %v691
      %1196 = vmatpush1.bf16.msra.mxu0 %v690
      %1197 = vmatprep.subr.bf16.mxu0 %v689
      %1198 = vmatpush1.bf16.msra.mxu0 %v688
      %1199 = vmatprep.subr.bf16.mxu0 0
      %1200 = vmatpush2.bf16.msra.mxu0 0
      %1201 = vmatprep.subr.bf16.mxu0 0
      %1202 = vmatpush2.bf16.msra.mxu0 0
      %1203 = vmatprep.subr.bf16.mxu0 0
      %1204 = vmatpush2.bf16.msra.mxu0 0
      %1205 = vmatprep.subr.bf16.mxu0 0
      %1206 = vmatpush2.bf16.msra.mxu0 0
      %1207 = vmatprep.subr.bf16.mxu0 0
      %1208 = vmatpush2.bf16.msra.mxu0 0
      %1209 = vmatprep.subr.bf16.mxu0 0
      %1210 = vmatpush2.bf16.msra.mxu0 0
      %1211 = vmatprep.subr.bf16.mxu0 0
      %1212 = vmatpush2.bf16.msra.mxu0 0
      %1213 = vmatprep.subr.bf16.mxu0 0
      %1214 = vmatpush2.bf16.msra.mxu0 0
      %1215 = vmatprep.mubr.bf16.mxu0 0
      %1216 = vmatmul.mubr.bf16.gmra.mxu0 %v1091
      %v1217 = vpop.f32.mrf.mxu0
      %v1218 = vadd.f32 0.0, %v1217
      %v1219 = vpop.f32.mrf.mxu0
      %v1220 = vadd.f32 0.0, %v1219
      %v1221 = vpop.f32.mrf.mxu0
      %v1222 = vadd.f32 0.0, %v1221
      %v1223 = vpop.f32.mrf.mxu0
      %v1224 = vadd.f32 0.0, %v1223
      %1225 = vmatprep.mubr.bf16.mxu0 0
      %1226 = vmatmul.mubr.bf16.gmra.mxu0 %v1094
      %v1227 = vpop.f32.mrf.mxu0
      %v1228 = vadd.f32 0.0, %v1227
      %v1229 = vpop.f32.mrf.mxu0
      %v1230 = vadd.f32 0.0, %v1229
      %v1231 = vpop.f32.mrf.mxu0
      %v1232 = vadd.f32 0.0, %v1231
      %v1233 = vpop.f32.mrf.mxu0
      %v1234 = vadd.f32 0.0, %v1233
      %1235 = vmatprep.mubr.bf16.mxu0 0
      %1236 = vmatmul.mubr.bf16.gmra.mxu0 %v1097
      %v1237 = vpop.f32.mrf.mxu0
      %v1238 = vadd.f32 0.0, %v1237
      %v1239 = vpop.f32.mrf.mxu0
      %v1240 = vadd.f32 0.0, %v1239
      %v1241 = vpop.f32.mrf.mxu0
      %v1242 = vadd.f32 0.0, %v1241
      %v1243 = vpop.f32.mrf.mxu0
      %v1244 = vadd.f32 0.0, %v1243
      %1245 = vmatprep.mubr.bf16.mxu0 0
      %1246 = vmatmul.mubr.bf16.gmra.mxu0 %v1100
      %v1247 = vpop.f32.mrf.mxu0
      %v1248 = vadd.f32 0.0, %v1247
      %v1249 = vpop.f32.mrf.mxu0
      %v1250 = vadd.f32 0.0, %v1249
      %v1251 = vpop.f32.mrf.mxu0
      %v1252 = vadd.f32 0.0, %v1251
      %v1253 = vpop.f32.mrf.mxu0
      %v1254 = vadd.f32 0.0, %v1253
      %1255 = vmatprep.mubr.bf16.mxu0 0
      %1256 = vmatmul.mubr.bf16.gmra.mxu0 %v1103
      %v1257 = vpop.f32.mrf.mxu0
      %v1258 = vadd.f32 0.0, %v1257
      %v1259 = vpop.f32.mrf.mxu0
      %v1260 = vadd.f32 0.0, %v1259
      %v1261 = vpop.f32.mrf.mxu0
      %v1262 = vadd.f32 0.0, %v1261
      %v1263 = vpop.f32.mrf.mxu0
      %v1264 = vadd.f32 0.0, %v1263
      %1265 = vmatprep.mubr.bf16.mxu0 0
      %1266 = vmatmul.mubr.bf16.gmra.mxu0 %v1106
      %v1267 = vpop.f32.mrf.mxu0
      %v1268 = vadd.f32 0.0, %v1267
      %v1269 = vpop.f32.mrf.mxu0
      %v1270 = vadd.f32 0.0, %v1269
      %v1271 = vpop.f32.mrf.mxu0
      %v1272 = vadd.f32 0.0, %v1271
      %v1273 = vpop.f32.mrf.mxu0
      %v1274 = vadd.f32 0.0, %v1273
      %1275 = vmatprep.mubr.bf16.mxu0 0
      %1276 = vmatmul.mubr.bf16.gmra.mxu0 %v1109
      %v1277 = vpop.f32.mrf.mxu0
      %v1278 = vadd.f32 0.0, %v1277
      %v1279 = vpop.f32.mrf.mxu0
      %v1280 = vadd.f32 0.0, %v1279
      %v1281 = vpop.f32.mrf.mxu0
      %v1282 = vadd.f32 0.0, %v1281
      %v1283 = vpop.f32.mrf.mxu0
      %v1284 = vadd.f32 0.0, %v1283
      %1285 = vmatprep.mubr.bf16.mxu0 0
      %1286 = vmatmul.mubr.bf16.gmra.mxu0 %v1112
      %v1287 = vpop.f32.mrf.mxu0
      %v1288 = vadd.f32 0.0, %v1287
      %v1289 = vpop.f32.mrf.mxu0
      %v1290 = vadd.f32 0.0, %v1289
      %v1291 = vpop.f32.mrf.mxu0
      %v1292 = vadd.f32 0.0, %v1291
      %v1293 = vpop.f32.mrf.mxu0
      %v1294 = vadd.f32 0.0, %v1293
      %1295 = vmatprep.mubr.bf16.mxu0 0
      %1296 = vmatmul.mubr.bf16.gmra.mxu0 %v1115
      %v1297 = vpop.f32.mrf.mxu0
      %v1298 = vadd.f32 0.0, %v1297
      %v1299 = vpop.f32.mrf.mxu0
      %v1300 = vadd.f32 0.0, %v1299
      %v1301 = vpop.f32.mrf.mxu0
      %v1302 = vadd.f32 0.0, %v1301
      %v1303 = vpop.f32.mrf.mxu0
      %v1304 = vadd.f32 0.0, %v1303
      %1305 = vmatprep.mubr.bf16.mxu0 0
      %1306 = vmatmul.mubr.bf16.gmra.mxu0 %v1118
      %v1307 = vpop.f32.mrf.mxu0
      %v1308 = vadd.f32 0.0, %v1307
      %v1309 = vpop.f32.mrf.mxu0
      %v1310 = vadd.f32 0.0, %v1309
      %v1311 = vpop.f32.mrf.mxu0
      %v1312 = vadd.f32 0.0, %v1311
      %v1313 = vpop.f32.mrf.mxu0
      %v1314 = vadd.f32 0.0, %v1313
      %1315 = vmatprep.mubr.bf16.mxu0 0
      %1316 = vmatmul.mubr.bf16.gmra.mxu0 %v1121
      %v1317 = vpop.f32.mrf.mxu0
      %v1318 = vadd.f32 0.0, %v1317
      %v1319 = vpop.f32.mrf.mxu0
      %v1320 = vadd.f32 0.0, %v1319
      %v1321 = vpop.f32.mrf.mxu0
      %v1322 = vadd.f32 0.0, %v1321
      %v1323 = vpop.f32.mrf.mxu0
      %v1324 = vadd.f32 0.0, %v1323
      %1325 = vmatprep.mubr.bf16.mxu0 0
      %1326 = vmatmul.mubr.bf16.gmra.mxu0 %v1124
      %v1327 = vpop.f32.mrf.mxu0
      %v1328 = vadd.f32 0.0, %v1327
      %v1329 = vpop.f32.mrf.mxu0
      %v1330 = vadd.f32 0.0, %v1329
      %v1331 = vpop.f32.mrf.mxu0
      %v1332 = vadd.f32 0.0, %v1331
      %v1333 = vpop.f32.mrf.mxu0
      %v1334 = vadd.f32 0.0, %v1333
      %1335 = vmatprep.mubr.bf16.mxu0 0
      %1336 = vmatmul.mubr.bf16.gmra.mxu0 %v1127
      %v1337 = vpop.f32.mrf.mxu0
      %v1338 = vadd.f32 0.0, %v1337
      %v1339 = vpop.f32.mrf.mxu0
      %v1340 = vadd.f32 0.0, %v1339
      %v1341 = vpop.f32.mrf.mxu0
      %v1342 = vadd.f32 0.0, %v1341
      %v1343 = vpop.f32.mrf.mxu0
      %v1344 = vadd.f32 0.0, %v1343
      %1345 = vmatprep.mubr.bf16.mxu0 0
      %1346 = vmatmul.mubr.bf16.gmra.mxu0 %v1130
      %v1347 = vpop.f32.mrf.mxu0
      %v1348 = vadd.f32 0.0, %v1347
      %v1349 = vpop.f32.mrf.mxu0
      %v1350 = vadd.f32 0.0, %v1349
      %v1351 = vpop.f32.mrf.mxu0
      %v1352 = vadd.f32 0.0, %v1351
      %v1353 = vpop.f32.mrf.mxu0
      %v1354 = vadd.f32 0.0, %v1353
      %1355 = vmatprep.mubr.bf16.mxu0 0
      %1356 = vmatmul.mubr.bf16.gmra.mxu0 %v1133
      %v1357 = vpop.f32.mrf.mxu0
      %v1358 = vadd.f32 0.0, %v1357
      %v1359 = vpop.f32.mrf.mxu0
      %v1360 = vadd.f32 0.0, %v1359
      %v1361 = vpop.f32.mrf.mxu0
      %v1362 = vadd.f32 0.0, %v1361
      %v1363 = vpop.f32.mrf.mxu0
      %v1364 = vadd.f32 0.0, %v1363
      %1365 = vmatprep.mubr.bf16.mxu0 0
      %1366 = vmatmul.mubr.bf16.gmra.mxu0 %v1136
      %v1367 = vpop.f32.mrf.mxu0
      %v1368 = vadd.f32 0.0, %v1367
      %v1369 = vpop.f32.mrf.mxu0
      %v1370 = vadd.f32 0.0, %v1369
      %v1371 = vpop.f32.mrf.mxu0
      %v1372 = vadd.f32 0.0, %v1371
      %v1373 = vpop.f32.mrf.mxu0
      %v1374 = vadd.f32 0.0, %v1373
      %1375 = vmatprep.mubr.bf16.mxu0 0
      %1376 = vmatmul.mubr.bf16.gmra.mxu0 %v1139
      %v1377 = vpop.f32.mrf.mxu0
      %v1378 = vadd.f32 0.0, %v1377
      %v1379 = vpop.f32.mrf.mxu0
      %v1380 = vadd.f32 0.0, %v1379
      %v1381 = vpop.f32.mrf.mxu0
      %v1382 = vadd.f32 0.0, %v1381
      %v1383 = vpop.f32.mrf.mxu0
      %v1384 = vadd.f32 0.0, %v1383
      %1385 = vmatprep.mubr.bf16.mxu0 0
      %1386 = vmatmul.mubr.bf16.gmra.mxu0 %v1142
      %v1387 = vpop.f32.mrf.mxu0
      %v1388 = vadd.f32 0.0, %v1387
      %v1389 = vpop.f32.mrf.mxu0
      %v1390 = vadd.f32 0.0, %v1389
      %v1391 = vpop.f32.mrf.mxu0
      %v1392 = vadd.f32 0.0, %v1391
      %v1393 = vpop.f32.mrf.mxu0
      %v1394 = vadd.f32 0.0, %v1393
      %1395 = vmatprep.mubr.bf16.mxu0 0
      %1396 = vmatmul.mubr.bf16.gmra.mxu0 %v1145
      %v1397 = vpop.f32.mrf.mxu0
      %v1398 = vadd.f32 0.0, %v1397
      %v1399 = vpop.f32.mrf.mxu0
      %v1400 = vadd.f32 0.0, %v1399
      %v1401 = vpop.f32.mrf.mxu0
      %v1402 = vadd.f32 0.0, %v1401
      %v1403 = vpop.f32.mrf.mxu0
      %v1404 = vadd.f32 0.0, %v1403
      %1405 = vmatprep.mubr.bf16.mxu0 0
      %1406 = vmatmul.mubr.bf16.gmra.mxu0 %v1148
      %v1407 = vpop.f32.mrf.mxu0
      %v1408 = vadd.f32 0.0, %v1407
      %v1409 = vpop.f32.mrf.mxu0
      %v1410 = vadd.f32 0.0, %v1409
      %v1411 = vpop.f32.mrf.mxu0
      %v1412 = vadd.f32 0.0, %v1411
      %v1413 = vpop.f32.mrf.mxu0
      %v1414 = vadd.f32 0.0, %v1413
      %1415 = vmatprep.mubr.bf16.mxu0 0
      %1416 = vmatmul.mubr.bf16.gmra.mxu0 %v1151
      %v1417 = vpop.f32.mrf.mxu0
      %v1418 = vadd.f32 0.0, %v1417
      %v1419 = vpop.f32.mrf.mxu0
      %v1420 = vadd.f32 0.0, %v1419
      %v1421 = vpop.f32.mrf.mxu0
      %v1422 = vadd.f32 0.0, %v1421
      %v1423 = vpop.f32.mrf.mxu0
      %v1424 = vadd.f32 0.0, %v1423
      %1425 = vmatprep.mubr.bf16.mxu0 0
      %1426 = vmatmul.mubr.bf16.gmra.mxu0 %v1154
      %v1427 = vpop.f32.mrf.mxu0
      %v1428 = vadd.f32 0.0, %v1427
      %v1429 = vpop.f32.mrf.mxu0
      %v1430 = vadd.f32 0.0, %v1429
      %v1431 = vpop.f32.mrf.mxu0
      %v1432 = vadd.f32 0.0, %v1431
      %v1433 = vpop.f32.mrf.mxu0
      %v1434 = vadd.f32 0.0, %v1433
      %1435 = vmatprep.mubr.bf16.mxu0 0
      %1436 = vmatmul.mubr.bf16.gmra.mxu0 %v1157
      %v1437 = vpop.f32.mrf.mxu0
      %v1438 = vadd.f32 0.0, %v1437
      %v1439 = vpop.f32.mrf.mxu0
      %v1440 = vadd.f32 0.0, %v1439
      %v1441 = vpop.f32.mrf.mxu0
      %v1442 = vadd.f32 0.0, %v1441
      %v1443 = vpop.f32.mrf.mxu0
      %v1444 = vadd.f32 0.0, %v1443
      %1445 = vmatprep.mubr.bf16.mxu0 0
      %1446 = vmatmul.mubr.bf16.gmra.mxu0 %v1160
      %v1447 = vpop.f32.mrf.mxu0
      %v1448 = vadd.f32 0.0, %v1447
      %v1449 = vpop.f32.mrf.mxu0
      %v1450 = vadd.f32 0.0, %v1449
      %v1451 = vpop.f32.mrf.mxu0
      %v1452 = vadd.f32 0.0, %v1451
      %v1453 = vpop.f32.mrf.mxu0
      %v1454 = vadd.f32 0.0, %v1453
      %1455 = vmatprep.mubr.bf16.mxu0 0
      %1456 = vmatmul.mubr.bf16.gmra.mxu0 %v1163
      %v1457 = vpop.f32.mrf.mxu0
      %v1458 = vadd.f32 0.0, %v1457
      %v1459 = vpop.f32.mrf.mxu0
      %v1460 = vadd.f32 0.0, %v1459
      %v1461 = vpop.f32.mrf.mxu0
      %v1462 = vadd.f32 0.0, %v1461
      %v1463 = vpop.f32.mrf.mxu0
      %v1464 = vadd.f32 0.0, %v1463
      %1465 = vmatprep.mubr.bf16.mxu0 0
      %1466 = vmatmul.mubr.bf16.gmra.mxu0 %v1166
      %v1467 = vpop.f32.mrf.mxu0
      %v1468 = vadd.f32 0.0, %v1467
      %v1469 = vpop.f32.mrf.mxu0
      %v1470 = vadd.f32 0.0, %v1469
      %v1471 = vpop.f32.mrf.mxu0
      %v1472 = vadd.f32 0.0, %v1471
      %v1473 = vpop.f32.mrf.mxu0
      %v1474 = vadd.f32 0.0, %v1473
      %1475 = vmatprep.mubr.bf16.mxu0 0
      %1476 = vmatmul.mubr.bf16.gmra.mxu0 %v1169
      %v1477 = vpop.f32.mrf.mxu0
      %v1478 = vadd.f32 0.0, %v1477
      %v1479 = vpop.f32.mrf.mxu0
      %v1480 = vadd.f32 0.0, %v1479
      %v1481 = vpop.f32.mrf.mxu0
      %v1482 = vadd.f32 0.0, %v1481
      %v1483 = vpop.f32.mrf.mxu0
      %v1484 = vadd.f32 0.0, %v1483
      %1485 = vmatprep.mubr.bf16.mxu0 0
      %1486 = vmatmul.mubr.bf16.gmra.mxu0 %v1172
      %v1487 = vpop.f32.mrf.mxu0
      %v1488 = vadd.f32 0.0, %v1487
      %v1489 = vpop.f32.mrf.mxu0
      %v1490 = vadd.f32 0.0, %v1489
      %v1491 = vpop.f32.mrf.mxu0
      %v1492 = vadd.f32 0.0, %v1491
      %v1493 = vpop.f32.mrf.mxu0
      %v1494 = vadd.f32 0.0, %v1493
      %1495 = vmatprep.mubr.bf16.mxu0 0
      %1496 = vmatmul.mubr.bf16.gmra.mxu0 %v1175
      %v1497 = vpop.f32.mrf.mxu0
      %v1498 = vadd.f32 0.0, %v1497
      %v1499 = vpop.f32.mrf.mxu0
      %v1500 = vadd.f32 0.0, %v1499
      %v1501 = vpop.f32.mrf.mxu0
      %v1502 = vadd.f32 0.0, %v1501
      %v1503 = vpop.f32.mrf.mxu0
      %v1504 = vadd.f32 0.0, %v1503
      %1505 = vmatprep.mubr.bf16.mxu0 0
      %1506 = vmatmul.mubr.bf16.gmra.mxu0 %v1178
      %v1507 = vpop.f32.mrf.mxu0
      %v1508 = vadd.f32 0.0, %v1507
      %v1509 = vpop.f32.mrf.mxu0
      %v1510 = vadd.f32 0.0, %v1509
      %v1511 = vpop.f32.mrf.mxu0
      %v1512 = vadd.f32 0.0, %v1511
      %v1513 = vpop.f32.mrf.mxu0
      %v1514 = vadd.f32 0.0, %v1513
      %1515 = vmatprep.mubr.bf16.mxu0 0
      %1516 = vmatmul.mubr.bf16.gmra.mxu0 %v1181
      %v1517 = vpop.f32.mrf.mxu0
      %v1518 = vadd.f32 0.0, %v1517
      %v1519 = vpop.f32.mrf.mxu0
      %v1520 = vadd.f32 0.0, %v1519
      %v1521 = vpop.f32.mrf.mxu0
      %v1522 = vpop.f32.mrf.mxu0
      %1523 = vdwg.mxu0
      %1524 = vst [vmem:[#allocation2] sm:$0xff] %v1218
      %1525 = vst [vmem:[#allocation2 + $0x8] sm:$0xff] %v1220
      %1526 = vst [vmem:[#allocation2 + $0x10] sm:$0xff] %v1222
      %1527 = vst [vmem:[#allocation2 + $0x18] sm:$0xff] %v1224
      %1528 = vst [vmem:[#allocation2 + $0x20] sm:$0xff] %v1228
      %1529 = vst [vmem:[#allocation2 + $0x28] sm:$0xff] %v1230
      %1530 = vst [vmem:[#allocation2 + $0x30] sm:$0xff] %v1232
      %1531 = vst [vmem:[#allocation2 + $0x38] sm:$0xff] %v1234
      %1532 = vst [vmem:[#allocation2 + $0x40] sm:$0xff] %v1238
      %1533 = vst [vmem:[#allocation2 + $0x48] sm:$0xff] %v1240
      %1534 = vst [vmem:[#allocation2 + $0x50] sm:$0xff] %v1242
      %1535 = vst [vmem:[#allocation2 + $0x58] sm:$0xff] %v1244
      %1536 = vst [vmem:[#allocation2 + $0x60] sm:$0xff] %v1248
      %1537 = vst [vmem:[#allocation2 + $0x68] sm:$0xff] %v1250
      %1538 = vst [vmem:[#allocation2 + $0x70] sm:$0xff] %v1252
      %1539 = vst [vmem:[#allocation2 + $0x78] sm:$0xff] %v1254
      %1540 = vst [vmem:[#allocation2 + $0x80] sm:$0xff] %v1258
      %1541 = vst [vmem:[#allocation2 + $0x88] sm:$0xff] %v1260
      %1542 = vst [vmem:[#allocation2 + $0x90] sm:$0xff] %v1262
      %1543 = vst [vmem:[#allocation2 + $0x98] sm:$0xff] %v1264
      %1544 = vst [vmem:[#allocation2 + $0xa0] sm:$0xff] %v1268
      %1545 = vst [vmem:[#allocation2 + $0xa8] sm:$0xff] %v1270
      %1546 = vst [vmem:[#allocation2 + $0xb0] sm:$0xff] %v1272
      %1547 = vst [vmem:[#allocation2 + $0xb8] sm:$0xff] %v1274
      %1548 = vst [vmem:[#allocation2 + $0xc0] sm:$0xff] %v1278
      %1549 = vst [vmem:[#allocation2 + $0xc8] sm:$0xff] %v1280
      %1550 = vst [vmem:[#allocation2 + $0xd0] sm:$0xff] %v1282
      %1551 = vst [vmem:[#allocation2 + $0xd8] sm:$0xff] %v1284
      %1552 = vst [vmem:[#allocation2 + $0xe0] sm:$0xff] %v1288
      %1553 = vst [vmem:[#allocation2 + $0xe8] sm:$0xff] %v1290
      %1554 = vst [vmem:[#allocation2 + $0xf0] sm:$0xff] %v1292
      %1555 = vst [vmem:[#allocation2 + $0xf8] sm:$0xff] %v1294
      %1556 = vst [vmem:[#allocation2 + $0x100] sm:$0xff] %v1298
      %1557 = vst [vmem:[#allocation2 + $0x108] sm:$0xff] %v1300
      %1558 = vst [vmem:[#allocation2 + $0x110] sm:$0xff] %v1302
      %1559 = vst [vmem:[#allocation2 + $0x118] sm:$0xff] %v1304
      %1560 = vst [vmem:[#allocation2 + $0x120] sm:$0xff] %v1308
      %1561 = vst [vmem:[#allocation2 + $0x128] sm:$0xff] %v1310
      %1562 = vst [vmem:[#allocation2 + $0x130] sm:$0xff] %v1312
      %1563 = vst [vmem:[#allocation2 + $0x138] sm:$0xff] %v1314
      %1564 = vst [vmem:[#allocation2 + $0x140] sm:$0xff] %v1318
      %1565 = vst [vmem:[#allocation2 + $0x148] sm:$0xff] %v1320
      %1566 = vst [vmem:[#allocation2 + $0x150] sm:$0xff] %v1322
      %1567 = vst [vmem:[#allocation2 + $0x158] sm:$0xff] %v1324
      %1568 = vst [vmem:[#allocation2 + $0x160] sm:$0xff] %v1328
      %1569 = vst [vmem:[#allocation2 + $0x168] sm:$0xff] %v1330
      %1570 = vst [vmem:[#allocation2 + $0x170] sm:$0xff] %v1332
      %1571 = vst [vmem:[#allocation2 + $0x178] sm:$0xff] %v1334
      %1572 = vst [vmem:[#allocation2 + $0x180] sm:$0xff] %v1338
      %1573 = vst [vmem:[#allocation2 + $0x188] sm:$0xff] %v1340
      %1574 = vst [vmem:[#allocation2 + $0x190] sm:$0xff] %v1342
      %1575 = vst [vmem:[#allocation2 + $0x198] sm:$0xff] %v1344
      %1576 = vst [vmem:[#allocation2 + $0x1a0] sm:$0xff] %v1348
      %1577 = vst [vmem:[#allocation2 + $0x1a8] sm:$0xff] %v1350
      %1578 = vst [vmem:[#allocation2 + $0x1b0] sm:$0xff] %v1352
      %1579 = vst [vmem:[#allocation2 + $0x1b8] sm:$0xff] %v1354
      %1580 = vst [vmem:[#allocation2 + $0x1c0] sm:$0xff] %v1358
      %1581 = vst [vmem:[#allocation2 + $0x1c8] sm:$0xff] %v1360
      %1582 = vst [vmem:[#allocation2 + $0x1d0] sm:$0xff] %v1362
      %1583 = vst [vmem:[#allocation2 + $0x1d8] sm:$0xff] %v1364
      %1584 = vst [vmem:[#allocation2 + $0x1e0] sm:$0xff] %v1368
      %1585 = vst [vmem:[#allocation2 + $0x1e8] sm:$0xff] %v1370
      %1586 = vst [vmem:[#allocation2 + $0x1f0] sm:$0xff] %v1372
      %1587 = vst [vmem:[#allocation2 + $0x1f8] sm:$0xff] %v1374
      %1588 = vst [vmem:[#allocation2 + $0x200] sm:$0xff] %v1378
      %1589 = vst [vmem:[#allocation2 + $0x208] sm:$0xff] %v1380
      %1590 = vst [vmem:[#allocation2 + $0x210] sm:$0xff] %v1382
      %1591 = vst [vmem:[#allocation2 + $0x218] sm:$0xff] %v1384
      %1592 = vst [vmem:[#allocation2 + $0x220] sm:$0xff] %v1388
      %1593 = vst [vmem:[#allocation2 + $0x228] sm:$0xff] %v1390
      %1594 = vst [vmem:[#allocation2 + $0x230] sm:$0xff] %v1392
      %1595 = vst [vmem:[#allocation2 + $0x238] sm:$0xff] %v1394
      %1596 = vst [vmem:[#allocation2 + $0x240] sm:$0xff] %v1398
      %1597 = vst [vmem:[#allocation2 + $0x248] sm:$0xff] %v1400
      %1598 = vst [vmem:[#allocation2 + $0x250] sm:$0xff] %v1402
      %1599 = vst [vmem:[#allocation2 + $0x258] sm:$0xff] %v1404
      %1600 = vst [vmem:[#allocation2 + $0x260] sm:$0xff] %v1408
      %1601 = vst [vmem:[#allocation2 + $0x268] sm:$0xff] %v1410
      %1602 = vst [vmem:[#allocation2 + $0x270] sm:$0xff] %v1412
      %1603 = vst [vmem:[#allocation2 + $0x278] sm:$0xff] %v1414
      %1604 = vst [vmem:[#allocation2 + $0x280] sm:$0xff] %v1418
      %1605 = vst [vmem:[#allocation2 + $0x288] sm:$0xff] %v1420
      %1606 = vst [vmem:[#allocation2 + $0x290] sm:$0xff] %v1422
      %1607 = vst [vmem:[#allocation2 + $0x298] sm:$0xff] %v1424
      %1608 = vst [vmem:[#allocation2 + $0x2a0] sm:$0xff] %v1428
      %1609 = vst [vmem:[#allocation2 + $0x2a8] sm:$0xff] %v1430
      %1610 = vst [vmem:[#allocation2 + $0x2b0] sm:$0xff] %v1432
      %1611 = vst [vmem:[#allocation2 + $0x2b8] sm:$0xff] %v1434
      %1612 = vst [vmem:[#allocation2 + $0x2c0] sm:$0xff] %v1438
      %1613 = vst [vmem:[#allocation2 + $0x2c8] sm:$0xff] %v1440
      %1614 = vst [vmem:[#allocation2 + $0x2d0] sm:$0xff] %v1442
      %1615 = vst [vmem:[#allocation2 + $0x2d8] sm:$0xff] %v1444
      %1616 = vst [vmem:[#allocation2 + $0x2e0] sm:$0xff] %v1448
      %1617 = vst [vmem:[#allocation2 + $0x2e8] sm:$0xff] %v1450
      %1618 = vst [vmem:[#allocation2 + $0x2f0] sm:$0xff] %v1452
      %1619 = vst [vmem:[#allocation2 + $0x2f8] sm:$0xff] %v1454
      %1620 = vst [vmem:[#allocation2 + $0x300] sm:$0xff] %v1458
      %1621 = vst [vmem:[#allocation2 + $0x308] sm:$0xff] %v1460
      %1622 = vst [vmem:[#allocation2 + $0x310] sm:$0xff] %v1462
      %1623 = vst [vmem:[#allocation2 + $0x318] sm:$0xff] %v1464
      %1624 = vst [vmem:[#allocation2 + $0x320] sm:$0xff] %v1468
      %1625 = vst [vmem:[#allocation2 + $0x328] sm:$0xff] %v1470
      %1626 = vst [vmem:[#allocation2 + $0x330] sm:$0xff] %v1472
      %1627 = vst [vmem:[#allocation2 + $0x338] sm:$0xff] %v1474
      %1628 = vst [vmem:[#allocation2 + $0x340] sm:$0xff] %v1478
      %1629 = vst [vmem:[#allocation2 + $0x348] sm:$0xff] %v1480
      %1630 = vst [vmem:[#allocation2 + $0x350] sm:$0xff] %v1482
      %1631 = vst [vmem:[#allocation2 + $0x358] sm:$0xff] %v1484
      %1632 = vst [vmem:[#allocation2 + $0x360] sm:$0xff] %v1488
      %1633 = vst [vmem:[#allocation2 + $0x368] sm:$0xff] %v1490
      %1634 = vst [vmem:[#allocation2 + $0x370] sm:$0xff] %v1492
      %1635 = vst [vmem:[#allocation2 + $0x378] sm:$0xff] %v1494
      %1636 = vst [vmem:[#allocation2 + $0x380] sm:$0xff] %v1498
      %1637 = vst [vmem:[#allocation2 + $0x388] sm:$0xff] %v1500
      %1638 = vst [vmem:[#allocation2 + $0x390] sm:$0xff] %v1502
      %1639 = vst [vmem:[#allocation2 + $0x398] sm:$0xff] %v1504
      %1640 = vst [vmem:[#allocation2 + $0x3a0] sm:$0xff] %v1508
      %1641 = vst [vmem:[#allocation2 + $0x3a8] sm:$0xff] %v1510
      %1642 = vst [vmem:[#allocation2 + $0x3b0] sm:$0xff] %v1512
      %1643 = vst [vmem:[#allocation2 + $0x3b8] sm:$0xff] %v1514
      %1644 = vst [vmem:[#allocation2 + $0x3c0] sm:$0xf] %v1518
      %1645 = vst [vmem:[#allocation2 + $0x3c8] sm:$0xf] %v1520
      loop: start=0, step=1, limit=11
      $region73: #{tf_block.3} parent=71 // loop_pre_header
        _
      $region74: #{tf_block.3} parent=71 // loop_header
        %s1647 = sphi 0, %s1651
        %p1648 = scmp.ge.s32.totalorder %s1647, 11
        %v1652 = vphi %v838, %v1674
        %v1653 = vphi %v840, %v1675
        %v1654 = vphi %v842, %v1676
        %v1655 = vphi %v844, %v1677
        %v1656 = vphi %v848, %v1678
        %v1657 = vphi %v850, %v1679
        %v1658 = vphi %v852, %v1680
        %v1659 = vphi %v854, %v1681
        %v1660 = vphi %v858, %v1682
        %v1661 = vphi %v860, %v1683
        %v1662 = vphi %v862, %v1684
        %v1663 = vphi %v864, %v1685
        %v1664 = vphi %v868, %v1686
        %v1665 = vphi %v870, %v1687
        %v1666 = vphi %v872, %v1688
        %v1667 = vphi %v874, %v1689
      $region75: #{tf_block.3} parent=71 // loop_header_branch
        %1650 = sbr.rel (%p1648) target = $region79
      $region76: #{tf_block.3} parent=71 // loop_body
        loop: start=0, step=1, limit=11
        $region80: #{tf_block.3} parent=76 // loop_pre_header
          _
        $region81: #{tf_block.3} parent=76 // loop_header
          %s1669 = sphi 0, %s1673
          %p1670 = scmp.ge.s32.totalorder %s1669, 11
          %v1674 = vphi %v1652, %v1843
          %v1675 = vphi %v1653, %v1844
          %v1676 = vphi %v1654, %v1845
          %v1677 = vphi %v1655, %v1846
          %v1678 = vphi %v1656, %v1847
          %v1679 = vphi %v1657, %v1848
          %v1680 = vphi %v1658, %v1849
          %v1681 = vphi %v1659, %v1850
          %v1682 = vphi %v1660, %v1851
          %v1683 = vphi %v1661, %v1852
          %v1684 = vphi %v1662, %v1853
          %v1685 = vphi %v1663, %v1854
          %v1686 = vphi %v1664, %v1855
          %v1687 = vphi %v1665, %v1856
          %v1688 = vphi %v1666, %v1857
          %v1689 = vphi %v1667, %v1858
        $region82: #{tf_block.3} parent=76 // loop_header_branch
          %1672 = sbr.rel (%p1670) target = $region86
        $region83: #{tf_block.3} parent=76 // loop_body
          %s1690 = smul.u32 %s1647, 11
          %s1691 = sadd.s32 %s1690, %s1669
          %s1692 = ssub.s32 %s1647, 5
          %s1693 = smul.u32 %s1692, 16
          %s1694 = ssub.s32 %s1669, 5
          %s1695 = sadd.s32 %s1693, %s1694
          %p1696 = scmp.gt.s32.totalorder %s1695, 0
          %s1697 = ssub.s32 256, %s1695
          %s1698 = ssub.s32 0, %s1695
          %s1699 = scalar_select %p1696, %s1697, %s1698
          %v1700 = vld [vmem:[#allocation3] sm:$0xff]
          %v1701 = vld [vmem:[#allocation3 + $0x8] sm:$0xff]
          %v1702 = vld [vmem:[#allocation3 + $0x10] sm:$0xff]
          %v1703 = vld [vmem:[#allocation3 + $0x18] sm:$0xff]
          %s1704 = sand.u32 %s1699, 255
          %s1705 = sand.u32 %s1704, 127
          %s1706 = sshrl.u32 %s1704, 7
          %1707 = vrot.lane.b32.xlu0 %v1700, %s1705
          %v1708 = vpop.permute.xlu0 %1707
          %1709 = vrot.lane.b32.xlu0 %v1702, %s1705
          %v1710 = vpop.permute.xlu0 %1709
          %1711 = vrot.lane.b32.xlu0 %v1701, %s1705
          %v1712 = vpop.permute.xlu0 %1711
          %1713 = vrot.lane.b32.xlu0 %v1703, %s1705
          %v1714 = vpop.permute.xlu0 %1713
          %v1715 = vstv %s1705
          %v1716 = vlaneseq
          %v1717 = vand.u32 %v1716, 127
          %vm1718 = vcmp.lt.s32.totalorder %v1717, %v1715
          %v1719 = vsel %vm1718, %v1708, %v1712
          %v1720 = vsel %vm1718, %v1710, %v1714
          %v1721 = vsel %vm1718, %v1712, %v1708
          %v1722 = vsel %vm1718, %v1714, %v1710
          %s1723 = sand.u32 %s1706, 1
          %v1724 = vstv %s1723
          %vm1725 = vcmp.ne.s32.totalorder %v1724, 0
          %v1726 = vsel %vm1725, %v1719, %v1721
          %v1727 = vsel %vm1725, %v1721, %v1719
          %v1728 = vsel %vm1725, %v1720, %v1722
          %v1729 = vsel %vm1725, %v1722, %v1720
          %s1730 = sshra.s32 %s1691, 3
          %s1731 = sand.u32 %s1691, 7
          %s1732 = sshra.s32 %s1691, 3
          %s1733 = sand.u32 %s1691, 7
          %s1734 = smul.u32 %s1730, 2
          %s1735 = smul.u32 %s1734, 8
          %s1736 = sadd.s32 %s1735, %s1733
          %s1737 = scalar_lea.vmem %s4, %s1736
          %v1738 = vld [vmem:[%s1737] ss:$8 sm:$0x3]
          %s1739 = smul.u32 %s1691, 4
          %s1740 = sshra.s32 %s1739, 3
          %s1741 = sand.u32 %s1739, 7
          %s1742 = sshra.s32 %s1739, 3
          %s1743 = sand.u32 %s1739, 7
          %s1744 = smul.u32 %s1740, 2
          %s1745 = smul.u32 %s1744, 8
          %s1746 = sadd.s32 %s1745, %s1743
          %s1747 = scalar_lea.vmem [#allocation2], %s1746
          %v1748 = vld [vmem:[%s1747] ss:$8 sm:$0x3]
          %v1749 = vmul.f32 %v1748, %v1738
          %v1751 = vlaneseq
          %v1752 = vshrl.u32 %v1751, 7
          %v1753 = vsub.s32 0, %v1752
          %v1754 = vrot.slane %v1749, %v1753
          %v1755 = vlaneseq
          %v1756 = vshrl.u32 %v1755, 7
          %v1757 = vsub.s32 1, %v1756
          %v1758 = vrot.slane %v1749, %v1757
          %v1761 = vmul.f32 %v1754, %v1726
          %v1762 = vmul.f32 %v1758, %v1727
          %v1763 = vmul.f32 %v1754, %v1728
          %v1764 = vmul.f32 %v1758, %v1729
          %s1765 = sadd.s32 %s1739, 1
          %s1766 = sshra.s32 %s1765, 3
          %s1767 = sand.u32 %s1765, 7
          %s1768 = sshra.s32 %s1765, 3
          %s1769 = sand.u32 %s1765, 7
          %s1770 = smul.u32 %s1766, 2
          %s1771 = smul.u32 %s1770, 8
          %s1772 = sadd.s32 %s1771, %s1769
          %s1773 = scalar_lea.vmem [#allocation2], %s1772
          %v1774 = vld [vmem:[%s1773] ss:$8 sm:$0x3]
          %v1775 = vmul.f32 %v1774, %v1738
          %v1777 = vlaneseq
          %v1778 = vshrl.u32 %v1777, 7
          %v1779 = vsub.s32 0, %v1778
          %v1780 = vrot.slane %v1775, %v1779
          %v1781 = vlaneseq
          %v1782 = vshrl.u32 %v1781, 7
          %v1783 = vsub.s32 1, %v1782
          %v1784 = vrot.slane %v1775, %v1783
          %v1787 = vmul.f32 %v1780, %v1726
          %v1788 = vmul.f32 %v1784, %v1727
          %v1789 = vmul.f32 %v1780, %v1728
          %v1790 = vmul.f32 %v1784, %v1729
          %s1791 = sadd.s32 %s1739, 2
          %s1792 = sshra.s32 %s1791, 3
          %s1793 = sand.u32 %s1791, 7
          %s1794 = sshra.s32 %s1791, 3
          %s1795 = sand.u32 %s1791, 7
          %s1796 = smul.u32 %s1792, 2
          %s1797 = smul.u32 %s1796, 8
          %s1798 = sadd.s32 %s1797, %s1795
          %s1799 = scalar_lea.vmem [#allocation2], %s1798
          %v1800 = vld [vmem:[%s1799] ss:$8 sm:$0x3]
          %v1801 = vmul.f32 %v1800, %v1738
          %v1803 = vlaneseq
          %v1804 = vshrl.u32 %v1803, 7
          %v1805 = vsub.s32 0, %v1804
          %v1806 = vrot.slane %v1801, %v1805
          %v1807 = vlaneseq
          %v1808 = vshrl.u32 %v1807, 7
          %v1809 = vsub.s32 1, %v1808
          %v1810 = vrot.slane %v1801, %v1809
          %v1813 = vmul.f32 %v1806, %v1726
          %v1814 = vmul.f32 %v1810, %v1727
          %v1815 = vmul.f32 %v1806, %v1728
          %v1816 = vmul.f32 %v1810, %v1729
          %s1817 = sadd.s32 %s1739, 3
          %s1818 = sshra.s32 %s1817, 3
          %s1819 = sand.u32 %s1817, 7
          %s1820 = sshra.s32 %s1817, 3
          %s1821 = sand.u32 %s1817, 7
          %s1822 = smul.u32 %s1818, 2
          %s1823 = smul.u32 %s1822, 8
          %s1824 = sadd.s32 %s1823, %s1821
          %s1825 = scalar_lea.vmem [#allocation2], %s1824
          %v1826 = vld [vmem:[%s1825] ss:$8 sm:$0x3]
          %v1827 = vmul.f32 %v1826, %v1738
          %v1829 = vlaneseq
          %v1830 = vshrl.u32 %v1829, 7
          %v1831 = vsub.s32 0, %v1830
          %v1832 = vrot.slane %v1827, %v1831
          %v1833 = vlaneseq
          %v1834 = vshrl.u32 %v1833, 7
          %v1835 = vsub.s32 1, %v1834
          %v1836 = vrot.slane %v1827, %v1835
          %v1839 = vmul.f32 %v1832, %v1726
          %v1840 = vmul.f32 %v1836, %v1727
          %v1841 = vmul.f32 %v1832, %v1728
          %v1842 = vmul.f32 %v1836, %v1729
          %v1843 = vadd.f32 %v1674, %v1761
          %v1844 = vadd.f32 %v1675, %v1762
          %v1845 = vadd.f32 %v1676, %v1763
          %v1846 = vadd.f32 %v1677, %v1764
          %v1847 = vadd.f32 %v1678, %v1787
          %v1848 = vadd.f32 %v1679, %v1788
          %v1849 = vadd.f32 %v1680, %v1789
          %v1850 = vadd.f32 %v1681, %v1790
          %v1851 = vadd.f32 %v1682, %v1813
          %v1852 = vadd.f32 %v1683, %v1814
          %v1853 = vadd.f32 %v1684, %v1815
          %v1854 = vadd.f32 %v1685, %v1816
          %v1855 = vadd.f32 %v1686, %v1839
          %v1856 = vadd.f32 %v1687, %v1840
          %v1857 = vadd.f32 %v1688, %v1841
          %v1858 = vadd.f32 %v1689, %v1842
        $region84: #{tf_block.3} parent=76 // loop_footer
          %s1673 = sadd.s32 1, %s1669
        $region85: #{tf_block.3} parent=76 // loop_footer_branch
          %1668 = sbr.rel target = $region81
        $region86: #{tf_block.3} parent=76 // loop_exit
          _
      $region77: #{tf_block.3} parent=71 // loop_footer
        %s1651 = sadd.s32 1, %s1647
      $region78: #{tf_block.3} parent=71 // loop_footer_branch
        %1646 = sbr.rel target = $region74
      $region79: #{tf_block.3} parent=71 // loop_exit
        _
      %v1859 = vld [vmem:[%s455] sm:$0xff]
      %v1860 = vld [vmem:[%s455 + $0x8] sm:$0xff]
      %v1861 = vld [vmem:[%s455 + $0x10] sm:$0xff]
      %v1862 = vld [vmem:[%s455 + $0x18] sm:$0xff]
      %v1863 = vld [vmem:[%s455 + $0x20] sm:$0xff]
      %v1864 = vld [vmem:[%s455 + $0x28] sm:$0xff]
      %v1865 = vld [vmem:[%s455 + $0x30] sm:$0xff]
      %v1866 = vld [vmem:[%s455 + $0x38] sm:$0xff]
      %v1867 = vld [vmem:[%s455 + $0x40] sm:$0xff]
      %v1868 = vld [vmem:[%s455 + $0x48] sm:$0xff]
      %v1869 = vld [vmem:[%s455 + $0x50] sm:$0xff]
      %v1870 = vld [vmem:[%s455 + $0x58] sm:$0xff]
      %v1871 = vld [vmem:[%s455 + $0x60] sm:$0xff]
      %v1872 = vld [vmem:[%s455 + $0x68] sm:$0xff]
      %v1873 = vld [vmem:[%s455 + $0x70] sm:$0xff]
      %v1874 = vld [vmem:[%s455 + $0x78] sm:$0xff]
      %v1875 = vadd.f32 %v1859, %v1652
      %v1876 = vadd.f32 %v1860, %v1653
      %v1877 = vadd.f32 %v1861, %v1654
      %v1878 = vadd.f32 %v1862, %v1655
      %v1879 = vadd.f32 %v1863, %v1656
      %v1880 = vadd.f32 %v1864, %v1657
      %v1881 = vadd.f32 %v1865, %v1658
      %v1882 = vadd.f32 %v1866, %v1659
      %v1883 = vadd.f32 %v1867, %v1660
      %v1884 = vadd.f32 %v1868, %v1661
      %v1885 = vadd.f32 %v1869, %v1662
      %v1886 = vadd.f32 %v1870, %v1663
      %v1887 = vadd.f32 %v1871, %v1664
      %v1888 = vadd.f32 %v1872, %v1665
      %v1889 = vadd.f32 %v1873, %v1666
      %v1890 = vadd.f32 %v1874, %v1667
      %v1891 = vld [vmem:[%s6] sm:$0xf]
      %v1892 = vld [vmem:[%s6 + $0x4] sm:$0xf]
      %v1893 = vpack.c.bf16 %v1877, %v1875
      %v1894 = vpack.c.bf16 %v1878, %v1876
      %v1895 = vpack.c.bf16 %v1881, %v1879
      %v1896 = vpack.c.bf16 %v1882, %v1880
      %v1897 = vpack.c.bf16 %v1885, %v1883
      %v1898 = vpack.c.bf16 %v1886, %v1884
      %v1899 = vpack.c.bf16 %v1889, %v1887
      %v1900 = vpack.c.bf16 %v1890, %v1888
      %v1901 = vld [vmem:[%s7] sm:$0xff]
      %v1902 = vld [vmem:[%s7 + $0x8] sm:$0xff]
      %1904 = vset.pattern.permute.xlu0 0
      %1905 = vperm.xlu0 %1904, %v1901
      %v1906 = vpop.permute.xlu0 %1905
      %1909 = vset.pattern.permute.xlu0 0
      %1910 = vperm.xlu0 %1909, %v1902
      %v1911 = vpop.permute.xlu0 %1910
      %v1915 = vunpack.c.l.b16 %v1891
      %v1916 = vunpack.c.l.b16 %v1892
      %v1917 = vpack.c.b16 %v1916, %v1915
      %v1919 = vsel %vm790, %v1917, 0
      %1921 = vmatprep.subr.bf16.mxu0 0
      %1922 = vmatpush1.bf16.msra.mxu0 0
      %1923 = vmatprep.subr.bf16.mxu0 0
      %1924 = vmatpush1.bf16.msra.mxu0 0
      %1925 = vmatprep.subr.bf16.mxu0 0
      %1926 = vmatpush1.bf16.msra.mxu0 0
      %1927 = vmatprep.subr.bf16.mxu0 0
      %1928 = vmatpush1.bf16.msra.mxu0 0
      %1929 = vmatprep.subr.bf16.mxu0 %v1900
      %1930 = vmatpush1.bf16.msra.mxu0 %v1899
      %1931 = vmatprep.subr.bf16.mxu0 %v1898
      %1932 = vmatpush1.bf16.msra.mxu0 %v1897
      %1933 = vmatprep.subr.bf16.mxu0 %v1896
      %1934 = vmatpush1.bf16.msra.mxu0 %v1895
      %1935 = vmatprep.subr.bf16.mxu0 %v1894
      %1936 = vmatpush1.bf16.msra.mxu0 %v1893
      %1937 = vmatprep.subr.bf16.mxu0 0
      %1938 = vmatpush2.bf16.msra.mxu0 0
      %1939 = vmatprep.subr.bf16.mxu0 0
      %1940 = vmatpush2.bf16.msra.mxu0 0
      %1941 = vmatprep.subr.bf16.mxu0 0
      %1942 = vmatpush2.bf16.msra.mxu0 0
      %1943 = vmatprep.subr.bf16.mxu0 0
      %1944 = vmatpush2.bf16.msra.mxu0 0
      %1945 = vmatprep.subr.bf16.mxu0 0
      %1946 = vmatpush2.bf16.msra.mxu0 0
      %1947 = vmatprep.subr.bf16.mxu0 0
      %1948 = vmatpush2.bf16.msra.mxu0 0
      %1949 = vmatprep.subr.bf16.mxu0 0
      %1950 = vmatpush2.bf16.msra.mxu0 0
      %1951 = vmatprep.subr.bf16.mxu0 0
      %1952 = vmatpush2.bf16.msra.mxu0 0
      %1953 = vmatprep.mubr.bf16.mxu0 0
      %1954 = vmatmul.mubr.bf16.gmra.mxu0 %v1919
      %v1955 = vpop.f32.mrf.mxu0
      %v1956 = vadd.f32 %v1906, %v1955
      %v1957 = vpop.f32.mrf.mxu0
      %v1958 = vadd.f32 %v1906, %v1957
      %v1959 = vpop.f32.mrf.mxu0
      %v1960 = vadd.f32 %v1911, %v1959
      %v1961 = vpop.f32.mrf.mxu0
      %v1962 = vadd.f32 %v1911, %v1961
      %1963 = vdwg.mxu0
      %1964 = vrot.lane.b32.xlu0 %v1956, 17
      %v1965 = vpop.permute.xlu0 %1964
      %1966 = vrot.lane.b32.xlu0 %v1960, 17
      %v1967 = vpop.permute.xlu0 %1966
      %1968 = vrot.lane.b32.xlu0 %v1958, 17
      %v1969 = vpop.permute.xlu0 %1968
      %1970 = vrot.lane.b32.xlu0 %v1962, 17
      %v1971 = vpop.permute.xlu0 %1970
      %v1972 = vlaneseq
      %v1973 = vand.u32 %v1972, 127
      %vm1974 = vcmp.lt.s32.totalorder %v1973, 17
      %v1975 = vsel %vm1974, %v1965, %v1969
      %v1976 = vsel %vm1974, %v1967, %v1971
      %v1977 = vsel %vm1974, %v1969, %v1965
      %v1978 = vsel %vm1974, %v1971, %v1967
      %v1979 = vld [vmem:[%s12] ss:$8 sm:$0x3]
      %v1981 = vlaneseq
      %v1982 = vshrl.u32 %v1981, 7
      %v1983 = vsub.s32 0, %v1982
      %v1984 = vrot.slane %v1979, %v1983
      %v1985 = vlaneseq
      %v1986 = vshrl.u32 %v1985, 7
      %v1987 = vsub.s32 1, %v1986
      %v1988 = vrot.slane %v1979, %v1987
      %v1991 = vmul.f32 %v1977, %v1984
      %v1992 = vmul.f32 %v1975, %v1988
      %v1993 = vmul.f32 %v1978, %v1984
      %v1994 = vmul.f32 %v1976, %v1988
      %v1995 = vpack.c.bf16 %v1993, %v1991
      %v1996 = vpack.c.bf16 %v1994, %v1992
      %v1999 = vunpack.c.l.b16 %v1995
      %v2000 = vunpack.c.l.b16 %v1996
      %v2001 = vunpack.c.h.b16 %v1995
      %v2002 = vunpack.c.h.b16 %v1996
      %v2003 = vpack.c.b16 %v2000, %v1999
      %v2004 = vpack.c.b16 %v2002, %v2001
      %2007 = vst [vmem:[#allocation4] sm:$0xff] %v2003
      %2008 = vst [vmem:[#allocation4 + $0x8] sm:$0xff] %v2004
      %2009 = vrot.lane.b32.xlu0 %v1956, 16
      %v2010 = vpop.permute.xlu0 %2009
      %2011 = vrot.lane.b32.xlu0 %v1960, 16
      %v2012 = vpop.permute.xlu0 %2011
      %2013 = vrot.lane.b32.xlu0 %v1958, 16
      %v2014 = vpop.permute.xlu0 %2013
      %2015 = vrot.lane.b32.xlu0 %v1962, 16
      %v2016 = vpop.permute.xlu0 %2015
      %vm2017 = vcmp.lt.s32.totalorder %v1973, 16
      %v2018 = vsel %vm2017, %v2010, %v2014
      %v2019 = vsel %vm2017, %v2012, %v2016
      %v2020 = vsel %vm2017, %v2014, %v2010
      %v2021 = vsel %vm2017, %v2016, %v2012
      %s2022 = scalar_lea.vmem %s12, 1
      %v2023 = vld [vmem:[%s2022] ss:$8 sm:$0x3]
      %v2025 = vlaneseq
      %v2026 = vshrl.u32 %v2025, 7
      %v2027 = vsub.s32 0, %v2026
      %v2028 = vrot.slane %v2023, %v2027
      %v2029 = vlaneseq
      %v2030 = vshrl.u32 %v2029, 7
      %v2031 = vsub.s32 1, %v2030
      %v2032 = vrot.slane %v2023, %v2031
      %v2035 = vmul.f32 %v2020, %v2028
      %v2036 = vmul.f32 %v2018, %v2032
      %v2037 = vmul.f32 %v2021, %v2028
      %v2038 = vmul.f32 %v2019, %v2032
      %v2039 = vpack.c.bf16 %v2037, %v2035
      %v2040 = vpack.c.bf16 %v2038, %v2036
      %v2043 = vunpack.c.l.b16 %v2039
      %v2044 = vunpack.c.l.b16 %v2040
      %v2045 = vunpack.c.h.b16 %v2039
      %v2046 = vunpack.c.h.b16 %v2040
      %v2047 = vpack.c.b16 %v2044, %v2043
      %v2048 = vpack.c.b16 %v2046, %v2045
      %2051 = vst [vmem:[#allocation4 + $0x10] sm:$0xff] %v2047
      %2052 = vst [vmem:[#allocation4 + $0x18] sm:$0xff] %v2048
      %2053 = vrot.lane.b32.xlu0 %v1956, 15
      %v2054 = vpop.permute.xlu0 %2053
      %2055 = vrot.lane.b32.xlu0 %v1960, 15
      %v2056 = vpop.permute.xlu0 %2055
      %2057 = vrot.lane.b32.xlu0 %v1958, 15
      %v2058 = vpop.permute.xlu0 %2057
      %2059 = vrot.lane.b32.xlu0 %v1962, 15
      %v2060 = vpop.permute.xlu0 %2059
      %vm2061 = vcmp.lt.s32.totalorder %v1973, 15
      %v2062 = vsel %vm2061, %v2054, %v2058
      %v2063 = vsel %vm2061, %v2056, %v2060
      %v2064 = vsel %vm2061, %v2058, %v2054
      %v2065 = vsel %vm2061, %v2060, %v2056
      %s2066 = scalar_lea.vmem %s12, 2
      %v2067 = vld [vmem:[%s2066] ss:$8 sm:$0x3]
      %v2069 = vlaneseq
      %v2070 = vshrl.u32 %v2069, 7
      %v2071 = vsub.s32 0, %v2070
      %v2072 = vrot.slane %v2067, %v2071
      %v2073 = vlaneseq
      %v2074 = vshrl.u32 %v2073, 7
      %v2075 = vsub.s32 1, %v2074
      %v2076 = vrot.slane %v2067, %v2075
      %v2079 = vmul.f32 %v2064, %v2072
      %v2080 = vmul.f32 %v2062, %v2076
      %v2081 = vmul.f32 %v2065, %v2072
      %v2082 = vmul.f32 %v2063, %v2076
      %v2083 = vpack.c.bf16 %v2081, %v2079
      %v2084 = vpack.c.bf16 %v2082, %v2080
      %v2087 = vunpack.c.l.b16 %v2083
      %v2088 = vunpack.c.l.b16 %v2084
      %v2089 = vunpack.c.h.b16 %v2083
      %v2090 = vunpack.c.h.b16 %v2084
      %v2091 = vpack.c.b16 %v2088, %v2087
      %v2092 = vpack.c.b16 %v2090, %v2089
      %2095 = vst [vmem:[#allocation4 + $0x20] sm:$0xff] %v2091
      %2096 = vst [vmem:[#allocation4 + $0x28] sm:$0xff] %v2092
      %2097 = vrot.lane.b32.xlu0 %v1956, 1
      %v2098 = vpop.permute.xlu0 %2097
      %2099 = vrot.lane.b32.xlu0 %v1960, 1
      %v2100 = vpop.permute.xlu0 %2099
      %2101 = vrot.lane.b32.xlu0 %v1958, 1
      %v2102 = vpop.permute.xlu0 %2101
      %2103 = vrot.lane.b32.xlu0 %v1962, 1
      %v2104 = vpop.permute.xlu0 %2103
      %vm2105 = vcmp.lt.s32.totalorder %v1973, 1
      %v2106 = vsel %vm2105, %v2098, %v2102
      %v2107 = vsel %vm2105, %v2100, %v2104
      %v2108 = vsel %vm2105, %v2102, %v2098
      %v2109 = vsel %vm2105, %v2104, %v2100
      %s2110 = scalar_lea.vmem %s12, 3
      %v2111 = vld [vmem:[%s2110] ss:$8 sm:$0x3]
      %v2113 = vlaneseq
      %v2114 = vshrl.u32 %v2113, 7
      %v2115 = vsub.s32 0, %v2114
      %v2116 = vrot.slane %v2111, %v2115
      %v2117 = vlaneseq
      %v2118 = vshrl.u32 %v2117, 7
      %v2119 = vsub.s32 1, %v2118
      %v2120 = vrot.slane %v2111, %v2119
      %v2123 = vmul.f32 %v2108, %v2116
      %v2124 = vmul.f32 %v2106, %v2120
      %v2125 = vmul.f32 %v2109, %v2116
      %v2126 = vmul.f32 %v2107, %v2120
      %v2127 = vpack.c.bf16 %v2125, %v2123
      %v2128 = vpack.c.bf16 %v2126, %v2124
      %v2131 = vunpack.c.l.b16 %v2127
      %v2132 = vunpack.c.l.b16 %v2128
      %v2133 = vunpack.c.h.b16 %v2127
      %v2134 = vunpack.c.h.b16 %v2128
      %v2135 = vpack.c.b16 %v2132, %v2131
      %v2136 = vpack.c.b16 %v2134, %v2133
      %2139 = vst [vmem:[#allocation4 + $0x30] sm:$0xff] %v2135
      %2140 = vst [vmem:[#allocation4 + $0x38] sm:$0xff] %v2136
      %s2141 = scalar_lea.vmem %s12, 4
      %v2142 = vld [vmem:[%s2141] ss:$8 sm:$0x3]
      %v2144 = vlaneseq
      %v2145 = vshrl.u32 %v2144, 7
      %v2146 = vsub.s32 0, %v2145
      %v2147 = vrot.slane %v2142, %v2146
      %v2148 = vlaneseq
      %v2149 = vshrl.u32 %v2148, 7
      %v2150 = vsub.s32 1, %v2149
      %v2151 = vrot.slane %v2142, %v2150
      %v2154 = vmul.f32 %v1956, %v2147
      %v2155 = vmul.f32 %v1958, %v2151
      %v2156 = vmul.f32 %v1960, %v2147
      %v2157 = vmul.f32 %v1962, %v2151
      %v2158 = vpack.c.bf16 %v2156, %v2154
      %v2159 = vpack.c.bf16 %v2157, %v2155
      %v2162 = vunpack.c.l.b16 %v2158
      %v2163 = vunpack.c.l.b16 %v2159
      %v2164 = vunpack.c.h.b16 %v2158
      %v2165 = vunpack.c.h.b16 %v2159
      %v2166 = vpack.c.b16 %v2163, %v2162
      %v2167 = vpack.c.b16 %v2165, %v2164
      %2170 = vst [vmem:[#allocation4 + $0x40] sm:$0xff] %v2166
      %2171 = vst [vmem:[#allocation4 + $0x48] sm:$0xff] %v2167
      %2172 = vrot.lane.b32.xlu0 %v1956, 127
      %v2173 = vpop.permute.xlu0 %2172
      %2174 = vrot.lane.b32.xlu0 %v1960, 127
      %v2175 = vpop.permute.xlu0 %2174
      %2176 = vrot.lane.b32.xlu0 %v1958, 127
      %v2177 = vpop.permute.xlu0 %2176
      %2178 = vrot.lane.b32.xlu0 %v1962, 127
      %v2179 = vpop.permute.xlu0 %2178
      %vm2180 = vcmp.lt.s32.totalorder %v1973, 127
      %v2181 = vsel %vm2180, %v2173, %v2177
      %v2182 = vsel %vm2180, %v2175, %v2179
      %v2183 = vsel %vm2180, %v2177, %v2173
      %v2184 = vsel %vm2180, %v2179, %v2175
      %s2185 = scalar_lea.vmem %s12, 5
      %v2186 = vld [vmem:[%s2185] ss:$8 sm:$0x3]
      %v2188 = vlaneseq
      %v2189 = vshrl.u32 %v2188, 7
      %v2190 = vsub.s32 0, %v2189
      %v2191 = vrot.slane %v2186, %v2190
      %v2192 = vlaneseq
      %v2193 = vshrl.u32 %v2192, 7
      %v2194 = vsub.s32 1, %v2193
      %v2195 = vrot.slane %v2186, %v2194
      %v2198 = vmul.f32 %v2181, %v2191
      %v2199 = vmul.f32 %v2183, %v2195
      %v2200 = vmul.f32 %v2182, %v2191
      %v2201 = vmul.f32 %v2184, %v2195
      %v2202 = vpack.c.bf16 %v2200, %v2198
      %v2203 = vpack.c.bf16 %v2201, %v2199
      %v2206 = vunpack.c.l.b16 %v2202
      %v2207 = vunpack.c.l.b16 %v2203
      %v2208 = vunpack.c.h.b16 %v2202
      %v2209 = vunpack.c.h.b16 %v2203
      %v2210 = vpack.c.b16 %v2207, %v2206
      %v2211 = vpack.c.b16 %v2209, %v2208
      %2214 = vst [vmem:[#allocation4 + $0x50] sm:$0xff] %v2210
      %2215 = vst [vmem:[#allocation4 + $0x58] sm:$0xff] %v2211
      %2216 = vrot.lane.b32.xlu0 %v1956, 113
      %v2217 = vpop.permute.xlu0 %2216
      %2218 = vrot.lane.b32.xlu0 %v1960, 113
      %v2219 = vpop.permute.xlu0 %2218
      %2220 = vrot.lane.b32.xlu0 %v1958, 113
      %v2221 = vpop.permute.xlu0 %2220
      %2222 = vrot.lane.b32.xlu0 %v1962, 113
      %v2223 = vpop.permute.xlu0 %2222
      %vm2224 = vcmp.lt.s32.totalorder %v1973, 113
      %v2225 = vsel %vm2224, %v2217, %v2221
      %v2226 = vsel %vm2224, %v2219, %v2223
      %v2227 = vsel %vm2224, %v2221, %v2217
      %v2228 = vsel %vm2224, %v2223, %v2219
      %s2229 = scalar_lea.vmem %s12, 6
      %v2230 = vld [vmem:[%s2229] ss:$8 sm:$0x3]
      %v2232 = vlaneseq
      %v2233 = vshrl.u32 %v2232, 7
      %v2234 = vsub.s32 0, %v2233
      %v2235 = vrot.slane %v2230, %v2234
      %v2236 = vlaneseq
      %v2237 = vshrl.u32 %v2236, 7
      %v2238 = vsub.s32 1, %v2237
      %v2239 = vrot.slane %v2230, %v2238
      %v2242 = vmul.f32 %v2225, %v2235
      %v2243 = vmul.f32 %v2227, %v2239
      %v2244 = vmul.f32 %v2226, %v2235
      %v2245 = vmul.f32 %v2228, %v2239
      %v2246 = vpack.c.bf16 %v2244, %v2242
      %v2247 = vpack.c.bf16 %v2245, %v2243
      %v2250 = vunpack.c.l.b16 %v2246
      %v2251 = vunpack.c.l.b16 %v2247
      %v2252 = vunpack.c.h.b16 %v2246
      %v2253 = vunpack.c.h.b16 %v2247
      %v2254 = vpack.c.b16 %v2251, %v2250
      %v2255 = vpack.c.b16 %v2253, %v2252
      %2258 = vst [vmem:[#allocation4 + $0x60] sm:$0xff] %v2254
      %2259 = vst [vmem:[#allocation4 + $0x68] sm:$0xff] %v2255
      %2260 = vrot.lane.b32.xlu0 %v1956, 112
      %v2261 = vpop.permute.xlu0 %2260
      %2262 = vrot.lane.b32.xlu0 %v1960, 112
      %v2263 = vpop.permute.xlu0 %2262
      %2264 = vrot.lane.b32.xlu0 %v1958, 112
      %v2265 = vpop.permute.xlu0 %2264
      %2266 = vrot.lane.b32.xlu0 %v1962, 112
      %v2267 = vpop.permute.xlu0 %2266
      %vm2268 = vcmp.lt.s32.totalorder %v1973, 112
      %v2269 = vsel %vm2268, %v2261, %v2265
      %v2270 = vsel %vm2268, %v2263, %v2267
      %v2271 = vsel %vm2268, %v2265, %v2261
      %v2272 = vsel %vm2268, %v2267, %v2263
      %s2273 = scalar_lea.vmem %s12, 7
      %v2274 = vld [vmem:[%s2273] ss:$8 sm:$0x3]
      %v2276 = vlaneseq
      %v2277 = vshrl.u32 %v2276, 7
      %v2278 = vsub.s32 0, %v2277
      %v2279 = vrot.slane %v2274, %v2278
      %v2280 = vlaneseq
      %v2281 = vshrl.u32 %v2280, 7
      %v2282 = vsub.s32 1, %v2281
      %v2283 = vrot.slane %v2274, %v2282
      %v2286 = vmul.f32 %v2269, %v2279
      %v2287 = vmul.f32 %v2271, %v2283
      %v2288 = vmul.f32 %v2270, %v2279
      %v2289 = vmul.f32 %v2272, %v2283
      %v2290 = vpack.c.bf16 %v2288, %v2286
      %v2291 = vpack.c.bf16 %v2289, %v2287
      %v2294 = vunpack.c.l.b16 %v2290
      %v2295 = vunpack.c.l.b16 %v2291
      %v2296 = vunpack.c.h.b16 %v2290
      %v2297 = vunpack.c.h.b16 %v2291
      %v2298 = vpack.c.b16 %v2295, %v2294
      %v2299 = vpack.c.b16 %v2297, %v2296
      %2302 = vst [vmem:[#allocation4 + $0x70] sm:$0xff] %v2298
      %2303 = vst [vmem:[#allocation4 + $0x78] sm:$0xff] %v2299
      %2304 = vrot.lane.b32.xlu0 %v1956, 111
      %v2305 = vpop.permute.xlu0 %2304
      %2306 = vrot.lane.b32.xlu0 %v1960, 111
      %v2307 = vpop.permute.xlu0 %2306
      %2308 = vrot.lane.b32.xlu0 %v1958, 111
      %v2309 = vpop.permute.xlu0 %2308
      %2310 = vrot.lane.b32.xlu0 %v1962, 111
      %v2311 = vpop.permute.xlu0 %2310
      %vm2312 = vcmp.lt.s32.totalorder %v1973, 111
      %v2313 = vsel %vm2312, %v2305, %v2309
      %v2314 = vsel %vm2312, %v2307, %v2311
      %v2315 = vsel %vm2312, %v2309, %v2305
      %v2316 = vsel %vm2312, %v2311, %v2307
      %s2317 = scalar_lea.vmem %s12, 16
      %v2318 = vld [vmem:[%s2317] ss:$8 sm:$0x3]
      %v2320 = vlaneseq
      %v2321 = vshrl.u32 %v2320, 7
      %v2322 = vsub.s32 0, %v2321
      %v2323 = vrot.slane %v2318, %v2322
      %v2324 = vlaneseq
      %v2325 = vshrl.u32 %v2324, 7
      %v2326 = vsub.s32 1, %v2325
      %v2327 = vrot.slane %v2318, %v2326
      %v2330 = vmul.f32 %v2313, %v2323
      %v2331 = vmul.f32 %v2315, %v2327
      %v2332 = vmul.f32 %v2314, %v2323
      %v2333 = vmul.f32 %v2316, %v2327
      %v2334 = vpack.c.bf16 %v2332, %v2330
      %v2335 = vpack.c.bf16 %v2333, %v2331
      %v2338 = vunpack.c.l.b16 %v2334
      %v2339 = vunpack.c.l.b16 %v2335
      %v2340 = vunpack.c.h.b16 %v2334
      %v2341 = vunpack.c.h.b16 %v2335
      %v2342 = vpack.c.b16 %v2339, %v2338
      %v2343 = vpack.c.b16 %v2341, %v2340
      %2346 = vst [vmem:[#allocation4 + $0x80] sm:$0xff] %v2342
      %2347 = vst [vmem:[#allocation4 + $0x88] sm:$0xff] %v2343
      %v2348 = vld [vmem:[%s8] sm:$0xff]
      %v2349 = vld [vmem:[%s8 + $0x8] sm:$0xff]
      %v2350 = vld [vmem:[#allocation4] sm:$0xff]
      %v2351 = vld [vmem:[#allocation4 + $0x8] sm:$0xff]
      %v2352 = vld [vmem:[#allocation4 + $0x10] sm:$0xff]
      %v2353 = vld [vmem:[#allocation4 + $0x18] sm:$0xff]
      %v2354 = vld [vmem:[#allocation4 + $0x20] sm:$0xff]
      %v2355 = vld [vmem:[#allocation4 + $0x28] sm:$0xff]
      %v2356 = vld [vmem:[#allocation4 + $0x30] sm:$0xff]
      %v2357 = vld [vmem:[#allocation4 + $0x38] sm:$0xff]
      %v2358 = vld [vmem:[#allocation4 + $0x40] sm:$0xff]
      %v2359 = vld [vmem:[#allocation4 + $0x48] sm:$0xff]
      %v2360 = vld [vmem:[#allocation4 + $0x50] sm:$0xff]
      %v2361 = vld [vmem:[#allocation4 + $0x58] sm:$0xff]
      %v2362 = vld [vmem:[#allocation4 + $0x60] sm:$0xff]
      %v2363 = vld [vmem:[#allocation4 + $0x68] sm:$0xff]
      %v2364 = vld [vmem:[#allocation4 + $0x70] sm:$0xff]
      %v2365 = vld [vmem:[#allocation4 + $0x78] sm:$0xff]
      %v2366 = vld [vmem:[#allocation4 + $0x80] sm:$0xff]
      %v2367 = vld [vmem:[#allocation4 + $0x88] sm:$0xff]
      %v2368 = vld [vmem:[%s9] sm:$0xff]
      %v2369 = vld [vmem:[%s9 + $0x8] sm:$0xff]
      %2371 = vset.pattern.permute.xlu0 0
      %2372 = vperm.xlu0 %2371, %v2368
      %v2373 = vpop.permute.xlu0 %2372
      %2376 = vset.pattern.permute.xlu0 0
      %2377 = vperm.xlu0 %2376, %v2369
      %v2378 = vpop.permute.xlu0 %2377
      %v2382 = vunpack.c.l.b16 %v2348
      %v2383 = vunpack.c.h.b16 %v2348
      %v2384 = vunpack.c.l.b16 %v2349
      %v2385 = vunpack.c.h.b16 %v2349
      %v2386 = vpack.c.b16 %v2384, %v2382
      %v2387 = vpack.c.b16 %v2385, %v2383
      %v2407 = vunpack.c.l.b16 %v2350
      %v2408 = vunpack.c.h.b16 %v2350
      %v2409 = vunpack.c.l.b16 %v2351
      %v2410 = vunpack.c.h.b16 %v2351
      %v2411 = vunpack.c.l.b16 %v2352
      %v2412 = vunpack.c.h.b16 %v2352
      %v2413 = vunpack.c.l.b16 %v2353
      %v2414 = vunpack.c.h.b16 %v2353
      %v2415 = vunpack.c.l.b16 %v2354
      %v2416 = vunpack.c.h.b16 %v2354
      %v2417 = vunpack.c.l.b16 %v2355
      %v2418 = vunpack.c.h.b16 %v2355
      %v2419 = vunpack.c.l.b16 %v2356
      %v2420 = vunpack.c.h.b16 %v2356
      %v2421 = vunpack.c.l.b16 %v2357
      %v2422 = vunpack.c.h.b16 %v2357
      %v2423 = vunpack.c.l.b16 %v2358
      %v2424 = vunpack.c.h.b16 %v2358
      %v2425 = vunpack.c.l.b16 %v2359
      %v2426 = vunpack.c.h.b16 %v2359
      %v2427 = vunpack.c.l.b16 %v2360
      %v2428 = vunpack.c.h.b16 %v2360
      %v2429 = vunpack.c.l.b16 %v2361
      %v2430 = vunpack.c.h.b16 %v2361
      %v2431 = vunpack.c.l.b16 %v2362
      %v2432 = vunpack.c.h.b16 %v2362
      %v2433 = vunpack.c.l.b16 %v2363
      %v2434 = vunpack.c.h.b16 %v2363
      %v2435 = vunpack.c.l.b16 %v2364
      %v2436 = vunpack.c.h.b16 %v2364
      %v2437 = vunpack.c.l.b16 %v2365
      %v2438 = vunpack.c.h.b16 %v2365
      %v2439 = vunpack.c.l.b16 %v2366
      %v2440 = vunpack.c.h.b16 %v2366
      %v2441 = vunpack.c.l.b16 %v2367
      %v2442 = vunpack.c.h.b16 %v2367
      %v2443 = vpack.c.b16 %v2409, %v2407
      %v2444 = vpack.c.b16 %v2410, %v2408
      %v2445 = vpack.c.b16 %v2413, %v2411
      %v2446 = vpack.c.b16 %v2414, %v2412
      %v2447 = vpack.c.b16 %v2417, %v2415
      %v2448 = vpack.c.b16 %v2418, %v2416
      %v2449 = vpack.c.b16 %v2421, %v2419
      %v2450 = vpack.c.b16 %v2422, %v2420
      %v2451 = vpack.c.b16 %v2425, %v2423
      %v2452 = vpack.c.b16 %v2426, %v2424
      %v2453 = vpack.c.b16 %v2429, %v2427
      %v2454 = vpack.c.b16 %v2430, %v2428
      %v2455 = vpack.c.b16 %v2433, %v2431
      %v2456 = vpack.c.b16 %v2434, %v2432
      %v2457 = vpack.c.b16 %v2437, %v2435
      %v2458 = vpack.c.b16 %v2438, %v2436
      %v2459 = vpack.c.b16 %v2441, %v2439
      %v2460 = vpack.c.b16 %v2442, %v2440
      %v2480 = vsel %vm745, %v2387, 0
      %2482 = vmatprep.subr.bf16.mxu0 %v2458
      %2483 = vmatpush1.bf16.msra.mxu0 %v2457
      %2484 = vmatprep.subr.bf16.mxu0 %v2456
      %2485 = vmatpush1.bf16.msra.mxu0 %v2455
      %2486 = vmatprep.subr.bf16.mxu0 %v2454
      %2487 = vmatpush1.bf16.msra.mxu0 %v2453
      %2488 = vmatprep.subr.bf16.mxu0 %v2452
      %2489 = vmatpush1.bf16.msra.mxu0 %v2451
      %2490 = vmatprep.subr.bf16.mxu0 %v2450
      %2491 = vmatpush1.bf16.msra.mxu0 %v2449
      %2492 = vmatprep.subr.bf16.mxu0 %v2448
      %2493 = vmatpush1.bf16.msra.mxu0 %v2447
      %2494 = vmatprep.subr.bf16.mxu0 %v2446
      %2495 = vmatpush1.bf16.msra.mxu0 %v2445
      %2496 = vmatprep.subr.bf16.mxu0 %v2444
      %2497 = vmatpush1.bf16.msra.mxu0 %v2443
      %2498 = vmatprep.subr.bf16.mxu0 0
      %2499 = vmatpush2.bf16.msra.mxu0 0
      %2500 = vmatprep.subr.bf16.mxu0 0
      %2501 = vmatpush2.bf16.msra.mxu0 0
      %2502 = vmatprep.subr.bf16.mxu0 0
      %2503 = vmatpush2.bf16.msra.mxu0 0
      %2504 = vmatprep.subr.bf16.mxu0 0
      %2505 = vmatpush2.bf16.msra.mxu0 0
      %2506 = vmatprep.subr.bf16.mxu0 0
      %2507 = vmatpush2.bf16.msra.mxu0 0
      %2508 = vmatprep.subr.bf16.mxu0 0
      %2509 = vmatpush2.bf16.msra.mxu0 0
      %2510 = vmatprep.subr.bf16.mxu0 0
      %2511 = vmatpush2.bf16.msra.mxu0 0
      %2512 = vmatprep.subr.bf16.mxu0 %v2460
      %2513 = vmatpush2.bf16.msra.mxu0 %v2459
      %2514 = vmatprep.mubr.bf16.mxu0 %v2480
      %2515 = vmatmul.mubr.bf16.gmra.mxu0 %v2386
      %v2516 = vpop.f32.mrf.mxu0
      %v2517 = vadd.f32 %v2373, %v2516
      %v2518 = vpop.f32.mrf.mxu0
      %v2519 = vadd.f32 %v2373, %v2518
      %v2520 = vpop.f32.mrf.mxu0
      %v2521 = vadd.f32 %v2378, %v2520
      %v2522 = vpop.f32.mrf.mxu0
      %v2523 = vadd.f32 %v2378, %v2522
      %2524 = vdwg.mxu0
      %v2525 = vmul.f32 %v2517, 0.5
      %v2526 = vmul.f32 %v2519, 0.5
      %v2527 = vmul.f32 %v2521, 0.5
      %v2528 = vmul.f32 %v2523, 0.5
      %v2529 = vmul.f32 %v2517, 0.70710677
      %v2530 = vmul.f32 %v2519, 0.70710677
      %v2531 = vmul.f32 %v2521, 0.70710677
      %v2532 = vmul.f32 %v2523, 0.70710677
      %v2533 = vand.u32 2147483647, %v2529
      %v2534 = vand.u32 2147483647, %v2530
      %v2535 = vand.u32 2147483647, %v2531
      %v2536 = vand.u32 2147483647, %v2532
      %v2537 = vmul.f32 %v2533, 0.3275911
      %v2538 = vmul.f32 %v2534, 0.3275911
      %v2539 = vmul.f32 %v2535, 0.3275911
      %v2540 = vmul.f32 %v2536, 0.3275911
      %v2541 = vadd.f32 %v2537, 1.0
      %v2542 = vadd.f32 %v2538, 1.0
      %v2543 = vadd.f32 %v2539, 1.0
      %v2544 = vadd.f32 %v2540, 1.0
      %v2545 = vrcp.pop %v2541
      %v2546 = vrcp.pop %v2542
      %v2547 = vrcp.pop %v2543
      %v2548 = vrcp.pop %v2544
      %v2549 = vmul.f32 %v2545, 1.0614054
      %v2550 = vmul.f32 %v2546, 1.0614054
      %v2551 = vmul.f32 %v2547, 1.0614054
      %v2552 = vmul.f32 %v2548, 1.0614054
      %v2553 = vadd.f32 %v2549, -1.4531521
      %v2554 = vadd.f32 %v2550, -1.4531521
      %v2555 = vadd.f32 %v2551, -1.4531521
      %v2556 = vadd.f32 %v2552, -1.4531521
      %v2557 = vmul.f32 %v2553, %v2545
      %v2558 = vmul.f32 %v2554, %v2546
      %v2559 = vmul.f32 %v2555, %v2547
      %v2560 = vmul.f32 %v2556, %v2548
      %v2561 = vadd.f32 %v2557, 1.4214138
      %v2562 = vadd.f32 %v2558, 1.4214138
      %v2563 = vadd.f32 %v2559, 1.4214138
      %v2564 = vadd.f32 %v2560, 1.4214138
      %v2565 = vmul.f32 %v2561, %v2545
      %v2566 = vmul.f32 %v2562, %v2546
      %v2567 = vmul.f32 %v2563, %v2547
      %v2568 = vmul.f32 %v2564, %v2548
      %v2569 = vadd.f32 %v2565, -0.28449672
      %v2570 = vadd.f32 %v2566, -0.28449672
      %v2571 = vadd.f32 %v2567, -0.28449672
      %v2572 = vadd.f32 %v2568, -0.28449672
      %v2573 = vmul.f32 %v2569, %v2545
      %v2574 = vmul.f32 %v2570, %v2546
      %v2575 = vmul.f32 %v2571, %v2547
      %v2576 = vmul.f32 %v2572, %v2548
      %v2577 = vadd.f32 %v2573, 0.2548296
      %v2578 = vadd.f32 %v2574, 0.2548296
      %v2579 = vadd.f32 %v2575, 0.2548296
      %v2580 = vadd.f32 %v2576, 0.2548296
      %v2581 = vmul.f32 %v2577, %v2545
      %v2582 = vmul.f32 %v2578, %v2546
      %v2583 = vmul.f32 %v2579, %v2547
      %v2584 = vmul.f32 %v2580, %v2548
      %v2585 = vsub.f32 0.0, %v2533
      %v2586 = vsub.f32 0.0, %v2534
      %v2587 = vsub.f32 0.0, %v2535
      %v2588 = vsub.f32 0.0, %v2536
      %v2589 = vmul.f32 %v2585, %v2533
      %v2590 = vmul.f32 %v2586, %v2534
      %v2591 = vmul.f32 %v2587, %v2535
      %v2592 = vmul.f32 %v2588, %v2536
      %v2593 = vmul.f32 %v2589, 1.442695
      %v2594 = vpow.pop %v2593
      %v2595 = vmul.f32 %v2590, 1.442695
      %v2596 = vpow.pop %v2595
      %v2597 = vmul.f32 %v2591, 1.442695
      %v2598 = vpow.pop %v2597
      %v2599 = vmul.f32 %v2592, 1.442695
      %v2600 = vpow.pop %v2599
      %v2601 = vmul.f32 %v2581, %v2594
      %v2602 = vmul.f32 %v2582, %v2596
      %v2603 = vmul.f32 %v2583, %v2598
      %v2604 = vmul.f32 %v2584, %v2600
      %v2605 = vsub.f32 1.0, %v2601
      %v2606 = vsub.f32 1.0, %v2602
      %v2607 = vsub.f32 1.0, %v2603
      %v2608 = vsub.f32 1.0, %v2604
      %vm2609 = vcmp.lt.f32.partialorder %v2529, 0.0
      %vm2610 = vcmp.lt.f32.partialorder %v2530, 0.0
      %vm2611 = vcmp.lt.f32.partialorder %v2531, 0.0
      %vm2612 = vcmp.lt.f32.partialorder %v2532, 0.0
      %v2613 = vsub.f32 0.0, %v2605
      %v2614 = vsub.f32 0.0, %v2606
      %v2615 = vsub.f32 0.0, %v2607
      %v2616 = vsub.f32 0.0, %v2608
      %v2617 = vsel %vm2609, %v2613, %v2605
      %v2618 = vsel %vm2610, %v2614, %v2606
      %v2619 = vsel %vm2611, %v2615, %v2607
      %v2620 = vsel %vm2612, %v2616, %v2608
      %v2621 = vadd.f32 %v2617, 1.0
      %v2622 = vadd.f32 %v2618, 1.0
      %v2623 = vadd.f32 %v2619, 1.0
      %v2624 = vadd.f32 %v2620, 1.0
      %v2625 = vmul.f32 %v2525, %v2621
      %v2626 = vmul.f32 %v2526, %v2622
      %v2627 = vmul.f32 %v2527, %v2623
      %v2628 = vmul.f32 %v2528, %v2624
      %v2629 = vld [vmem:[%s10] sm:$0xf]
      %v2630 = vld [vmem:[%s10 + $0x4] sm:$0xf]
      %v2631 = vld [vmem:[%s10 + $0x8] sm:$0xf]
      %v2632 = vld [vmem:[%s10 + $0xc] sm:$0xf]
      %v2633 = vld [vmem:[%s10 + $0x10] sm:$0xf]
      %v2634 = vld [vmem:[%s10 + $0x14] sm:$0xf]
      %v2635 = vld [vmem:[%s10 + $0x18] sm:$0xf]
      %v2636 = vld [vmem:[%s10 + $0x1c] sm:$0xf]
      %v2637 = vpack.c.bf16 %v2627, %v2625
      %v2638 = vpack.c.bf16 %v2628, %v2626
      %v2639 = vld [vmem:[%s11] sm:$0xff]
      %v2640 = vld [vmem:[%s11 + $0x8] sm:$0xff]
      %v2641 = vld [vmem:[%s11 + $0x10] sm:$0xff]
      %v2642 = vld [vmem:[%s11 + $0x18] sm:$0xff]
      %v2643 = vld [vmem:[%s11 + $0x20] sm:$0xff]
      %v2644 = vld [vmem:[%s11 + $0x28] sm:$0xff]
      %v2645 = vld [vmem:[%s11 + $0x30] sm:$0xff]
      %v2646 = vld [vmem:[%s11 + $0x38] sm:$0xff]
      %2648 = vset.pattern.permute.xlu0 0
      %2649 = vperm.xlu0 %2648, %v2639
      %v2650 = vpop.permute.xlu0 %2649
      %2653 = vset.pattern.permute.xlu0 0
      %2654 = vperm.xlu0 %2653, %v2640
      %v2655 = vpop.permute.xlu0 %2654
      %2658 = vset.pattern.permute.xlu0 0
      %2659 = vperm.xlu0 %2658, %v2641
      %v2660 = vpop.permute.xlu0 %2659
      %2663 = vset.pattern.permute.xlu0 0
      %2664 = vperm.xlu0 %2663, %v2642
      %v2665 = vpop.permute.xlu0 %2664
      %2668 = vset.pattern.permute.xlu0 0
      %2669 = vperm.xlu0 %2668, %v2643
      %v2670 = vpop.permute.xlu0 %2669
      %2673 = vset.pattern.permute.xlu0 0
      %2674 = vperm.xlu0 %2673, %v2644
      %v2675 = vpop.permute.xlu0 %2674
      %2678 = vset.pattern.permute.xlu0 0
      %2679 = vperm.xlu0 %2678, %v2645
      %v2680 = vpop.permute.xlu0 %2679
      %2683 = vset.pattern.permute.xlu0 0
      %2684 = vperm.xlu0 %2683, %v2646
      %v2685 = vpop.permute.xlu0 %2684
      %v2695 = vunpack.c.l.b16 %v2629
      %v2696 = vunpack.c.l.b16 %v2630
      %v2697 = vunpack.c.l.b16 %v2631
      %v2698 = vunpack.c.l.b16 %v2632
      %v2699 = vunpack.c.l.b16 %v2633
      %v2700 = vunpack.c.l.b16 %v2634
      %v2701 = vunpack.c.l.b16 %v2635
      %v2702 = vunpack.c.l.b16 %v2636
      %v2703 = vpack.c.b16 %v2696, %v2695
      %v2704 = vpack.c.b16 %v2698, %v2697
      %v2705 = vpack.c.b16 %v2700, %v2699
      %v2706 = vpack.c.b16 %v2702, %v2701
      %v2708 = vsel %vm745, %v2703, 0
      %v2711 = vsel %vm745, %v2704, 0
      %v2714 = vsel %vm745, %v2705, 0
      %v2717 = vsel %vm745, %v2706, 0
      %2719 = vmatprep.subr.bf16.mxu0 0
      %2720 = vmatpush1.bf16.msra.mxu0 0
      %2721 = vmatprep.subr.bf16.mxu0 0
      %2722 = vmatpush1.bf16.msra.mxu0 0
      %2723 = vmatprep.subr.bf16.mxu0 0
      %2724 = vmatpush1.bf16.msra.mxu0 0
      %2725 = vmatprep.subr.bf16.mxu0 0
      %2726 = vmatpush1.bf16.msra.mxu0 0
      %2727 = vmatprep.subr.bf16.mxu0 0
      %2728 = vmatpush1.bf16.msra.mxu0 0
      %2729 = vmatprep.subr.bf16.mxu0 0
      %2730 = vmatpush1.bf16.msra.mxu0 0
      %2731 = vmatprep.subr.bf16.mxu0 0
      %2732 = vmatpush1.bf16.msra.mxu0 0
      %2733 = vmatprep.subr.bf16.mxu0 %v2638
      %2734 = vmatpush1.bf16.msra.mxu0 %v2637
      %2735 = vmatprep.subr.bf16.mxu0 0
      %2736 = vmatpush2.bf16.msra.mxu0 0
      %2737 = vmatprep.subr.bf16.mxu0 0
      %2738 = vmatpush2.bf16.msra.mxu0 0
      %2739 = vmatprep.subr.bf16.mxu0 0
      %2740 = vmatpush2.bf16.msra.mxu0 0
      %2741 = vmatprep.subr.bf16.mxu0 0
      %2742 = vmatpush2.bf16.msra.mxu0 0
      %2743 = vmatprep.subr.bf16.mxu0 0
      %2744 = vmatpush2.bf16.msra.mxu0 0
      %2745 = vmatprep.subr.bf16.mxu0 0
      %2746 = vmatpush2.bf16.msra.mxu0 0
      %2747 = vmatprep.subr.bf16.mxu0 0
      %2748 = vmatpush2.bf16.msra.mxu0 0
      %2749 = vmatprep.subr.bf16.mxu0 0
      %2750 = vmatpush2.bf16.msra.mxu0 0
      %2751 = vmatprep.mubr.bf16.mxu0 0
      %2752 = vmatmul.mubr.bf16.gmra.mxu0 %v2708
      %v2753 = vpop.f32.mrf.mxu0
      %v2754 = vadd.f32 %v2650, %v2753
      %v2755 = vpop.f32.mrf.mxu0
      %v2756 = vadd.f32 %v2650, %v2755
      %v2757 = vpop.f32.mrf.mxu0
      %v2758 = vadd.f32 %v2655, %v2757
      %v2759 = vpop.f32.mrf.mxu0
      %v2760 = vadd.f32 %v2655, %v2759
      %2761 = vmatprep.mubr.bf16.mxu0 0
      %2762 = vmatmul.mubr.bf16.gmra.mxu0 %v2711
      %v2763 = vpop.f32.mrf.mxu0
      %v2764 = vadd.f32 %v2660, %v2763
      %v2765 = vpop.f32.mrf.mxu0
      %v2766 = vadd.f32 %v2660, %v2765
      %v2767 = vpop.f32.mrf.mxu0
      %v2768 = vadd.f32 %v2665, %v2767
      %v2769 = vpop.f32.mrf.mxu0
      %v2770 = vadd.f32 %v2665, %v2769
      %2771 = vmatprep.mubr.bf16.mxu0 0
      %2772 = vmatmul.mubr.bf16.gmra.mxu0 %v2714
      %v2773 = vpop.f32.mrf.mxu0
      %v2774 = vadd.f32 %v2670, %v2773
      %v2775 = vpop.f32.mrf.mxu0
      %v2776 = vadd.f32 %v2670, %v2775
      %v2777 = vpop.f32.mrf.mxu0
      %v2778 = vadd.f32 %v2675, %v2777
      %v2779 = vpop.f32.mrf.mxu0
      %v2780 = vadd.f32 %v2675, %v2779
      %2781 = vmatprep.mubr.bf16.mxu0 0
      %2782 = vmatmul.mubr.bf16.gmra.mxu0 %v2717
      %v2783 = vpop.f32.mrf.mxu0
      %v2784 = vadd.f32 %v2680, %v2783
      %v2785 = vpop.f32.mrf.mxu0
      %v2786 = vadd.f32 %v2680, %v2785
      %v2787 = vpop.f32.mrf.mxu0
      %v2788 = vadd.f32 %v2685, %v2787
      %v2789 = vpop.f32.mrf.mxu0
      %v2790 = vadd.f32 %v2685, %v2789
      %2791 = vdwg.mxu0
      %v2792 = vadd.f32 %v1875, %v2754
      %v2793 = vadd.f32 %v1876, %v2756
      %v2794 = vadd.f32 %v1877, %v2758
      %v2795 = vadd.f32 %v1878, %v2760
      %v2796 = vadd.f32 %v1879, %v2764
      %v2797 = vadd.f32 %v1880, %v2766
      %v2798 = vadd.f32 %v1881, %v2768
      %v2799 = vadd.f32 %v1882, %v2770
      %v2800 = vadd.f32 %v1883, %v2774
      %v2801 = vadd.f32 %v1884, %v2776
      %v2802 = vadd.f32 %v1885, %v2778
      %v2803 = vadd.f32 %v1886, %v2780
      %v2804 = vadd.f32 %v1887, %v2784
      %v2805 = vadd.f32 %v1888, %v2786
      %v2806 = vadd.f32 %v1889, %v2788
      %v2807 = vadd.f32 %v1890, %v2790
      %2808 = vst [vmem:[%s460] sm:$0xff] %v2792
      %2809 = vst [vmem:[%s460 + $0x8] sm:$0xff] %v2793
      %2810 = vst [vmem:[%s460 + $0x10] sm:$0xff] %v2794
      %2811 = vst [vmem:[%s460 + $0x18] sm:$0xff] %v2795
      %2812 = vst [vmem:[%s460 + $0x20] sm:$0xff] %v2796
      %2813 = vst [vmem:[%s460 + $0x28] sm:$0xff] %v2797
      %2814 = vst [vmem:[%s460 + $0x30] sm:$0xff] %v2798
      %2815 = vst [vmem:[%s460 + $0x38] sm:$0xff] %v2799
      %2816 = vst [vmem:[%s460 + $0x40] sm:$0xff] %v2800
      %2817 = vst [vmem:[%s460 + $0x48] sm:$0xff] %v2801
      %2818 = vst [vmem:[%s460 + $0x50] sm:$0xff] %v2802
      %2819 = vst [vmem:[%s460 + $0x58] sm:$0xff] %v2803
      %2820 = vst [vmem:[%s460 + $0x60] sm:$0xff] %v2804
      %2821 = vst [vmem:[%s460 + $0x68] sm:$0xff] %v2805
      %2822 = vst [vmem:[%s460 + $0x70] sm:$0xff] %v2806
      %2823 = vst [vmem:[%s460 + $0x78] sm:$0xff] %v2807
      %p2824 = scmp.lt.s32.totalorder %s24, 1
      %s2825 = scalar_select %p2824, %s24, 1
      %s2826 = smul.addr %s2825, 16
      %s2827 = smul.addr %s2826, 8
      %s2828 = scalar_lea.vmem %s13, %s2827
      // Predicated region
      $region87: #{tf_block.3} parent=71 // pred_check
        %p2829 = pneg %p325
      $region88: #{tf_block.3} parent=71 // pred_check_branch
        %2831 = sbr.rel (%p2829) target = $region90
      $region89: #{tf_block.3} parent=71 // pred_region
        _
      $region90: #{tf_block.3} parent=71 // pred_fallthru
        _
    $region72: #{tf_block.3} parent=5 // pred_fallthru
      _
    %p2832 = scmp.le.s32.totalorder 2, %s19
    // Predicated region
    $region91: #{tf_block.3} parent=5 // pred_check
      %p2833 = pneg %p2832
    $region92: #{tf_block.3} parent=5 // pred_check_branch
      %2835 = sbr.rel (%p2833) target = $region94
    $region93: #{tf_block.3} parent=5 // pred_region
      %s2836 = ssub.s32 %s19, 2
      // Predicated region
      $region95: #{tf_block.3} parent=93 // pred_check
        %p2837 = pneg %p331
      $region96: #{tf_block.3} parent=93 // pred_check_branch
        %2839 = sbr.rel (%p2837) target = $region98
      $region97: #{tf_block.3} parent=93 // pred_region
        %p2840 = scmp.lt.s32.totalorder %s25, 1
        %s2841 = scalar_select %p2840, %s25, 1
        %s2842 = smul.addr %s2841, 16
        %s2843 = smul.addr %s2842, 8
        %s2844 = scalar_lea.vmem %s13, %s2843
      $region98: #{tf_block.3} parent=93 // pred_fallthru
        _
    $region94: #{tf_block.3} parent=5 // pred_fallthru
      _
  $region6: #{tf_block.3} parent=0 // loop_footer
    %s23 = sadd.s32 1, %s19
  $region7: #{tf_block.3} parent=0 // loop_footer_branch
    %18 = sbr.rel target = $region3
  $region8: #{tf_block.3} parent=0 // loop_exit
    _

</llo_original>
